<compile_context>
chip_gen: v7x
topology: tpu7x:2x2x1
jax: 0.10.0
libtpu: 0.0.40
codegen_flags: <defaults>
</compile_context>

<pallas_src>
import functools

import jax
import jax.numpy as jnp
from jax.experimental import pallas as pl
from jax.experimental.pallas import tpu as pltpu


def _resblock_kernel(x_ref, w0_ref, b0_ref, w1_ref, b1_ref, o_ref,
                     xpad_ref, midpad_ref, *, K, H, W):
    """One batch-block (Nb images) per grid step.

    x_ref     : [Nb, Cin, H*W]         f32   activation, channels-major (NCHW flat)
    w0_ref    : [K*K*Cin, Cmid]        bf16  conv0 weights (BN folded), im2col layout
    b0_ref    : [1, Cmid]              f32   conv0 bias with BN shift folded in
    w1_ref    : [K*K*Cmid, Cout]       bf16  conv1 weights (res_scale folded)
    b1_ref    : [1, Cout]              f32   conv1 bias (res_scale folded)
    o_ref     : [Nb, Cout, H*W]        f32   output, channels-major (lane-dense)
    xpad_ref  : [Nb, H+2p, W+2p, Cin]  bf16  VMEM scratch: padded input (NHWC)
    midpad_ref: [Nb, H+2p, W+2p, Cmid] bf16  VMEM scratch: padded mid activation
    """
    Nb, Cin, HW = x_ref.shape
    Cmid = w0_ref.shape[-1]
    Cout = w1_ref.shape[-1]
    p = (K - 1) // 2
    Hp, Wp = H + 2 * p, W + 2 * p

    # ---- stage input into the padded scratch (channels-minor). Only the p-wide
    # border strips are zeroed (the interior is fully overwritten every step, so
    # this stays correct under megacore "parallel" semantics).
    if p > 0:
        xpad_ref[:, 0:p, :, :] = jnp.zeros((Nb, p, Wp, Cin), jnp.bfloat16)
        xpad_ref[:, Hp - p:Hp, :, :] = jnp.zeros((Nb, p, Wp, Cin), jnp.bfloat16)
        xpad_ref[:, :, 0:p, :] = jnp.zeros((Nb, Hp, p, Cin), jnp.bfloat16)
        xpad_ref[:, :, Wp - p:Wp, :] = jnp.zeros((Nb, Hp, p, Cin), jnp.bfloat16)
    for i in range(Nb):
        # (Cin, H*W) -> (H*W, Cin): one small 2-D XLU transpose per image, then a
        # safe leading-dim split into (H, W, Cin).
        x_t = jnp.transpose(x_ref[i]).astype(jnp.bfloat16)
        xpad_ref[i, p:p + H, p:p + W, :] = x_t.reshape(H, W, Cin)

    # ---- conv0 (+ folded BN) as a single im2col matmul, then ReLU.
    xpad = xpad_ref[...]
    patches0 = jnp.concatenate(
        [xpad[:, ky:ky + H, kx:kx + W, :] for ky in range(K) for kx in range(K)],
        axis=-1).reshape(Nb * H * W, K * K * Cin)
    mid = jnp.dot(patches0, w0_ref[...], preferred_element_type=jnp.float32)
    mid = jnp.maximum(mid + b0_ref[...], 0.0)

    # ---- stage mid into its padded scratch (border-only zeroing again).
    if p > 0:
        midpad_ref[:, 0:p, :, :] = jnp.zeros((Nb, p, Wp, Cmid), jnp.bfloat16)
        midpad_ref[:, Hp - p:Hp, :, :] = jnp.zeros((Nb, p, Wp, Cmid), jnp.bfloat16)
        midpad_ref[:, :, 0:p, :] = jnp.zeros((Nb, Hp, p, Cmid), jnp.bfloat16)
        midpad_ref[:, :, Wp - p:Wp, :] = jnp.zeros((Nb, Hp, p, Cmid), jnp.bfloat16)
    midpad_ref[:, p:p + H, p:p + W, :] = (
        mid.astype(jnp.bfloat16).reshape(Nb, H, W, Cmid))

    # ---- conv1 (res_scale folded) as a single im2col matmul.
    mpad = midpad_ref[...]
    patches1 = jnp.concatenate(
        [mpad[:, ky:ky + H, kx:kx + W, :] for ky in range(K) for kx in range(K)],
        axis=-1).reshape(Nb * H * W, K * K * Cmid)
    res = jnp.dot(patches1, w1_ref[...], preferred_element_type=jnp.float32)
    res = res + b1_ref[...]

    # ---- residual add in f32 + lane-dense store: transpose each image's
    # (H*W, Cout) result to (Cout, H*W) so the output store uses H*W lanes.
    for i in range(Nb):
        res_t = jnp.transpose(res[i * H * W:(i + 1) * H * W, :])
        o_ref[i] = x_ref[i] + res_t


def _vmem_budget_bytes():
    """~3/4 of physical per-core VMEM (v7x: 64 MiB, v5e/v6e: 128 MiB)."""
    try:
        cap = pltpu.get_tpu_info().vmem_capacity_bytes
    except Exception:
        cap = 64 * 1024 * 1024  # conservative (v7x-sized) fallback
    return int(cap * 3 // 4)


def _estimate_step_vmem(nb, H, W, Cin, Cmid, Cout, K):
    p = (K - 1) // 2
    Hp, Wp = H + 2 * p, W + 2 * p
    hw = H * W
    tile_io = 2 * nb * (Cin + Cout) * hw * 4         # double-buffered f32 in/out tiles
    scratch = nb * Hp * Wp * (Cin + Cmid) * 2        # bf16 padded planes
    im2col = nb * hw * K * K * (Cin + Cmid) * 2      # bf16 patch matrices (live values)
    acts = nb * hw * (Cmid + Cout) * 4               # f32 matmul results
    weights = K * K * (Cin * Cmid + Cmid * Cout) * 2 + (Cmid + Cout) * 4
    return tile_io + scratch + im2col + acts + weights


def _pick_batch_block(N, H, W, Cin, Cmid, Cout, K, budget):
    """Largest divisor of N that (a) leaves >= 2 grid steps when N >= 2 (so both
    v7x TensorCores get work) and (b) keeps the per-step VMEM footprint small."""
    if N <= 1:
        return 1
    best = 1
    for nb in range(1, N + 1):
        if N % nb:
            continue
        if N // nb < 2:
            continue
        if _estimate_step_vmem(nb, H, W, Cin, Cmid, Cout, K) > budget // 2:
            continue
        best = nb
    return best


def resblock_forward(x_nchw, params, *, res_scale=1.0, eps=1e-5, batch_block=None):
    """x_nchw: [N, Cin, H, W] float32. Returns [N, Cout, H, W] float32."""
    w0, b0 = params["w0"], params["b0"]
    gamma, beta = params["gamma"], params["beta"]
    run_mean, run_var = params["run_mean"], params["run_var"]
    w1, b1 = params["w1"], params["b1"]

    K = w0.shape[0]
    if K % 2 != 1:
        raise ValueError("SAME-size ResBlock requires an odd kernel_size")
    p = (K - 1) // 2
    N, Cin, H, W = x_nchw.shape
    Cmid = w0.shape[-1]
    Cout = w1.shape[-1]
    if Cin != Cout:
        raise ValueError(
            "ResBlock residual add requires in_channel == out_channel, got "
            f"{Cin} != {Cout}")
    HW = H * W
    Hp, Wp = H + 2 * p, W + 2 * p

    # Fold BatchNorm2d (eval) into conv0:
    #   BN(conv(x)+b0) = conv(x)*s + (b0*s + t),  s = gamma/sqrt(var+eps),
    #                                             t = beta - mean*s
    # and fold res_scale into conv1. Flatten HWIO weights into im2col layout
    # (K*K*Cin, Cmid) so each conv is a single matmul in the kernel.
    scale = gamma / jnp.sqrt(run_var + eps)
    shift = beta - run_mean * scale
    w0f = (w0 * scale[None, None, None, :]).astype(jnp.bfloat16).reshape(
        K * K * Cin, Cmid)
    b0f = (b0 * scale + shift).astype(jnp.float32).reshape(1, Cmid)
    w1f = (w1 * jnp.float32(res_scale)).astype(jnp.bfloat16).reshape(
        K * K * Cmid, Cout)
    b1f = (b1 * jnp.float32(res_scale)).astype(jnp.float32).reshape(1, Cout)

    # Channels-major, spatially-flattened activation: NCHW -> (N, Cin, H*W) is a
    # free reshape; no transpose, no pad (padding happens inside the kernel).
    x_flat = x_nchw.reshape(N, Cin, HW).astype(jnp.float32)

    budget = _vmem_budget_bytes()
    Nb = batch_block or _pick_batch_block(N, H, W, Cin, Cmid, Cout, K, budget)
    if N % Nb:
        raise ValueError(f"batch_block={Nb} must divide N={N}")
    vmem_limit = int(min(budget, max(
        16 * 1024 * 1024,
        2 * _estimate_step_vmem(Nb, H, W, Cin, Cmid, Cout, K))))

    kernel = functools.partial(_resblock_kernel, K=K, H=H, W=W)
    out_flat = pl.pallas_call(
        kernel,
        out_shape=jax.ShapeDtypeStruct((N, Cout, HW), jnp.float32),
        grid=(N // Nb,),
        in_specs=[
            pl.BlockSpec((Nb, Cin, HW), lambda n: (n, 0, 0)),
            pl.BlockSpec((K * K * Cin, Cmid), lambda n: (0, 0)),
            pl.BlockSpec((1, Cmid), lambda n: (0, 0)),
            pl.BlockSpec((K * K * Cmid, Cout), lambda n: (0, 0)),
            pl.BlockSpec((1, Cout), lambda n: (0, 0)),
        ],
        out_specs=pl.BlockSpec((Nb, Cout, HW), lambda n: (n, 0, 0)),
        scratch_shapes=[
            pltpu.VMEM((Nb, Hp, Wp, Cin), jnp.bfloat16),
            pltpu.VMEM((Nb, Hp, Wp, Cmid), jnp.bfloat16),
        ],
        compiler_params=pltpu.CompilerParams(
            dimension_semantics=("parallel",),
            vmem_limit_bytes=vmem_limit,
        ),
    )(x_flat, w0f, b0f, w1f, b1f)

    return out_flat.reshape(N, Cout, H, W)


def init_params(key, in_channel, mid_channel, out_channel, kernel_size):
    k0, k1, k2, k3 = jax.random.split(key, 4)
    # Conv weights stored in HWIO layout directly.
    w0 = jax.random.normal(k0, (kernel_size, kernel_size, in_channel, mid_channel),
                           jnp.float32) * 0.1
    b0 = jax.random.normal(k1, (mid_channel,), jnp.float32) * 0.1
    w1 = jax.random.normal(k2, (kernel_size, kernel_size, mid_channel, out_channel),
                           jnp.float32) * 0.1
    b1 = jax.random.normal(k3, (out_channel,), jnp.float32) * 0.1
    # BatchNorm2d as freshly initialized by PyTorch (eval mode).
    gamma = jnp.ones((mid_channel,), jnp.float32)
    beta = jnp.zeros((mid_channel,), jnp.float32)
    run_mean = jnp.zeros((mid_channel,), jnp.float32)
    run_var = jnp.ones((mid_channel,), jnp.float32)
    return dict(w0=w0, b0=b0, gamma=gamma, beta=beta, run_mean=run_mean,
                run_var=run_var, w1=w1, b1=b1)


def _reference_forward(x_nchw, params, res_scale=1.0, eps=1e-5):
    """Plain-JAX reference mirroring the kernel numerics (bf16 MXU operands,
    f32 accumulation). Structure follows the PyTorch module exactly:
    conv0 -> BN(eval) -> ReLU -> conv1, then x + res * res_scale."""
    w0, b0 = params["w0"], params["b0"]
    gamma, beta = params["gamma"], params["beta"]
    run_mean, run_var = params["run_mean"], params["run_var"]
    w1, b1 = params["w1"], params["b1"]

    x = jnp.transpose(x_nchw, (0, 2, 3, 1)).astype(jnp.float32)

    scale = gamma / jnp.sqrt(run_var + eps)
    shift = beta - run_mean * scale
    w0f = (w0 * scale[None, None, None, :]).astype(jnp.bfloat16).astype(jnp.float32)
    b0f = b0 * scale + shift
    w1f = (w1 * jnp.float32(res_scale)).astype(jnp.bfloat16).astype(jnp.float32)
    b1f = b1 * jnp.float32(res_scale)

    xq = x.astype(jnp.bfloat16).astype(jnp.float32)
    dn0 = jax.lax.conv_dimension_numbers(xq.shape, w0f.shape, ("NHWC", "HWIO", "NHWC"))
    mid = jax.lax.conv_general_dilated(
        xq, w0f, (1, 1), "SAME", dimension_numbers=dn0,
        precision=jax.lax.Precision.HIGHEST) + b0f
    mid = jnp.maximum(mid, 0.0)

    midq = mid.astype(jnp.bfloat16).astype(jnp.float32)
    dn1 = jax.lax.conv_dimension_numbers(midq.shape, w1f.shape, ("NHWC", "HWIO", "NHWC"))
    res = jax.lax.conv_general_dilated(
        midq, w1f, (1, 1), "SAME", dimension_numbers=dn1,
        precision=jax.lax.Precision.HIGHEST) + b1f

    out = x + res
    return jnp.transpose(out, (0, 3, 1, 2))


if __name__ == "__main__":
    key = jax.random.PRNGKey(0)
    kx_key, kp_key = jax.random.split(key)

    N, Cin, Cmid, Cout, H, W, K = 2, 4, 8, 4, 16, 16, 3
    x = jax.random.normal(kx_key, (N, Cin, H, W), jnp.float32)
    params = init_params(kp_key, Cin, Cmid, Cout, K)

    out = jax.block_until_ready(resblock_forward(x, params, res_scale=1.0))
    ref = jax.block_until_ready(_reference_forward(x, params, res_scale=1.0))

    assert out.shape == (N, Cout, H, W)
    max_err = float(jnp.max(jnp.abs(out - ref)))
    assert jnp.allclose(out, ref, atol=2e-3, rtol=2e-3), (
        f"mismatch vs reference: max abs err = {max_err}")

    print("KERNEL_OK")
</pallas_src>

<mosaic_0001>
module attributes {stable_mosaic.version = 11 : i64} {
  func.func @_resblock_kernel(%arg0: i32, %arg1: memref<1x4x256xf32, #tpu.memory_space<vmem>>, %arg2: memref<36x8xbf16, #tpu.memory_space<vmem>>, %arg3: memref<1x8xf32, #tpu.memory_space<vmem>>, %arg4: memref<72x4xbf16, #tpu.memory_space<vmem>>, %arg5: memref<1x4xf32, #tpu.memory_space<vmem>>, %arg6: memref<1x4x256xf32, #tpu.memory_space<vmem>>, %arg7: memref<1x18x18x4xbf16, #tpu.memory_space<vmem>>, %arg8: memref<1x18x18x8xbf16, #tpu.memory_space<vmem>>) attributes {dimension_semantics = [#tpu.dimension_semantics<parallel>], iteration_bounds = array<i64: 2>, scalar_prefetch = 0 : i64, scratch_operands = 2 : i64, tpu.core_type = #tpu.core_type<tc>, window_params = [{transform_indices = @transform_0, window_bounds = array<i64: 1, 4, 256>}, {pipeline_mode = #tpu.pipeline_mode<synchronous>, transform_indices = @transform_1, window_bounds = array<i64: 36, 8>}, {pipeline_mode = #tpu.pipeline_mode<synchronous>, transform_indices = @transform_2, window_bounds = array<i64: 1, 8>}, {pipeline_mode = #tpu.pipeline_mode<synchronous>, transform_indices = @transform_3, window_bounds = array<i64: 72, 4>}, {pipeline_mode = #tpu.pipeline_mode<synchronous>, transform_indices = @transform_4, window_bounds = array<i64: 1, 4>}, {transform_indices = @transform_5, window_bounds = array<i64: 1, 4, 256>}]} {
    %cst = arith.constant 0.000000e+00 : bf16
    %0 = vector.broadcast %cst : bf16 to vector<1x1x18x4xbf16>
    %c0 = arith.constant 0 : index
    %c0_0 = arith.constant 0 : index
    %c0_1 = arith.constant 0 : index
    %c0_2 = arith.constant 0 : index
    %1 = vector.load %arg7[%c0, %c0_0, %c0_1, %c0_2] : memref<1x18x18x4xbf16, #tpu.memory_space<vmem>>, vector<1x1x18x4xbf16>
    tpu.vector_store %arg7[%c0, %c0_0, %c0_1, %c0_2], %0 {strides = array<i32>} : memref<1x18x18x4xbf16, #tpu.memory_space<vmem>>, vector<1x1x18x4xbf16>,
    %cst_3 = arith.constant 0.000000e+00 : bf16
    %2 = vector.broadcast %cst_3 : bf16 to vector<1x1x18x4xbf16>
    %c0_4 = arith.constant 0 : index
    %c17 = arith.constant 17 : index
    %c0_5 = arith.constant 0 : index
    %c0_6 = arith.constant 0 : index
    %3 = vector.load %arg7[%c0_4, %c17, %c0_5, %c0_6] : memref<1x18x18x4xbf16, #tpu.memory_space<vmem>>, vector<1x1x18x4xbf16>
    tpu.vector_store %arg7[%c0_4, %c17, %c0_5, %c0_6], %2 {strides = array<i32>} : memref<1x18x18x4xbf16, #tpu.memory_space<vmem>>, vector<1x1x18x4xbf16>,
    %cst_7 = arith.constant 0.000000e+00 : bf16
    %4 = vector.broadcast %cst_7 : bf16 to vector<1x18x1x4xbf16>
    %c0_8 = arith.constant 0 : index
    %c0_9 = arith.constant 0 : index
    %c0_10 = arith.constant 0 : index
    %c0_11 = arith.constant 0 : index
    %5 = vector.load %arg7[%c0_8, %c0_9, %c0_10, %c0_11] : memref<1x18x18x4xbf16, #tpu.memory_space<vmem>>, vector<1x18x1x4xbf16>
    tpu.vector_store %arg7[%c0_8, %c0_9, %c0_10, %c0_11], %4 {strides = array<i32>} : memref<1x18x18x4xbf16, #tpu.memory_space<vmem>>, vector<1x18x1x4xbf16>,
    %cst_12 = arith.constant 0.000000e+00 : bf16
    %6 = vector.broadcast %cst_12 : bf16 to vector<1x18x1x4xbf16>
    %c0_13 = arith.constant 0 : index
    %c0_14 = arith.constant 0 : index
    %c17_15 = arith.constant 17 : index
    %c0_16 = arith.constant 0 : index
    %7 = vector.load %arg7[%c0_13, %c0_14, %c17_15, %c0_16] : memref<1x18x18x4xbf16, #tpu.memory_space<vmem>>, vector<1x18x1x4xbf16>
    tpu.vector_store %arg7[%c0_13, %c0_14, %c17_15, %c0_16], %6 {strides = array<i32>} : memref<1x18x18x4xbf16, #tpu.memory_space<vmem>>, vector<1x18x1x4xbf16>,
    %c0_17 = arith.constant 0 : index
    %c0_18 = arith.constant 0 : index
    %c0_19 = arith.constant 0 : index
    %8 = vector.load %arg1[%c0_17, %c0_18, %c0_19] : memref<1x4x256xf32, #tpu.memory_space<vmem>>, vector<1x4x256xf32>
    %9 = vector.shape_cast %8 : vector<1x4x256xf32> to vector<4x256xf32>
    %10 = tpu.transpose %9, [1, 0] : vector<4x256xf32> -> vector<256x4xf32>
    %11 = arith.truncf %10 : vector<256x4xf32> to vector<256x4xbf16>
    %12 = vector.shape_cast %11 : vector<256x4xbf16> to vector<16x16x4xbf16>
    %c0_20 = arith.constant 0 : index
    %c1 = arith.constant 1 : index
    %c1_21 = arith.constant 1 : index
    %c0_22 = arith.constant 0 : index
    %13 = vector.load %arg7[%c0_20, %c1, %c1_21, %c0_22] : memref<1x18x18x4xbf16, #tpu.memory_space<vmem>>, vector<1x16x16x4xbf16>
    %14 = vector.shape_cast %13 : vector<1x16x16x4xbf16> to vector<16x16x4xbf16>
    %15 = vector.shape_cast %12 : vector<16x16x4xbf16> to vector<1x16x16x4xbf16>
    tpu.vector_store %arg7[%c0_20, %c1, %c1_21, %c0_22], %15 {strides = array<i32>} : memref<1x18x18x4xbf16, #tpu.memory_space<vmem>>, vector<1x16x16x4xbf16>,
    %c0_23 = arith.constant 0 : index
    %c0_24 = arith.constant 0 : index
    %c0_25 = arith.constant 0 : index
    %c0_26 = arith.constant 0 : index
    %16 = vector.load %arg7[%c0_23, %c0_24, %c0_25, %c0_26] : memref<1x18x18x4xbf16, #tpu.memory_space<vmem>>, vector<1x18x18x4xbf16>
    %17 = vector.extract_strided_slice %16 {offsets = [0, 0, 0, 0], sizes = [1, 16, 16, 4], strides = [1, 1, 1, 1]} : vector<1x18x18x4xbf16> to vector<1x16x16x4xbf16>
    %18 = vector.extract_strided_slice %16 {offsets = [0, 0, 1, 0], sizes = [1, 16, 16, 4], strides = [1, 1, 1, 1]} : vector<1x18x18x4xbf16> to vector<1x16x16x4xbf16>
    %19 = vector.extract_strided_slice %16 {offsets = [0, 0, 2, 0], sizes = [1, 16, 16, 4], strides = [1, 1, 1, 1]} : vector<1x18x18x4xbf16> to vector<1x16x16x4xbf16>
    %20 = vector.extract_strided_slice %16 {offsets = [0, 1, 0, 0], sizes = [1, 16, 16, 4], strides = [1, 1, 1, 1]} : vector<1x18x18x4xbf16> to vector<1x16x16x4xbf16>
    %21 = vector.extract_strided_slice %16 {offsets = [0, 1, 1, 0], sizes = [1, 16, 16, 4], strides = [1, 1, 1, 1]} : vector<1x18x18x4xbf16> to vector<1x16x16x4xbf16>
    %22 = vector.extract_strided_slice %16 {offsets = [0, 1, 2, 0], sizes = [1, 16, 16, 4], strides = [1, 1, 1, 1]} : vector<1x18x18x4xbf16> to vector<1x16x16x4xbf16>
    %23 = vector.extract_strided_slice %16 {offsets = [0, 2, 0, 0], sizes = [1, 16, 16, 4], strides = [1, 1, 1, 1]} : vector<1x18x18x4xbf16> to vector<1x16x16x4xbf16>
    %24 = vector.extract_strided_slice %16 {offsets = [0, 2, 1, 0], sizes = [1, 16, 16, 4], strides = [1, 1, 1, 1]} : vector<1x18x18x4xbf16> to vector<1x16x16x4xbf16>
    %25 = vector.extract_strided_slice %16 {offsets = [0, 2, 2, 0], sizes = [1, 16, 16, 4], strides = [1, 1, 1, 1]} : vector<1x18x18x4xbf16> to vector<1x16x16x4xbf16>
    %26 = tpu.concatenate %17, %18, %19, %20, %21, %22, %23, %24, %25 in 3 : vector<1x16x16x4xbf16>, vector<1x16x16x4xbf16>, vector<1x16x16x4xbf16>, vector<1x16x16x4xbf16>, vector<1x16x16x4xbf16>, vector<1x16x16x4xbf16>, vector<1x16x16x4xbf16>, vector<1x16x16x4xbf16>, vector<1x16x16x4xbf16> -> vector<1x16x16x36xbf16>
    %27 = vector.shape_cast %26 : vector<1x16x16x36xbf16> to vector<256x36xbf16>
    %c0_27 = arith.constant 0 : index
    %c0_28 = arith.constant 0 : index
    %28 = vector.load %arg2[%c0_27, %c0_28] : memref<36x8xbf16, #tpu.memory_space<vmem>>, vector<36x8xbf16>
    %cst_29 = arith.constant dense<0.000000e+00> : vector<256x8xf32>
    %29 = tpu.matmul %27, %28, %cst_29 {dimension_numbers = #tpu.dot_dimension_numbers<[1], [0], [0], [1], [0, 0, 1, 1], [], []>} : vector<256x36xbf16>, vector<36x8xbf16>, vector<256x8xf32> -> vector<256x8xf32>
    %c0_30 = arith.constant 0 : index
    %c0_31 = arith.constant 0 : index
    %30 = vector.load %arg3[%c0_30, %c0_31] : memref<1x8xf32, #tpu.memory_space<vmem>>, vector<1x8xf32>
    %31 = vector.broadcast %30 : vector<1x8xf32> to vector<256x8xf32>
    %32 = arith.addf %29, %31 : vector<256x8xf32>
    %cst_32 = arith.constant 0.000000e+00 : f32
    %33 = vector.broadcast %cst_32 : f32 to vector<256x8xf32>
    %34 = arith.maximumf %32, %33 : vector<256x8xf32>
    %cst_33 = arith.constant 0.000000e+00 : bf16
    %35 = vector.broadcast %cst_33 : bf16 to vector<1x1x18x8xbf16>
    %c0_34 = arith.constant 0 : index
    %c0_35 = arith.constant 0 : index
    %c0_36 = arith.constant 0 : index
    %c0_37 = arith.constant 0 : index
    %36 = vector.load %arg8[%c0_34, %c0_35, %c0_36, %c0_37] : memref<1x18x18x8xbf16, #tpu.memory_space<vmem>>, vector<1x1x18x8xbf16>
    tpu.vector_store %arg8[%c0_34, %c0_35, %c0_36, %c0_37], %35 {strides = array<i32>} : memref<1x18x18x8xbf16, #tpu.memory_space<vmem>>, vector<1x1x18x8xbf16>,
    %cst_38 = arith.constant 0.000000e+00 : bf16
    %37 = vector.broadcast %cst_38 : bf16 to vector<1x1x18x8xbf16>
    %c0_39 = arith.constant 0 : index
    %c17_40 = arith.constant 17 : index
    %c0_41 = arith.constant 0 : index
    %c0_42 = arith.constant 0 : index
    %38 = vector.load %arg8[%c0_39, %c17_40, %c0_41, %c0_42] : memref<1x18x18x8xbf16, #tpu.memory_space<vmem>>, vector<1x1x18x8xbf16>
    tpu.vector_store %arg8[%c0_39, %c17_40, %c0_41, %c0_42], %37 {strides = array<i32>} : memref<1x18x18x8xbf16, #tpu.memory_space<vmem>>, vector<1x1x18x8xbf16>,
    %cst_43 = arith.constant 0.000000e+00 : bf16
    %39 = vector.broadcast %cst_43 : bf16 to vector<1x18x1x8xbf16>
    %c0_44 = arith.constant 0 : index
    %c0_45 = arith.constant 0 : index
    %c0_46 = arith.constant 0 : index
    %c0_47 = arith.constant 0 : index
    %40 = vector.load %arg8[%c0_44, %c0_45, %c0_46, %c0_47] : memref<1x18x18x8xbf16, #tpu.memory_space<vmem>>, vector<1x18x1x8xbf16>
    tpu.vector_store %arg8[%c0_44, %c0_45, %c0_46, %c0_47], %39 {strides = array<i32>} : memref<1x18x18x8xbf16, #tpu.memory_space<vmem>>, vector<1x18x1x8xbf16>,
    %cst_48 = arith.constant 0.000000e+00 : bf16
    %41 = vector.broadcast %cst_48 : bf16 to vector<1x18x1x8xbf16>
    %c0_49 = arith.constant 0 : index
    %c0_50 = arith.constant 0 : index
    %c17_51 = arith.constant 17 : index
    %c0_52 = arith.constant 0 : index
    %42 = vector.load %arg8[%c0_49, %c0_50, %c17_51, %c0_52] : memref<1x18x18x8xbf16, #tpu.memory_space<vmem>>, vector<1x18x1x8xbf16>
    tpu.vector_store %arg8[%c0_49, %c0_50, %c17_51, %c0_52], %41 {strides = array<i32>} : memref<1x18x18x8xbf16, #tpu.memory_space<vmem>>, vector<1x18x1x8xbf16>,
    %43 = arith.truncf %34 : vector<256x8xf32> to vector<256x8xbf16>
    %44 = vector.shape_cast %43 : vector<256x8xbf16> to vector<1x16x16x8xbf16>
    %c0_53 = arith.constant 0 : index
    %c1_54 = arith.constant 1 : index
    %c1_55 = arith.constant 1 : index
    %c0_56 = arith.constant 0 : index
    %45 = vector.load %arg8[%c0_53, %c1_54, %c1_55, %c0_56] : memref<1x18x18x8xbf16, #tpu.memory_space<vmem>>, vector<1x16x16x8xbf16>
    tpu.vector_store %arg8[%c0_53, %c1_54, %c1_55, %c0_56], %44 {strides = array<i32>} : memref<1x18x18x8xbf16, #tpu.memory_space<vmem>>, vector<1x16x16x8xbf16>,
    %c0_57 = arith.constant 0 : index
    %c0_58 = arith.constant 0 : index
    %c0_59 = arith.constant 0 : index
    %c0_60 = arith.constant 0 : index
    %46 = vector.load %arg8[%c0_57, %c0_58, %c0_59, %c0_60] : memref<1x18x18x8xbf16, #tpu.memory_space<vmem>>, vector<1x18x18x8xbf16>
    %47 = vector.extract_strided_slice %46 {offsets = [0, 0, 0, 0], sizes = [1, 16, 16, 8], strides = [1, 1, 1, 1]} : vector<1x18x18x8xbf16> to vector<1x16x16x8xbf16>
    %48 = vector.extract_strided_slice %46 {offsets = [0, 0, 1, 0], sizes = [1, 16, 16, 8], strides = [1, 1, 1, 1]} : vector<1x18x18x8xbf16> to vector<1x16x16x8xbf16>
    %49 = vector.extract_strided_slice %46 {offsets = [0, 0, 2, 0], sizes = [1, 16, 16, 8], strides = [1, 1, 1, 1]} : vector<1x18x18x8xbf16> to vector<1x16x16x8xbf16>
    %50 = vector.extract_strided_slice %46 {offsets = [0, 1, 0, 0], sizes = [1, 16, 16, 8], strides = [1, 1, 1, 1]} : vector<1x18x18x8xbf16> to vector<1x16x16x8xbf16>
    %51 = vector.extract_strided_slice %46 {offsets = [0, 1, 1, 0], sizes = [1, 16, 16, 8], strides = [1, 1, 1, 1]} : vector<1x18x18x8xbf16> to vector<1x16x16x8xbf16>
    %52 = vector.extract_strided_slice %46 {offsets = [0, 1, 2, 0], sizes = [1, 16, 16, 8], strides = [1, 1, 1, 1]} : vector<1x18x18x8xbf16> to vector<1x16x16x8xbf16>
    %53 = vector.extract_strided_slice %46 {offsets = [0, 2, 0, 0], sizes = [1, 16, 16, 8], strides = [1, 1, 1, 1]} : vector<1x18x18x8xbf16> to vector<1x16x16x8xbf16>
    %54 = vector.extract_strided_slice %46 {offsets = [0, 2, 1, 0], sizes = [1, 16, 16, 8], strides = [1, 1, 1, 1]} : vector<1x18x18x8xbf16> to vector<1x16x16x8xbf16>
    %55 = vector.extract_strided_slice %46 {offsets = [0, 2, 2, 0], sizes = [1, 16, 16, 8], strides = [1, 1, 1, 1]} : vector<1x18x18x8xbf16> to vector<1x16x16x8xbf16>
    %56 = tpu.concatenate %47, %48, %49, %50, %51, %52, %53, %54, %55 in 3 : vector<1x16x16x8xbf16>, vector<1x16x16x8xbf16>, vector<1x16x16x8xbf16>, vector<1x16x16x8xbf16>, vector<1x16x16x8xbf16>, vector<1x16x16x8xbf16>, vector<1x16x16x8xbf16>, vector<1x16x16x8xbf16>, vector<1x16x16x8xbf16> -> vector<1x16x16x72xbf16>
    %57 = vector.shape_cast %56 : vector<1x16x16x72xbf16> to vector<256x72xbf16>
    %c0_61 = arith.constant 0 : index
    %c0_62 = arith.constant 0 : index
    %58 = vector.load %arg4[%c0_61, %c0_62] : memref<72x4xbf16, #tpu.memory_space<vmem>>, vector<72x4xbf16>
    %cst_63 = arith.constant dense<0.000000e+00> : vector<256x4xf32>
    %59 = tpu.matmul %57, %58, %cst_63 {dimension_numbers = #tpu.dot_dimension_numbers<[1], [0], [0], [1], [0, 0, 1, 1], [], []>} : vector<256x72xbf16>, vector<72x4xbf16>, vector<256x4xf32> -> vector<256x4xf32>
    %c0_64 = arith.constant 0 : index
    %c0_65 = arith.constant 0 : index
    %60 = vector.load %arg5[%c0_64, %c0_65] : memref<1x4xf32, #tpu.memory_space<vmem>>, vector<1x4xf32>
    %61 = vector.broadcast %60 : vector<1x4xf32> to vector<256x4xf32>
    %62 = arith.addf %59, %61 : vector<256x4xf32>
    %63 = tpu.transpose %62, [1, 0] : vector<256x4xf32> -> vector<4x256xf32>
    %c0_66 = arith.constant 0 : index
    %c0_67 = arith.constant 0 : index
    %c0_68 = arith.constant 0 : index
    %64 = vector.load %arg1[%c0_66, %c0_67, %c0_68] : memref<1x4x256xf32, #tpu.memory_space<vmem>>, vector<1x4x256xf32>
    %65 = vector.shape_cast %64 : vector<1x4x256xf32> to vector<4x256xf32>
    %66 = arith.addf %65, %63 : vector<4x256xf32>
    %c0_69 = arith.constant 0 : index
    %c0_70 = arith.constant 0 : index
    %c0_71 = arith.constant 0 : index
    %67 = vector.load %arg6[%c0_69, %c0_70, %c0_71] : memref<1x4x256xf32, #tpu.memory_space<vmem>>, vector<1x4x256xf32>
    %68 = vector.shape_cast %67 : vector<1x4x256xf32> to vector<4x256xf32>
    %69 = vector.shape_cast %66 : vector<4x256xf32> to vector<1x4x256xf32>
    tpu.vector_store %arg6[%c0_69, %c0_70, %c0_71], %69 {strides = array<i32>} : memref<1x4x256xf32, #tpu.memory_space<vmem>>, vector<1x4x256xf32>,
    return
  }
  func.func @transform_0(%arg0: i32) -> (i32, i32, i32) {
    %c0_i32 = arith.constant 0 : i32
    %c0_i32_0 = arith.constant 0 : i32
    %c0_i32_1 = arith.constant 0 : i32
    return %arg0, %c0_i32, %c0_i32_0 : i32, i32, i32
  }
  func.func @transform_1(%arg0: i32) -> (i32, i32) {
    %c0_i32 = arith.constant 0 : i32
    %c0_i32_0 = arith.constant 0 : i32
    %c0_i32_1 = arith.constant 0 : i32
    return %c0_i32, %c0_i32_0 : i32, i32
  }
  func.func @transform_2(%arg0: i32) -> (i32, i32) {
    %c0_i32 = arith.constant 0 : i32
    %c0_i32_0 = arith.constant 0 : i32
    %c0_i32_1 = arith.constant 0 : i32
    return %c0_i32, %c0_i32_0 : i32, i32
  }
  func.func @transform_3(%arg0: i32) -> (i32, i32) {
    %c0_i32 = arith.constant 0 : i32
    %c0_i32_0 = arith.constant 0 : i32
    %c0_i32_1 = arith.constant 0 : i32
    return %c0_i32, %c0_i32_0 : i32, i32
  }
  func.func @transform_4(%arg0: i32) -> (i32, i32) {
    %c0_i32 = arith.constant 0 : i32
    %c0_i32_0 = arith.constant 0 : i32
    %c0_i32_1 = arith.constant 0 : i32
    return %c0_i32, %c0_i32_0 : i32, i32
  }
  func.func @transform_5(%arg0: i32) -> (i32, i32, i32) {
    %c0_i32 = arith.constant 0 : i32
    %c0_i32_0 = arith.constant 0 : i32
    %c0_i32_1 = arith.constant 0 : i32
    return %arg0, %c0_i32, %c0_i32_0 : i32, i32, i32
  }
}

</mosaic_0001>

<llo_original>
// kernel: tpu_custom_call.1
$region0: #{tpu_custom_call.1}
  #allocation0 [shape = 'u32[]', space=smem, size = 0x4, offset = 0x4, fixed_abs, tag = 'smem constant byte address 0x4 - core index']
  #allocation1 [shape = 'u32[144,128]{1,0:T(1,128)}', space=vmem, size = 0x12000, scoped, tag = 'internal scratch']
  #allocation2 [shape = 'bf16[1,18,18,4]{3,2,1,0:T(8,128)(2,1)}', space=vmem, size = 0x1b000, scoped, tag = 'scratch operand']
  #allocation3 [shape = 'bf16[1,18,18,8]{3,2,1,0:T(8,128)(2,1)}', space=vmem, size = 0x1b000, scoped, tag = 'scratch operand']
  %s0 = inlined_call_operand.vmem [shape: f32[2,4,256], index: 0, kind: input, shape index: {}]
  %s1 = inlined_call_operand.vmem [shape: bf16[36,8], index: 1, kind: input, shape index: {}]
  %s2 = inlined_call_operand.vmem [shape: f32[1,8], index: 2, kind: input, shape index: {}]
  %s3 = inlined_call_operand.vmem [shape: bf16[72,4], index: 3, kind: input, shape index: {}]
  %s4 = inlined_call_operand.vmem [shape: f32[1,4], index: 4, kind: input, shape index: {}]
  %s5 = inlined_call_operand.hbm [shape: f32[2,4,256], index: 5, kind: output, shape index: {}]
  %s6 = sld [smem:[#allocation0]]
  $region53: #{tpu_custom_call.1} parent=0
    _
  %s8 = ssub.s32 1, %s6
  %s9 = scalar_select 0, %s8, %s6
  $region1: #{tpu_custom_call.1} parent=0
    #allocation4 [shape = 'u8[8192]{0}', space=vmem, size = 0x2000, scoped, tag = 'output window, operand 0']
    #allocation5 [shape = 's32[2]{0}', space=sflag, size = 0x8, scoped, tag = 'scoped memory for tpu_custom_call.1']
    %10 = vsyncpa [#allocation5], 0
    %s11 = scalar_lea.sflag [#allocation5], 1
    %12 = vsyncpa %s11, 0
    loop: start=0, step=1, limit=4
    $region2: #{tpu_custom_call.1} parent=1 // loop_pre_header
      _
    $region3: #{tpu_custom_call.1} parent=1 // loop_header
      %s14 = sphi 0, %s18
      %p15 = scmp.ge.s32.totalorder %s14, 4
      %s24 = sphi 0, %s26
      %s27 = sphi 0, %s24
      %s28 = sphi 0, %s27
      %s44 = sphi 0, %s28
      %s48 = sphi 0, %s48
      %s50 = sphi 0, %s48
      %s51 = sphi 0, %s50
      %s65 = sphi 0, %s51
      %s69 = sphi 0, %s69
      %s71 = sphi 0, %s69
      %s72 = sphi 0, %s71
      %s86 = sphi 0, %s72
      %s90 = sphi 0, %s90
      %s92 = sphi 0, %s90
      %s93 = sphi 0, %s92
      %s107 = sphi 0, %s93
      %s111 = sphi 0, %s111
      %s113 = sphi 0, %s111
      %s114 = sphi 0, %s113
      %s128 = sphi 0, %s114
      %s134 = sphi 0, %s136
      %s137 = sphi 0, %s134
      %s138 = sphi 0, %s137
      %s154 = sphi 0, %s138
    $region4: #{tpu_custom_call.1} parent=1 // loop_header_branch
      %17 = sbr.rel (%p15) target = $region8
    $region5: #{tpu_custom_call.1} parent=1 // loop_body
      %s19 = ssub.s32 %s14, 1
      %s20 = ssub.s32 %s14, 2
      %s21 = sadd.s32 %s14, 1
      %s22 = ssub.s32 %s14, %s21
      %p23 = scmp.eq.s32.totalorder %s22, 0
      %s25 = sadd.s32 %s24, 1
      %s26 = scalar_select %p23, %s24, %s25
      %p29 = pneg %p23
      %p30 = scmp.eq.s32.totalorder %s14, 1
      %p31 = por %p29, %p30
      %p32 = scmp.ne.s32.totalorder %s24, %s27
      %p33 = scmp.eq.s32.totalorder %s14, 0
      %p34 = por %p32, %p33
      %p35 = scmp.ne.s32.totalorder %s24, %s27
      %p36 = scmp.eq.s32.totalorder %s19, 1
      %p37 = por %p35, %p36
      %p38 = scmp.ne.s32.totalorder %s27, %s28
      %p39 = scmp.eq.s32.totalorder %s19, 0
      %p40 = por %p38, %p39
      %p41 = scmp.ne.s32.totalorder %s27, %s28
      %p42 = scmp.eq.s32.totalorder %s20, 1
      %p43 = por %p41, %p42
      %p45 = scmp.ne.s32.totalorder %s28, %s44
      %p46 = scmp.eq.s32.totalorder %s20, 0
      %p47 = por %p45, %p46
      %s49 = sadd.s32 %s48, 1
      %p52 = scmp.eq.s32.totalorder %s14, 1
      %p53 = scmp.ne.s32.totalorder %s48, %s50
      %p54 = scmp.eq.s32.totalorder %s14, 0
      %p55 = por %p53, %p54
      %p56 = scmp.ne.s32.totalorder %s48, %s50
      %p57 = scmp.eq.s32.totalorder %s19, 1
      %p58 = por %p56, %p57
      %p59 = scmp.ne.s32.totalorder %s50, %s51
      %p60 = scmp.eq.s32.totalorder %s19, 0
      %p61 = por %p59, %p60
      %p62 = scmp.ne.s32.totalorder %s50, %s51
      %p63 = scmp.eq.s32.totalorder %s20, 1
      %p64 = por %p62, %p63
      %p66 = scmp.ne.s32.totalorder %s51, %s65
      %p67 = scmp.eq.s32.totalorder %s20, 0
      %p68 = por %p66, %p67
      %s70 = sadd.s32 %s69, 1
      %p73 = scmp.eq.s32.totalorder %s14, 1
      %p74 = scmp.ne.s32.totalorder %s69, %s71
      %p75 = scmp.eq.s32.totalorder %s14, 0
      %p76 = por %p74, %p75
      %p77 = scmp.ne.s32.totalorder %s69, %s71
      %p78 = scmp.eq.s32.totalorder %s19, 1
      %p79 = por %p77, %p78
      %p80 = scmp.ne.s32.totalorder %s71, %s72
      %p81 = scmp.eq.s32.totalorder %s19, 0
      %p82 = por %p80, %p81
      %p83 = scmp.ne.s32.totalorder %s71, %s72
      %p84 = scmp.eq.s32.totalorder %s20, 1
      %p85 = por %p83, %p84
      %p87 = scmp.ne.s32.totalorder %s72, %s86
      %p88 = scmp.eq.s32.totalorder %s20, 0
      %p89 = por %p87, %p88
      %s91 = sadd.s32 %s90, 1
      %p94 = scmp.eq.s32.totalorder %s14, 1
      %p95 = scmp.ne.s32.totalorder %s90, %s92
      %p96 = scmp.eq.s32.totalorder %s14, 0
      %p97 = por %p95, %p96
      %p98 = scmp.ne.s32.totalorder %s90, %s92
      %p99 = scmp.eq.s32.totalorder %s19, 1
      %p100 = por %p98, %p99
      %p101 = scmp.ne.s32.totalorder %s92, %s93
      %p102 = scmp.eq.s32.totalorder %s19, 0
      %p103 = por %p101, %p102
      %p104 = scmp.ne.s32.totalorder %s92, %s93
      %p105 = scmp.eq.s32.totalorder %s20, 1
      %p106 = por %p104, %p105
      %p108 = scmp.ne.s32.totalorder %s93, %s107
      %p109 = scmp.eq.s32.totalorder %s20, 0
      %p110 = por %p108, %p109
      %s112 = sadd.s32 %s111, 1
      %p115 = scmp.eq.s32.totalorder %s14, 1
      %p116 = scmp.ne.s32.totalorder %s111, %s113
      %p117 = scmp.eq.s32.totalorder %s14, 0
      %p118 = por %p116, %p117
      %p119 = scmp.ne.s32.totalorder %s111, %s113
      %p120 = scmp.eq.s32.totalorder %s19, 1
      %p121 = por %p119, %p120
      %p122 = scmp.ne.s32.totalorder %s113, %s114
      %p123 = scmp.eq.s32.totalorder %s19, 0
      %p124 = por %p122, %p123
      %p125 = scmp.ne.s32.totalorder %s113, %s114
      %p126 = scmp.eq.s32.totalorder %s20, 1
      %p127 = por %p125, %p126
      %p129 = scmp.ne.s32.totalorder %s114, %s128
      %p130 = scmp.eq.s32.totalorder %s20, 0
      %p131 = por %p129, %p130
      %s132 = ssub.s32 %s14, %s21
      %p133 = scmp.eq.s32.totalorder %s132, 0
      %s135 = sadd.s32 %s134, 1
      %s136 = scalar_select %p133, %s134, %s135
      %p139 = pneg %p133
      %p140 = scmp.eq.s32.totalorder %s14, 1
      %p141 = por %p139, %p140
      %p142 = scmp.ne.s32.totalorder %s134, %s137
      %p143 = scmp.eq.s32.totalorder %s14, 0
      %p144 = por %p142, %p143
      %p145 = scmp.ne.s32.totalorder %s134, %s137
      %p146 = scmp.eq.s32.totalorder %s19, 1
      %p147 = por %p145, %p146
      %p148 = scmp.ne.s32.totalorder %s137, %s138
      %p149 = scmp.eq.s32.totalorder %s19, 0
      %p150 = por %p148, %p149
      %p151 = scmp.ne.s32.totalorder %s137, %s138
      %p152 = scmp.eq.s32.totalorder %s20, 1
      %p153 = por %p151, %p152
      %p155 = scmp.ne.s32.totalorder %s138, %s154
      %p156 = scmp.eq.s32.totalorder %s20, 0
      %p157 = por %p155, %p156
      %p158 = scmp.le.s32.totalorder 1, %s14
      %p159 = scmp.lt.s32.totalorder %s14, 3
      %p160 = pnand %p158, %p159
      %p161 = pneg %p160
      // Predicated region
      $region9: #{tpu_custom_call.1} parent=5 // pred_check
        _
      $region10: #{tpu_custom_call.1} parent=5 // pred_check_branch
        %163 = sbr.rel (%p160) target = $region12
      $region11: #{tpu_custom_call.1} parent=5 // pred_region
        %s164 = ssub.s32 %s14, 1
        // Predicated region
        $region13: #{tpu_custom_call.1} parent=11 // pred_check
          %p165 = pneg %p61
        $region14: #{tpu_custom_call.1} parent=11 // pred_check_branch
          %167 = sbr.rel (%p165) target = $region16
        $region15: #{tpu_custom_call.1} parent=11 // pred_region
          _
        $region16: #{tpu_custom_call.1} parent=11 // pred_fallthru
          _
        // Predicated region
        $region17: #{tpu_custom_call.1} parent=11 // pred_check
          %p168 = pneg %p82
        $region18: #{tpu_custom_call.1} parent=11 // pred_check_branch
          %170 = sbr.rel (%p168) target = $region20
        $region19: #{tpu_custom_call.1} parent=11 // pred_region
          _
        $region20: #{tpu_custom_call.1} parent=11 // pred_fallthru
          _
        // Predicated region
        $region21: #{tpu_custom_call.1} parent=11 // pred_check
          %p171 = pneg %p103
        $region22: #{tpu_custom_call.1} parent=11 // pred_check_branch
          %173 = sbr.rel (%p171) target = $region24
        $region23: #{tpu_custom_call.1} parent=11 // pred_region
          _
        $region24: #{tpu_custom_call.1} parent=11 // pred_fallthru
          _
        // Predicated region
        $region25: #{tpu_custom_call.1} parent=11 // pred_check
          %p174 = pneg %p124
        $region26: #{tpu_custom_call.1} parent=11 // pred_check_branch
          %176 = sbr.rel (%p174) target = $region28
        $region27: #{tpu_custom_call.1} parent=11 // pred_region
          _
        $region28: #{tpu_custom_call.1} parent=11 // pred_fallthru
          _
      $region12: #{tpu_custom_call.1} parent=5 // pred_fallthru
        _
      %p177 = scmp.lt.s32.totalorder %s14, 2
      // Predicated region
      $region29: #{tpu_custom_call.1} parent=5 // pred_check
        %p178 = pneg %p177
      $region30: #{tpu_custom_call.1} parent=5 // pred_check_branch
        %180 = sbr.rel (%p178) target = $region32
      $region31: #{tpu_custom_call.1} parent=5 // pred_region
        // Predicated region
        $region33: #{tpu_custom_call.1} parent=31 // pred_check
          %p181 = pneg %p34
        $region34: #{tpu_custom_call.1} parent=31 // pred_check_branch
          %183 = sbr.rel (%p181) target = $region36
        $region35: #{tpu_custom_call.1} parent=31 // pred_region
          %p184 = scmp.lt.s32.totalorder %s14, 1
          %s185 = scalar_select %p184, %s14, 1
          %s186 = smul.addr %s185, 2
          %s187 = smul.addr %s186, 4
          %s188 = scalar_lea.vmem %s0, %s187
        $region36: #{tpu_custom_call.1} parent=31 // pred_fallthru
          _
      $region32: #{tpu_custom_call.1} parent=5 // pred_fallthru
        _
      %p189 = scmp.le.s32.totalorder 1, %s14
      %p190 = scmp.lt.s32.totalorder %s14, 3
      %p191 = pnand %p189, %p190
      %p192 = pneg %p191
      // Predicated region
      $region37: #{tpu_custom_call.1} parent=5 // pred_check
        _
      $region38: #{tpu_custom_call.1} parent=5 // pred_check_branch
        %194 = sbr.rel (%p191) target = $region40
      $region39: #{tpu_custom_call.1} parent=5 // pred_region
        %s195 = ssub.s32 %s14, 1
        %p196 = scmp.lt.s32.totalorder %s19, 1
        %s197 = scalar_select %p196, %s19, 1
        %s198 = smul.addr %s197, 2
        %s199 = smul.addr %s198, 4
        %s200 = scalar_lea.vmem %s0, %s199
        %p201 = pneg %p40
        %p202 = pneg %p37
        %p203 = pneg %p61
        %p204 = pneg %p58
        %p205 = pneg %p82
        %p206 = pneg %p79
        %p207 = pneg %p103
        %p208 = pneg %p100
        %p209 = pneg %p124
        %p210 = pneg %p121
        %p211 = pneg %p150
        %p212 = pneg %p147
        %s213 = sand.u32 %s137, 1
        %s214 = scalar_lea.sflag [#allocation5], %s213
        %s215 = sand.u32 %s137, 1
        %s216 = smul.addr %s215, 8
        %s217 = scalar_lea.vmem [#allocation4], %s216
        %p218 = scmp.lt.s32.totalorder %s19, 1
        %s219 = scalar_select %p218, %s19, 1
        %s220 = smul.addr %s219, 2
        %s221 = smul.addr %s220, 4
        %s222 = scalar_lea.vmem %s0, %s221
        %vm224 = vcmask 27648
        %225 = vst.msk [vmem:[#allocation2] sm:$0xf] %vm224, 0
        %226 = vst.msk [vmem:[#allocation2 + $0x4] sm:$0xf] %vm224, 0
        %vm227 = vcmask 24576
        %228 = vst.msk [vmem:[#allocation2 + $0x8] sm:$0x1] %vm227, 0
        %s229 = scalar_lea.vmem [#allocation2], 204
        %230 = vst.msk [vmem:[%s229] sm:$0xf] %vm224, 0
        %231 = vst.msk [vmem:[%s229 + $0x4] sm:$0xf] %vm224, 0
        %232 = vst.msk [vmem:[%s229 + $0x8] sm:$0x1] %vm227, 0
        %vm233 = vcmask 24576
        %vm234 = vsmask.f32 256
        %vm235 = vmand %vm233, %vm234
        %v236 = vld [vmem:[#allocation2] sm:$0x1]
        %v237 = vsel %vm235, 0, %v236
        %238 = vst [vmem:[#allocation2] sm:$0x1] %v237
        %v239 = vld [vmem:[#allocation2 + $0xc] sm:$0x1]
        %v240 = vsel %vm235, 0, %v239
        %241 = vst [vmem:[#allocation2 + $0xc] sm:$0x1] %v240
        %v242 = vld [vmem:[#allocation2 + $0x18] sm:$0x1]
        %v243 = vsel %vm235, 0, %v242
        %244 = vst [vmem:[#allocation2 + $0x18] sm:$0x1] %v243
        %v245 = vld [vmem:[#allocation2 + $0x24] sm:$0x1]
        %v246 = vsel %vm235, 0, %v245
        %247 = vst [vmem:[#allocation2 + $0x24] sm:$0x1] %v246
        %v248 = vld [vmem:[#allocation2 + $0x30] sm:$0x1]
        %v249 = vsel %vm235, 0, %v248
        %250 = vst [vmem:[#allocation2 + $0x30] sm:$0x1] %v249
        %v251 = vld [vmem:[#allocation2 + $0x3c] sm:$0x1]
        %v252 = vsel %vm235, 0, %v251
        %253 = vst [vmem:[#allocation2 + $0x3c] sm:$0x1] %v252
        %v254 = vld [vmem:[#allocation2 + $0x48] sm:$0x1]
        %v255 = vsel %vm235, 0, %v254
        %256 = vst [vmem:[#allocation2 + $0x48] sm:$0x1] %v255
        %v257 = vld [vmem:[#allocation2 + $0x54] sm:$0x1]
        %v258 = vsel %vm235, 0, %v257
        %259 = vst [vmem:[#allocation2 + $0x54] sm:$0x1] %v258
        %v260 = vld [vmem:[#allocation2 + $0x60] sm:$0x1]
        %v261 = vsel %vm235, 0, %v260
        %262 = vst [vmem:[#allocation2 + $0x60] sm:$0x1] %v261
        %v263 = vld [vmem:[#allocation2 + $0x6c] sm:$0x1]
        %v264 = vsel %vm235, 0, %v263
        %265 = vst [vmem:[#allocation2 + $0x6c] sm:$0x1] %v264
        %v266 = vld [vmem:[#allocation2 + $0x78] sm:$0x1]
        %v267 = vsel %vm235, 0, %v266
        %268 = vst [vmem:[#allocation2 + $0x78] sm:$0x1] %v267
        %v269 = vld [vmem:[#allocation2 + $0x84] sm:$0x1]
        %v270 = vsel %vm235, 0, %v269
        %271 = vst [vmem:[#allocation2 + $0x84] sm:$0x1] %v270
        %v272 = vld [vmem:[#allocation2 + $0x90] sm:$0x1]
        %v273 = vsel %vm235, 0, %v272
        %274 = vst [vmem:[#allocation2 + $0x90] sm:$0x1] %v273
        %v275 = vld [vmem:[#allocation2 + $0x9c] sm:$0x1]
        %v276 = vsel %vm235, 0, %v275
        %277 = vst [vmem:[#allocation2 + $0x9c] sm:$0x1] %v276
        %v278 = vld [vmem:[#allocation2 + $0xa8] sm:$0x1]
        %v279 = vsel %vm235, 0, %v278
        %280 = vst [vmem:[#allocation2 + $0xa8] sm:$0x1] %v279
        %v281 = vld [vmem:[#allocation2 + $0xb4] sm:$0x1]
        %v282 = vsel %vm235, 0, %v281
        %283 = vst [vmem:[#allocation2 + $0xb4] sm:$0x1] %v282
        %v284 = vld [vmem:[#allocation2 + $0xc0] sm:$0x1]
        %v285 = vsel %vm235, 0, %v284
        %286 = vst [vmem:[#allocation2 + $0xc0] sm:$0x1] %v285
        %v287 = vld [vmem:[#allocation2 + $0xcc] sm:$0x1]
        %v288 = vsel %vm235, 0, %v287
        %289 = vst [vmem:[#allocation2 + $0xcc] sm:$0x1] %v288
        %vm290 = vsmask.f32 7938
        %vm291 = vmand %vm233, %vm290
        %v292 = vld [vmem:[#allocation2 + $0x8] sm:$0x1]
        %v293 = vsel %vm291, 0, %v292
        %294 = vst [vmem:[#allocation2 + $0x8] sm:$0x1] %v293
        %v295 = vld [vmem:[#allocation2 + $0x14] sm:$0x1]
        %v296 = vsel %vm291, 0, %v295
        %297 = vst [vmem:[#allocation2 + $0x14] sm:$0x1] %v296
        %v298 = vld [vmem:[#allocation2 + $0x20] sm:$0x1]
        %v299 = vsel %vm291, 0, %v298
        %300 = vst [vmem:[#allocation2 + $0x20] sm:$0x1] %v299
        %v301 = vld [vmem:[#allocation2 + $0x2c] sm:$0x1]
        %v302 = vsel %vm291, 0, %v301
        %303 = vst [vmem:[#allocation2 + $0x2c] sm:$0x1] %v302
        %v304 = vld [vmem:[#allocation2 + $0x38] sm:$0x1]
        %v305 = vsel %vm291, 0, %v304
        %306 = vst [vmem:[#allocation2 + $0x38] sm:$0x1] %v305
        %v307 = vld [vmem:[#allocation2 + $0x44] sm:$0x1]
        %v308 = vsel %vm291, 0, %v307
        %309 = vst [vmem:[#allocation2 + $0x44] sm:$0x1] %v308
        %v310 = vld [vmem:[#allocation2 + $0x50] sm:$0x1]
        %v311 = vsel %vm291, 0, %v310
        %312 = vst [vmem:[#allocation2 + $0x50] sm:$0x1] %v311
        %v313 = vld [vmem:[#allocation2 + $0x5c] sm:$0x1]
        %v314 = vsel %vm291, 0, %v313
        %315 = vst [vmem:[#allocation2 + $0x5c] sm:$0x1] %v314
        %v316 = vld [vmem:[#allocation2 + $0x68] sm:$0x1]
        %v317 = vsel %vm291, 0, %v316
        %318 = vst [vmem:[#allocation2 + $0x68] sm:$0x1] %v317
        %v319 = vld [vmem:[#allocation2 + $0x74] sm:$0x1]
        %v320 = vsel %vm291, 0, %v319
        %321 = vst [vmem:[#allocation2 + $0x74] sm:$0x1] %v320
        %v322 = vld [vmem:[#allocation2 + $0x80] sm:$0x1]
        %v323 = vsel %vm291, 0, %v322
        %324 = vst [vmem:[#allocation2 + $0x80] sm:$0x1] %v323
        %v325 = vld [vmem:[#allocation2 + $0x8c] sm:$0x1]
        %v326 = vsel %vm291, 0, %v325
        %327 = vst [vmem:[#allocation2 + $0x8c] sm:$0x1] %v326
        %v328 = vld [vmem:[#allocation2 + $0x98] sm:$0x1]
        %v329 = vsel %vm291, 0, %v328
        %330 = vst [vmem:[#allocation2 + $0x98] sm:$0x1] %v329
        %v331 = vld [vmem:[#allocation2 + $0xa4] sm:$0x1]
        %v332 = vsel %vm291, 0, %v331
        %333 = vst [vmem:[#allocation2 + $0xa4] sm:$0x1] %v332
        %v334 = vld [vmem:[#allocation2 + $0xb0] sm:$0x1]
        %v335 = vsel %vm291, 0, %v334
        %336 = vst [vmem:[#allocation2 + $0xb0] sm:$0x1] %v335
        %v337 = vld [vmem:[#allocation2 + $0xbc] sm:$0x1]
        %v338 = vsel %vm291, 0, %v337
        %339 = vst [vmem:[#allocation2 + $0xbc] sm:$0x1] %v338
        %v340 = vld [vmem:[#allocation2 + $0xc8] sm:$0x1]
        %v341 = vsel %vm291, 0, %v340
        %342 = vst [vmem:[#allocation2 + $0xc8] sm:$0x1] %v341
        %v343 = vld [vmem:[#allocation2 + $0xd4] sm:$0x1]
        %v344 = vsel %vm291, 0, %v343
        %345 = vst [vmem:[#allocation2 + $0xd4] sm:$0x1] %v344
        %v346 = vld [vmem:[%s222] sm:$0xff]
        %v348 = vcombine.high %v346, %v346
        %350 = vxpose.xlu0.b32.start [1/16] %v346, 128
        %351 = vxpose.xlu0.b32.cont [2/16] 0.0, 128
        %352 = vxpose.xlu0.b32.cont [3/16] 0.0, 128
        %353 = vxpose.xlu0.b32.cont [4/16] 0.0, 128
        %354 = vxpose.xlu0.b32.cont [5/16] 0.0, 128
        %355 = vxpose.xlu0.b32.cont [6/16] 0.0, 128
        %356 = vxpose.xlu0.b32.cont [7/16] 0.0, 128
        %357 = vxpose.xlu0.b32.cont [8/16] 0.0, 128
        %358 = vxpose.xlu0.b32.cont [9/16] 0.0, 128
        %359 = vxpose.xlu0.b32.cont [10/16] 0.0, 128
        %360 = vxpose.xlu0.b32.cont [11/16] 0.0, 128
        %361 = vxpose.xlu0.b32.cont [12/16] 0.0, 128
        %362 = vxpose.xlu0.b32.cont [13/16] 0.0, 128
        %363 = vxpose.xlu0.b32.cont [14/16] 0.0, 128
        %364 = vxpose.xlu0.b32.cont [15/16] 0.0, 128
        %365 = vxpose.xlu0.b32.end [16/16] 0.0, 128
        %v366 = vpop.trf.xlu0
        %v367 = vpop.trf.xlu0
        %v368 = vpop.trf.xlu0
        %v369 = vpop.trf.xlu0
        %v370 = vpop.trf.xlu0
        %v371 = vpop.trf.xlu0
        %v372 = vpop.trf.xlu0
        %v373 = vpop.trf.xlu0
        %v374 = vpop.trf.xlu0
        %v375 = vpop.trf.xlu0
        %v376 = vpop.trf.xlu0
        %v377 = vpop.trf.xlu0
        %v378 = vpop.trf.xlu0
        %v379 = vpop.trf.xlu0
        %v380 = vpop.trf.xlu0
        %v381 = vpop.trf.xlu0
        %382 = vxpose.xlu0.b32.start [1/16] %v348, 128
        %383 = vxpose.xlu0.b32.cont [2/16] 0.0, 128
        %384 = vxpose.xlu0.b32.cont [3/16] 0.0, 128
        %385 = vxpose.xlu0.b32.cont [4/16] 0.0, 128
        %386 = vxpose.xlu0.b32.cont [5/16] 0.0, 128
        %387 = vxpose.xlu0.b32.cont [6/16] 0.0, 128
        %388 = vxpose.xlu0.b32.cont [7/16] 0.0, 128
        %389 = vxpose.xlu0.b32.cont [8/16] 0.0, 128
        %390 = vxpose.xlu0.b32.cont [9/16] 0.0, 128
        %391 = vxpose.xlu0.b32.cont [10/16] 0.0, 128
        %392 = vxpose.xlu0.b32.cont [11/16] 0.0, 128
        %393 = vxpose.xlu0.b32.cont [12/16] 0.0, 128
        %394 = vxpose.xlu0.b32.cont [13/16] 0.0, 128
        %395 = vxpose.xlu0.b32.cont [14/16] 0.0, 128
        %396 = vxpose.xlu0.b32.cont [15/16] 0.0, 128
        %397 = vxpose.xlu0.b32.end [16/16] 0.0, 128
        %v398 = vpop.trf.xlu0
        %v399 = vpop.trf.xlu0
        %v400 = vpop.trf.xlu0
        %v401 = vpop.trf.xlu0
        %v402 = vpop.trf.xlu0
        %v403 = vpop.trf.xlu0
        %v404 = vpop.trf.xlu0
        %v405 = vpop.trf.xlu0
        %v406 = vpop.trf.xlu0
        %v407 = vpop.trf.xlu0
        %v408 = vpop.trf.xlu0
        %v409 = vpop.trf.xlu0
        %v410 = vpop.trf.xlu0
        %v411 = vpop.trf.xlu0
        %v412 = vpop.trf.xlu0
        %v413 = vpop.trf.xlu0
        %v414 = vpack.c.bf16 %v367, %v366
        %v415 = vpack.c.bf16 %v369, %v368
        %v416 = vpack.c.bf16 %v371, %v370
        %v417 = vpack.c.bf16 %v373, %v372
        %v418 = vpack.c.bf16 %v375, %v374
        %v419 = vpack.c.bf16 %v377, %v376
        %v420 = vpack.c.bf16 %v379, %v378
        %v421 = vpack.c.bf16 %v381, %v380
        %v422 = vpack.c.bf16 %v399, %v398
        %v423 = vpack.c.bf16 %v401, %v400
        %v424 = vpack.c.bf16 %v403, %v402
        %v425 = vpack.c.bf16 %v405, %v404
        %v426 = vpack.c.bf16 %v407, %v406
        %v427 = vpack.c.bf16 %v409, %v408
        %v428 = vpack.c.bf16 %v411, %v410
        %v429 = vpack.c.bf16 %v413, %v412
        %v446 = vunpack.c.l.b16 %v414
        %v447 = vunpack.c.h.b16 %v414
        %v448 = vunpack.c.l.b16 %v415
        %v449 = vunpack.c.h.b16 %v415
        %v450 = vunpack.c.l.b16 %v416
        %v451 = vunpack.c.h.b16 %v416
        %v452 = vunpack.c.l.b16 %v417
        %v453 = vunpack.c.h.b16 %v417
        %v454 = vunpack.c.l.b16 %v418
        %v455 = vunpack.c.h.b16 %v418
        %v456 = vunpack.c.l.b16 %v419
        %v457 = vunpack.c.h.b16 %v419
        %v458 = vunpack.c.l.b16 %v420
        %v459 = vunpack.c.h.b16 %v420
        %v460 = vunpack.c.l.b16 %v421
        %v461 = vunpack.c.h.b16 %v421
        %v462 = vunpack.c.l.b16 %v422
        %v463 = vunpack.c.h.b16 %v422
        %v464 = vunpack.c.l.b16 %v423
        %v465 = vunpack.c.h.b16 %v423
        %v466 = vunpack.c.l.b16 %v424
        %v467 = vunpack.c.h.b16 %v424
        %v468 = vunpack.c.l.b16 %v425
        %v469 = vunpack.c.h.b16 %v425
        %v470 = vunpack.c.l.b16 %v426
        %v471 = vunpack.c.h.b16 %v426
        %v472 = vunpack.c.l.b16 %v427
        %v473 = vunpack.c.h.b16 %v427
        %v474 = vunpack.c.l.b16 %v428
        %v475 = vunpack.c.h.b16 %v428
        %v476 = vunpack.c.l.b16 %v429
        %v477 = vunpack.c.h.b16 %v429
        %v478 = vpack.c.b16 %v446, %v446
        %v479 = vpack.c.b16 %v447, %v447
        %v480 = vpack.c.b16 %v448, %v448
        %v481 = vpack.c.b16 %v449, %v449
        %v482 = vpack.c.b16 %v450, %v450
        %v483 = vpack.c.b16 %v451, %v451
        %v484 = vpack.c.b16 %v452, %v452
        %v485 = vpack.c.b16 %v453, %v453
        %v486 = vpack.c.b16 %v454, %v454
        %v487 = vpack.c.b16 %v455, %v455
        %v488 = vpack.c.b16 %v456, %v456
        %v489 = vpack.c.b16 %v457, %v457
        %v490 = vpack.c.b16 %v458, %v458
        %v491 = vpack.c.b16 %v459, %v459
        %v492 = vpack.c.b16 %v460, %v460
        %v493 = vpack.c.b16 %v461, %v461
        %v494 = vpack.c.b16 %v462, %v462
        %v495 = vpack.c.b16 %v463, %v463
        %v496 = vpack.c.b16 %v464, %v464
        %v497 = vpack.c.b16 %v465, %v465
        %v498 = vpack.c.b16 %v466, %v466
        %v499 = vpack.c.b16 %v467, %v467
        %v500 = vpack.c.b16 %v468, %v468
        %v501 = vpack.c.b16 %v469, %v469
        %v502 = vpack.c.b16 %v470, %v470
        %v503 = vpack.c.b16 %v471, %v471
        %v504 = vpack.c.b16 %v472, %v472
        %v505 = vpack.c.b16 %v473, %v473
        %v506 = vpack.c.b16 %v474, %v474
        %v507 = vpack.c.b16 %v475, %v475
        %v508 = vpack.c.b16 %v476, %v476
        %v509 = vpack.c.b16 %v477, %v477
        %vm510 = vsmask.f32 4368
        %vm511 = vmor %vm234, %vm510
        %v513 = vshrl.u32 %v478, 16
        %v515 = vrot.slane %v513, 7
        %v516 = vshll.u32 %v478, 16
        %v518 = vor.u32 %v515, %v516
        %v519 = vrot.slane %v515, 4
        %v521 = vshrl.u32 %v479, 16
        %v523 = vrot.slane %v521, 7
        %v524 = vshll.u32 %v479, 16
        %v526 = vor.u32 %v523, %v524
        %v527 = vsel %vm511, %v519, %v526
        %v528 = vrot.slane %v523, 4
        %v530 = vshrl.u32 %v480, 16
        %v532 = vrot.slane %v530, 7
        %v533 = vshll.u32 %v480, 16
        %v535 = vor.u32 %v532, %v533
        %v536 = vrot.slane %v532, 4
        %v538 = vshrl.u32 %v481, 16
        %v540 = vrot.slane %v538, 7
        %v541 = vshll.u32 %v481, 16
        %v543 = vor.u32 %v540, %v541
        %v544 = vsel %vm511, %v536, %v543
        %v545 = vrot.slane %v540, 4
        %v547 = vshrl.u32 %v482, 16
        %v549 = vrot.slane %v547, 7
        %v550 = vshll.u32 %v482, 16
        %v552 = vor.u32 %v549, %v550
        %v553 = vrot.slane %v549, 4
        %v555 = vshrl.u32 %v483, 16
        %v557 = vrot.slane %v555, 7
        %v558 = vshll.u32 %v483, 16
        %v560 = vor.u32 %v557, %v558
        %v561 = vsel %vm511, %v553, %v560
        %v562 = vrot.slane %v557, 4
        %v564 = vshrl.u32 %v484, 16
        %v566 = vrot.slane %v564, 7
        %v567 = vshll.u32 %v484, 16
        %v569 = vor.u32 %v566, %v567
        %v570 = vrot.slane %v566, 4
        %v572 = vshrl.u32 %v485, 16
        %v574 = vrot.slane %v572, 7
        %v575 = vshll.u32 %v485, 16
        %v577 = vor.u32 %v574, %v575
        %v578 = vsel %vm511, %v570, %v577
        %v579 = vrot.slane %v574, 4
        %v581 = vshrl.u32 %v486, 16
        %v583 = vrot.slane %v581, 7
        %v584 = vshll.u32 %v486, 16
        %v586 = vor.u32 %v583, %v584
        %v587 = vrot.slane %v583, 4
        %v589 = vshrl.u32 %v487, 16
        %v591 = vrot.slane %v589, 7
        %v592 = vshll.u32 %v487, 16
        %v594 = vor.u32 %v591, %v592
        %v595 = vsel %vm511, %v587, %v594
        %v596 = vrot.slane %v591, 4
        %v598 = vshrl.u32 %v488, 16
        %v600 = vrot.slane %v598, 7
        %v601 = vshll.u32 %v488, 16
        %v603 = vor.u32 %v600, %v601
        %v604 = vrot.slane %v600, 4
        %v606 = vshrl.u32 %v489, 16
        %v608 = vrot.slane %v606, 7
        %v609 = vshll.u32 %v489, 16
        %v611 = vor.u32 %v608, %v609
        %v612 = vsel %vm511, %v604, %v611
        %v613 = vrot.slane %v608, 4
        %v615 = vshrl.u32 %v490, 16
        %v617 = vrot.slane %v615, 7
        %v618 = vshll.u32 %v490, 16
        %v620 = vor.u32 %v617, %v618
        %v621 = vrot.slane %v617, 4
        %v623 = vshrl.u32 %v491, 16
        %v625 = vrot.slane %v623, 7
        %v626 = vshll.u32 %v491, 16
        %v628 = vor.u32 %v625, %v626
        %v629 = vsel %vm511, %v621, %v628
        %v630 = vrot.slane %v625, 4
        %v632 = vshrl.u32 %v492, 16
        %v634 = vrot.slane %v632, 7
        %v635 = vshll.u32 %v492, 16
        %v637 = vor.u32 %v634, %v635
        %v638 = vrot.slane %v634, 4
        %v640 = vshrl.u32 %v493, 16
        %v642 = vrot.slane %v640, 7
        %v643 = vshll.u32 %v493, 16
        %v645 = vor.u32 %v642, %v643
        %v646 = vsel %vm511, %v638, %v645
        %v647 = vrot.slane %v642, 4
        %v649 = vshrl.u32 %v494, 16
        %v651 = vrot.slane %v649, 7
        %v652 = vshll.u32 %v494, 16
        %v654 = vor.u32 %v651, %v652
        %v655 = vrot.slane %v651, 4
        %v657 = vshrl.u32 %v495, 16
        %v659 = vrot.slane %v657, 7
        %v660 = vshll.u32 %v495, 16
        %v662 = vor.u32 %v659, %v660
        %v663 = vsel %vm511, %v655, %v662
        %v664 = vrot.slane %v659, 4
        %v666 = vshrl.u32 %v496, 16
        %v668 = vrot.slane %v666, 7
        %v669 = vshll.u32 %v496, 16
        %v671 = vor.u32 %v668, %v669
        %v672 = vrot.slane %v668, 4
        %v674 = vshrl.u32 %v497, 16
        %v676 = vrot.slane %v674, 7
        %v677 = vshll.u32 %v497, 16
        %v679 = vor.u32 %v676, %v677
        %v680 = vsel %vm511, %v672, %v679
        %v681 = vrot.slane %v676, 4
        %v683 = vshrl.u32 %v498, 16
        %v685 = vrot.slane %v683, 7
        %v686 = vshll.u32 %v498, 16
        %v688 = vor.u32 %v685, %v686
        %v689 = vrot.slane %v685, 4
        %v691 = vshrl.u32 %v499, 16
        %v693 = vrot.slane %v691, 7
        %v694 = vshll.u32 %v499, 16
        %v696 = vor.u32 %v693, %v694
        %v697 = vsel %vm511, %v689, %v696
        %v698 = vrot.slane %v693, 4
        %v700 = vshrl.u32 %v500, 16
        %v702 = vrot.slane %v700, 7
        %v703 = vshll.u32 %v500, 16
        %v705 = vor.u32 %v702, %v703
        %v706 = vrot.slane %v702, 4
        %v708 = vshrl.u32 %v501, 16
        %v710 = vrot.slane %v708, 7
        %v711 = vshll.u32 %v501, 16
        %v713 = vor.u32 %v710, %v711
        %v714 = vsel %vm511, %v706, %v713
        %v715 = vrot.slane %v710, 4
        %v717 = vshrl.u32 %v502, 16
        %v719 = vrot.slane %v717, 7
        %v720 = vshll.u32 %v502, 16
        %v722 = vor.u32 %v719, %v720
        %v723 = vrot.slane %v719, 4
        %v725 = vshrl.u32 %v503, 16
        %v727 = vrot.slane %v725, 7
        %v728 = vshll.u32 %v503, 16
        %v730 = vor.u32 %v727, %v728
        %v731 = vsel %vm511, %v723, %v730
        %v732 = vrot.slane %v727, 4
        %v734 = vshrl.u32 %v504, 16
        %v736 = vrot.slane %v734, 7
        %v737 = vshll.u32 %v504, 16
        %v739 = vor.u32 %v736, %v737
        %v740 = vrot.slane %v736, 4
        %v742 = vshrl.u32 %v505, 16
        %v744 = vrot.slane %v742, 7
        %v745 = vshll.u32 %v505, 16
        %v747 = vor.u32 %v744, %v745
        %v748 = vsel %vm511, %v740, %v747
        %v749 = vrot.slane %v744, 4
        %v751 = vshrl.u32 %v506, 16
        %v753 = vrot.slane %v751, 7
        %v754 = vshll.u32 %v506, 16
        %v756 = vor.u32 %v753, %v754
        %v757 = vrot.slane %v753, 4
        %v759 = vshrl.u32 %v507, 16
        %v761 = vrot.slane %v759, 7
        %v762 = vshll.u32 %v507, 16
        %v764 = vor.u32 %v761, %v762
        %v765 = vsel %vm511, %v757, %v764
        %v766 = vrot.slane %v761, 4
        %v768 = vshrl.u32 %v508, 16
        %v770 = vrot.slane %v768, 7
        %v771 = vshll.u32 %v508, 16
        %v773 = vor.u32 %v770, %v771
        %v774 = vrot.slane %v770, 4
        %v776 = vshrl.u32 %v509, 16
        %v778 = vrot.slane %v776, 7
        %v779 = vshll.u32 %v509, 16
        %v781 = vor.u32 %v778, %v779
        %v782 = vsel %vm511, %v774, %v781
        %v783 = vrot.slane %v778, 4
        %s832 = scalar_lea.vmem [#allocation2], 12
        %vm833 = vcmask 27648
        %vm834 = vmand %vm833, %vm290
        %v835 = vld [vmem:[%s832] sm:$0xf]
        %v836 = vsel %vm834, %v518, %v835
        %837 = vst [vmem:[%s832] sm:$0xf] %v836
        %838 = vst.msk [vmem:[%s832 + $0x4] sm:$0xf] %vm224, %v527
        %v839 = vld [vmem:[%s832 + $0x8] sm:$0x1]
        %v840 = vsel %vm235, %v528, %v839
        %841 = vst [vmem:[%s832 + $0x8] sm:$0x1] %v840
        %v842 = vld [vmem:[%s832 + $0xc] sm:$0xf]
        %v843 = vsel %vm834, %v535, %v842
        %844 = vst [vmem:[%s832 + $0xc] sm:$0xf] %v843
        %845 = vst.msk [vmem:[%s832 + $0x10] sm:$0xf] %vm224, %v544
        %v846 = vld [vmem:[%s832 + $0x14] sm:$0x1]
        %v847 = vsel %vm235, %v545, %v846
        %848 = vst [vmem:[%s832 + $0x14] sm:$0x1] %v847
        %v849 = vld [vmem:[%s832 + $0x18] sm:$0xf]
        %v850 = vsel %vm834, %v552, %v849
        %851 = vst [vmem:[%s832 + $0x18] sm:$0xf] %v850
        %852 = vst.msk [vmem:[%s832 + $0x1c] sm:$0xf] %vm224, %v561
        %v853 = vld [vmem:[%s832 + $0x20] sm:$0x1]
        %v854 = vsel %vm235, %v562, %v853
        %855 = vst [vmem:[%s832 + $0x20] sm:$0x1] %v854
        %v856 = vld [vmem:[%s832 + $0x24] sm:$0xf]
        %v857 = vsel %vm834, %v569, %v856
        %858 = vst [vmem:[%s832 + $0x24] sm:$0xf] %v857
        %859 = vst.msk [vmem:[%s832 + $0x28] sm:$0xf] %vm224, %v578
        %v860 = vld [vmem:[%s832 + $0x2c] sm:$0x1]
        %v861 = vsel %vm235, %v579, %v860
        %862 = vst [vmem:[%s832 + $0x2c] sm:$0x1] %v861
        %v863 = vld [vmem:[%s832 + $0x30] sm:$0xf]
        %v864 = vsel %vm834, %v586, %v863
        %865 = vst [vmem:[%s832 + $0x30] sm:$0xf] %v864
        %866 = vst.msk [vmem:[%s832 + $0x34] sm:$0xf] %vm224, %v595
        %v867 = vld [vmem:[%s832 + $0x38] sm:$0x1]
        %v868 = vsel %vm235, %v596, %v867
        %869 = vst [vmem:[%s832 + $0x38] sm:$0x1] %v868
        %v870 = vld [vmem:[%s832 + $0x3c] sm:$0xf]
        %v871 = vsel %vm834, %v603, %v870
        %872 = vst [vmem:[%s832 + $0x3c] sm:$0xf] %v871
        %873 = vst.msk [vmem:[%s832 + $0x40] sm:$0xf] %vm224, %v612
        %v874 = vld [vmem:[%s832 + $0x44] sm:$0x1]
        %v875 = vsel %vm235, %v613, %v874
        %876 = vst [vmem:[%s832 + $0x44] sm:$0x1] %v875
        %v877 = vld [vmem:[%s832 + $0x48] sm:$0xf]
        %v878 = vsel %vm834, %v620, %v877
        %879 = vst [vmem:[%s832 + $0x48] sm:$0xf] %v878
        %880 = vst.msk [vmem:[%s832 + $0x4c] sm:$0xf] %vm224, %v629
        %v881 = vld [vmem:[%s832 + $0x50] sm:$0x1]
        %v882 = vsel %vm235, %v630, %v881
        %883 = vst [vmem:[%s832 + $0x50] sm:$0x1] %v882
        %v884 = vld [vmem:[%s832 + $0x54] sm:$0xf]
        %v885 = vsel %vm834, %v637, %v884
        %886 = vst [vmem:[%s832 + $0x54] sm:$0xf] %v885
        %887 = vst.msk [vmem:[%s832 + $0x58] sm:$0xf] %vm224, %v646
        %v888 = vld [vmem:[%s832 + $0x5c] sm:$0x1]
        %v889 = vsel %vm235, %v647, %v888
        %890 = vst [vmem:[%s832 + $0x5c] sm:$0x1] %v889
        %v891 = vld [vmem:[%s832 + $0x60] sm:$0xf]
        %v892 = vsel %vm834, %v654, %v891
        %893 = vst [vmem:[%s832 + $0x60] sm:$0xf] %v892
        %894 = vst.msk [vmem:[%s832 + $0x64] sm:$0xf] %vm224, %v663
        %v895 = vld [vmem:[%s832 + $0x68] sm:$0x1]
        %v896 = vsel %vm235, %v664, %v895
        %897 = vst [vmem:[%s832 + $0x68] sm:$0x1] %v896
        %v898 = vld [vmem:[%s832 + $0x6c] sm:$0xf]
        %v899 = vsel %vm834, %v671, %v898
        %900 = vst [vmem:[%s832 + $0x6c] sm:$0xf] %v899
        %901 = vst.msk [vmem:[%s832 + $0x70] sm:$0xf] %vm224, %v680
        %v902 = vld [vmem:[%s832 + $0x74] sm:$0x1]
        %v903 = vsel %vm235, %v681, %v902
        %904 = vst [vmem:[%s832 + $0x74] sm:$0x1] %v903
        %v905 = vld [vmem:[%s832 + $0x78] sm:$0xf]
        %v906 = vsel %vm834, %v688, %v905
        %907 = vst [vmem:[%s832 + $0x78] sm:$0xf] %v906
        %908 = vst.msk [vmem:[%s832 + $0x7c] sm:$0xf] %vm224, %v697
        %v909 = vld [vmem:[%s832 + $0x80] sm:$0x1]
        %v910 = vsel %vm235, %v698, %v909
        %911 = vst [vmem:[%s832 + $0x80] sm:$0x1] %v910
        %v912 = vld [vmem:[%s832 + $0x84] sm:$0xf]
        %v913 = vsel %vm834, %v705, %v912
        %914 = vst [vmem:[%s832 + $0x84] sm:$0xf] %v913
        %915 = vst.msk [vmem:[%s832 + $0x88] sm:$0xf] %vm224, %v714
        %v916 = vld [vmem:[%s832 + $0x8c] sm:$0x1]
        %v917 = vsel %vm235, %v715, %v916
        %918 = vst [vmem:[%s832 + $0x8c] sm:$0x1] %v917
        %v919 = vld [vmem:[%s832 + $0x90] sm:$0xf]
        %v920 = vsel %vm834, %v722, %v919
        %921 = vst [vmem:[%s832 + $0x90] sm:$0xf] %v920
        %922 = vst.msk [vmem:[%s832 + $0x94] sm:$0xf] %vm224, %v731
        %v923 = vld [vmem:[%s832 + $0x98] sm:$0x1]
        %v924 = vsel %vm235, %v732, %v923
        %925 = vst [vmem:[%s832 + $0x98] sm:$0x1] %v924
        %v926 = vld [vmem:[%s832 + $0x9c] sm:$0xf]
        %v927 = vsel %vm834, %v739, %v926
        %928 = vst [vmem:[%s832 + $0x9c] sm:$0xf] %v927
        %929 = vst.msk [vmem:[%s832 + $0xa0] sm:$0xf] %vm224, %v748
        %v930 = vld [vmem:[%s832 + $0xa4] sm:$0x1]
        %v931 = vsel %vm235, %v749, %v930
        %932 = vst [vmem:[%s832 + $0xa4] sm:$0x1] %v931
        %v933 = vld [vmem:[%s832 + $0xa8] sm:$0xf]
        %v934 = vsel %vm834, %v756, %v933
        %935 = vst [vmem:[%s832 + $0xa8] sm:$0xf] %v934
        %936 = vst.msk [vmem:[%s832 + $0xac] sm:$0xf] %vm224, %v765
        %v937 = vld [vmem:[%s832 + $0xb0] sm:$0x1]
        %v938 = vsel %vm235, %v766, %v937
        %939 = vst [vmem:[%s832 + $0xb0] sm:$0x1] %v938
        %v940 = vld [vmem:[%s832 + $0xb4] sm:$0xf]
        %v941 = vsel %vm834, %v773, %v940
        %942 = vst [vmem:[%s832 + $0xb4] sm:$0xf] %v941
        %943 = vst.msk [vmem:[%s832 + $0xb8] sm:$0xf] %vm224, %v782
        %v944 = vld [vmem:[%s832 + $0xbc] sm:$0x1]
        %v945 = vsel %vm235, %v783, %v944
        %946 = vst [vmem:[%s832 + $0xbc] sm:$0x1] %v945
        %v947 = vld [vmem:[#allocation2] sm:$0xf]
        %v948 = vld [vmem:[#allocation2 + $0x4] sm:$0xf]
        %v949 = vld [vmem:[#allocation2 + $0x8] sm:$0x1]
        %v950 = vld [vmem:[#allocation2 + $0xc] sm:$0xf]
        %v951 = vld [vmem:[#allocation2 + $0x10] sm:$0xf]
        %v952 = vld [vmem:[#allocation2 + $0x14] sm:$0x1]
        %v953 = vld [vmem:[#allocation2 + $0x18] sm:$0xf]
        %v954 = vld [vmem:[#allocation2 + $0x1c] sm:$0xf]
        %v955 = vld [vmem:[#allocation2 + $0x20] sm:$0x1]
        %v956 = vld [vmem:[#allocation2 + $0x24] sm:$0xf]
        %v957 = vld [vmem:[#allocation2 + $0x28] sm:$0xf]
        %v958 = vld [vmem:[#allocation2 + $0x2c] sm:$0x1]
        %v959 = vld [vmem:[#allocation2 + $0x30] sm:$0xf]
        %v960 = vld [vmem:[#allocation2 + $0x34] sm:$0xf]
        %v961 = vld [vmem:[#allocation2 + $0x38] sm:$0x1]
        %v962 = vld [vmem:[#allocation2 + $0x3c] sm:$0xf]
        %v963 = vld [vmem:[#allocation2 + $0x40] sm:$0xf]
        %v964 = vld [vmem:[#allocation2 + $0x44] sm:$0x1]
        %v965 = vld [vmem:[#allocation2 + $0x48] sm:$0xf]
        %v966 = vld [vmem:[#allocation2 + $0x4c] sm:$0xf]
        %v967 = vld [vmem:[#allocation2 + $0x50] sm:$0x1]
        %v968 = vld [vmem:[#allocation2 + $0x54] sm:$0xf]
        %v969 = vld [vmem:[#allocation2 + $0x58] sm:$0xf]
        %v970 = vld [vmem:[#allocation2 + $0x5c] sm:$0x1]
        %v971 = vld [vmem:[#allocation2 + $0x60] sm:$0xf]
        %v972 = vld [vmem:[#allocation2 + $0x64] sm:$0xf]
        %v973 = vld [vmem:[#allocation2 + $0x68] sm:$0x1]
        %v974 = vld [vmem:[#allocation2 + $0x6c] sm:$0xf]
        %v975 = vld [vmem:[#allocation2 + $0x70] sm:$0xf]
        %v976 = vld [vmem:[#allocation2 + $0x74] sm:$0x1]
        %v977 = vld [vmem:[#allocation2 + $0x78] sm:$0xf]
        %v978 = vld [vmem:[#allocation2 + $0x7c] sm:$0xf]
        %v979 = vld [vmem:[#allocation2 + $0x80] sm:$0x1]
        %v980 = vld [vmem:[#allocation2 + $0x84] sm:$0xf]
        %v981 = vld [vmem:[#allocation2 + $0x88] sm:$0xf]
        %v982 = vld [vmem:[#allocation2 + $0x8c] sm:$0x1]
        %v983 = vld [vmem:[#allocation2 + $0x90] sm:$0xf]
        %v984 = vld [vmem:[#allocation2 + $0x94] sm:$0xf]
        %v985 = vld [vmem:[#allocation2 + $0x98] sm:$0x1]
        %v986 = vld [vmem:[#allocation2 + $0x9c] sm:$0xf]
        %v987 = vld [vmem:[#allocation2 + $0xa0] sm:$0xf]
        %v988 = vld [vmem:[#allocation2 + $0xa4] sm:$0x1]
        %v989 = vld [vmem:[#allocation2 + $0xa8] sm:$0xf]
        %v990 = vld [vmem:[#allocation2 + $0xac] sm:$0xf]
        %v991 = vld [vmem:[#allocation2 + $0xb0] sm:$0x1]
        %v992 = vld [vmem:[#allocation2 + $0xb4] sm:$0xf]
        %v993 = vld [vmem:[#allocation2 + $0xb8] sm:$0xf]
        %v994 = vld [vmem:[#allocation2 + $0xbc] sm:$0x1]
        %v995 = vld [vmem:[#allocation2 + $0xc0] sm:$0xf]
        %v996 = vld [vmem:[#allocation2 + $0xc4] sm:$0xf]
        %v997 = vld [vmem:[#allocation2 + $0xc8] sm:$0x1]
        %v998 = vld [vmem:[#allocation2 + $0xcc] sm:$0xf]
        %v999 = vld [vmem:[#allocation2 + $0xd0] sm:$0xf]
        %v1000 = vld [vmem:[#allocation2 + $0xd4] sm:$0x1]
        %v1033 = vunpack.c.l.b16 %v947
        %v1034 = vunpack.c.l.b16 %v948
        %v1035 = vunpack.c.l.b16 %v950
        %v1036 = vunpack.c.l.b16 %v951
        %v1037 = vunpack.c.l.b16 %v953
        %v1038 = vunpack.c.l.b16 %v954
        %v1039 = vunpack.c.l.b16 %v956
        %v1040 = vunpack.c.l.b16 %v957
        %v1041 = vunpack.c.l.b16 %v959
        %v1042 = vunpack.c.l.b16 %v960
        %v1043 = vunpack.c.l.b16 %v962
        %v1044 = vunpack.c.l.b16 %v963
        %v1045 = vunpack.c.l.b16 %v965
        %v1046 = vunpack.c.l.b16 %v966
        %v1047 = vunpack.c.l.b16 %v968
        %v1048 = vunpack.c.l.b16 %v969
        %v1049 = vunpack.c.l.b16 %v971
        %v1050 = vunpack.c.l.b16 %v972
        %v1051 = vunpack.c.l.b16 %v974
        %v1052 = vunpack.c.l.b16 %v975
        %v1053 = vunpack.c.l.b16 %v977
        %v1054 = vunpack.c.l.b16 %v978
        %v1055 = vunpack.c.l.b16 %v980
        %v1056 = vunpack.c.l.b16 %v981
        %v1057 = vunpack.c.l.b16 %v983
        %v1058 = vunpack.c.l.b16 %v984
        %v1059 = vunpack.c.l.b16 %v986
        %v1060 = vunpack.c.l.b16 %v987
        %v1061 = vunpack.c.l.b16 %v989
        %v1062 = vunpack.c.l.b16 %v990
        %v1063 = vunpack.c.l.b16 %v992
        %v1064 = vunpack.c.l.b16 %v993
        %v1065 = vpack.c.b16 %v1034, %v1033
        %v1066 = vpack.c.b16 %v1036, %v1035
        %v1067 = vpack.c.b16 %v1038, %v1037
        %v1068 = vpack.c.b16 %v1040, %v1039
        %v1069 = vpack.c.b16 %v1042, %v1041
        %v1070 = vpack.c.b16 %v1044, %v1043
        %v1071 = vpack.c.b16 %v1046, %v1045
        %v1072 = vpack.c.b16 %v1048, %v1047
        %v1073 = vpack.c.b16 %v1050, %v1049
        %v1074 = vpack.c.b16 %v1052, %v1051
        %v1075 = vpack.c.b16 %v1054, %v1053
        %v1076 = vpack.c.b16 %v1056, %v1055
        %v1077 = vpack.c.b16 %v1058, %v1057
        %v1078 = vpack.c.b16 %v1060, %v1059
        %v1079 = vpack.c.b16 %v1062, %v1061
        %v1080 = vpack.c.b16 %v1064, %v1063
        %v1097 = vunpack.c.l.b16 %v949
        %v1098 = vunpack.c.l.b16 %v952
        %v1099 = vunpack.c.l.b16 %v955
        %v1100 = vunpack.c.l.b16 %v958
        %v1101 = vunpack.c.l.b16 %v961
        %v1102 = vunpack.c.l.b16 %v964
        %v1103 = vunpack.c.l.b16 %v967
        %v1104 = vunpack.c.l.b16 %v970
        %v1105 = vunpack.c.l.b16 %v973
        %v1106 = vunpack.c.l.b16 %v976
        %v1107 = vunpack.c.l.b16 %v979
        %v1108 = vunpack.c.l.b16 %v982
        %v1109 = vunpack.c.l.b16 %v985
        %v1110 = vunpack.c.l.b16 %v988
        %v1111 = vunpack.c.l.b16 %v991
        %v1112 = vunpack.c.l.b16 %v994
        %v1113 = vpack.c.b16 %v1097, %v1097
        %v1114 = vpack.c.b16 %v1098, %v1098
        %v1115 = vpack.c.b16 %v1099, %v1099
        %v1116 = vpack.c.b16 %v1100, %v1100
        %v1117 = vpack.c.b16 %v1101, %v1101
        %v1118 = vpack.c.b16 %v1102, %v1102
        %v1119 = vpack.c.b16 %v1103, %v1103
        %v1120 = vpack.c.b16 %v1104, %v1104
        %v1121 = vpack.c.b16 %v1105, %v1105
        %v1122 = vpack.c.b16 %v1106, %v1106
        %v1123 = vpack.c.b16 %v1107, %v1107
        %v1124 = vpack.c.b16 %v1108, %v1108
        %v1125 = vpack.c.b16 %v1109, %v1109
        %v1126 = vpack.c.b16 %v1110, %v1110
        %v1127 = vpack.c.b16 %v1111, %v1111
        %v1128 = vpack.c.b16 %v1112, %v1112
        %vm1129 = vsmask.f32 7424
        %v1131 = vshrl.u32 %v1065, 16
        %v1133 = vshll.u32 %v1065, 16
        %v1135 = vrot.slane %v1133, 1
        %v1136 = vor.u32 %v1131, %v1135
        %v1138 = vshll.u32 %v1113, 16
        %v1140 = vrot.slane %v1138, 1
        %v1141 = vsel %vm1129, %v1136, %v1140
        %v1143 = vshrl.u32 %v1066, 16
        %v1145 = vshll.u32 %v1066, 16
        %v1147 = vrot.slane %v1145, 1
        %v1148 = vor.u32 %v1143, %v1147
        %v1150 = vshll.u32 %v1114, 16
        %v1152 = vrot.slane %v1150, 1
        %v1153 = vsel %vm1129, %v1148, %v1152
        %v1155 = vshrl.u32 %v1067, 16
        %v1157 = vshll.u32 %v1067, 16
        %v1159 = vrot.slane %v1157, 1
        %v1160 = vor.u32 %v1155, %v1159
        %v1162 = vshll.u32 %v1115, 16
        %v1164 = vrot.slane %v1162, 1
        %v1165 = vsel %vm1129, %v1160, %v1164
        %v1167 = vshrl.u32 %v1068, 16
        %v1169 = vshll.u32 %v1068, 16
        %v1171 = vrot.slane %v1169, 1
        %v1172 = vor.u32 %v1167, %v1171
        %v1174 = vshll.u32 %v1116, 16
        %v1176 = vrot.slane %v1174, 1
        %v1177 = vsel %vm1129, %v1172, %v1176
        %v1179 = vshrl.u32 %v1069, 16
        %v1181 = vshll.u32 %v1069, 16
        %v1183 = vrot.slane %v1181, 1
        %v1184 = vor.u32 %v1179, %v1183
        %v1186 = vshll.u32 %v1117, 16
        %v1188 = vrot.slane %v1186, 1
        %v1189 = vsel %vm1129, %v1184, %v1188
        %v1191 = vshrl.u32 %v1070, 16
        %v1193 = vshll.u32 %v1070, 16
        %v1195 = vrot.slane %v1193, 1
        %v1196 = vor.u32 %v1191, %v1195
        %v1198 = vshll.u32 %v1118, 16
        %v1200 = vrot.slane %v1198, 1
        %v1201 = vsel %vm1129, %v1196, %v1200
        %v1203 = vshrl.u32 %v1071, 16
        %v1205 = vshll.u32 %v1071, 16
        %v1207 = vrot.slane %v1205, 1
        %v1208 = vor.u32 %v1203, %v1207
        %v1210 = vshll.u32 %v1119, 16
        %v1212 = vrot.slane %v1210, 1
        %v1213 = vsel %vm1129, %v1208, %v1212
        %v1215 = vshrl.u32 %v1072, 16
        %v1217 = vshll.u32 %v1072, 16
        %v1219 = vrot.slane %v1217, 1
        %v1220 = vor.u32 %v1215, %v1219
        %v1222 = vshll.u32 %v1120, 16
        %v1224 = vrot.slane %v1222, 1
        %v1225 = vsel %vm1129, %v1220, %v1224
        %v1227 = vshrl.u32 %v1073, 16
        %v1229 = vshll.u32 %v1073, 16
        %v1231 = vrot.slane %v1229, 1
        %v1232 = vor.u32 %v1227, %v1231
        %v1234 = vshll.u32 %v1121, 16
        %v1236 = vrot.slane %v1234, 1
        %v1237 = vsel %vm1129, %v1232, %v1236
        %v1239 = vshrl.u32 %v1074, 16
        %v1241 = vshll.u32 %v1074, 16
        %v1243 = vrot.slane %v1241, 1
        %v1244 = vor.u32 %v1239, %v1243
        %v1246 = vshll.u32 %v1122, 16
        %v1248 = vrot.slane %v1246, 1
        %v1249 = vsel %vm1129, %v1244, %v1248
        %v1251 = vshrl.u32 %v1075, 16
        %v1253 = vshll.u32 %v1075, 16
        %v1255 = vrot.slane %v1253, 1
        %v1256 = vor.u32 %v1251, %v1255
        %v1258 = vshll.u32 %v1123, 16
        %v1260 = vrot.slane %v1258, 1
        %v1261 = vsel %vm1129, %v1256, %v1260
        %v1263 = vshrl.u32 %v1076, 16
        %v1265 = vshll.u32 %v1076, 16
        %v1267 = vrot.slane %v1265, 1
        %v1268 = vor.u32 %v1263, %v1267
        %v1270 = vshll.u32 %v1124, 16
        %v1272 = vrot.slane %v1270, 1
        %v1273 = vsel %vm1129, %v1268, %v1272
        %v1275 = vshrl.u32 %v1077, 16
        %v1277 = vshll.u32 %v1077, 16
        %v1279 = vrot.slane %v1277, 1
        %v1280 = vor.u32 %v1275, %v1279
        %v1282 = vshll.u32 %v1125, 16
        %v1284 = vrot.slane %v1282, 1
        %v1285 = vsel %vm1129, %v1280, %v1284
        %v1287 = vshrl.u32 %v1078, 16
        %v1289 = vshll.u32 %v1078, 16
        %v1291 = vrot.slane %v1289, 1
        %v1292 = vor.u32 %v1287, %v1291
        %v1294 = vshll.u32 %v1126, 16
        %v1296 = vrot.slane %v1294, 1
        %v1297 = vsel %vm1129, %v1292, %v1296
        %v1299 = vshrl.u32 %v1079, 16
        %v1301 = vshll.u32 %v1079, 16
        %v1303 = vrot.slane %v1301, 1
        %v1304 = vor.u32 %v1299, %v1303
        %v1306 = vshll.u32 %v1127, 16
        %v1308 = vrot.slane %v1306, 1
        %v1309 = vsel %vm1129, %v1304, %v1308
        %v1311 = vshrl.u32 %v1080, 16
        %v1313 = vshll.u32 %v1080, 16
        %v1315 = vrot.slane %v1313, 1
        %v1316 = vor.u32 %v1311, %v1315
        %v1318 = vshll.u32 %v1128, 16
        %v1320 = vrot.slane %v1318, 1
        %v1321 = vsel %vm1129, %v1316, %v1320
        %1322 = vrot.lane.b32.xlu0 %v1141, 4
        %v1323 = vpop.permute.xlu0 %1322
        %1324 = vrot.lane.b32.xlu0 %v1153, 4
        %v1325 = vpop.permute.xlu0 %1324
        %1326 = vrot.lane.b32.xlu0 %v1165, 4
        %v1327 = vpop.permute.xlu0 %1326
        %1328 = vrot.lane.b32.xlu0 %v1177, 4
        %v1329 = vpop.permute.xlu0 %1328
        %1330 = vrot.lane.b32.xlu0 %v1189, 4
        %v1331 = vpop.permute.xlu0 %1330
        %1332 = vrot.lane.b32.xlu0 %v1201, 4
        %v1333 = vpop.permute.xlu0 %1332
        %1334 = vrot.lane.b32.xlu0 %v1213, 4
        %v1335 = vpop.permute.xlu0 %1334
        %1336 = vrot.lane.b32.xlu0 %v1225, 4
        %v1337 = vpop.permute.xlu0 %1336
        %1338 = vrot.lane.b32.xlu0 %v1237, 4
        %v1339 = vpop.permute.xlu0 %1338
        %1340 = vrot.lane.b32.xlu0 %v1249, 4
        %v1341 = vpop.permute.xlu0 %1340
        %1342 = vrot.lane.b32.xlu0 %v1261, 4
        %v1343 = vpop.permute.xlu0 %1342
        %1344 = vrot.lane.b32.xlu0 %v1273, 4
        %v1345 = vpop.permute.xlu0 %1344
        %1346 = vrot.lane.b32.xlu0 %v1285, 4
        %v1347 = vpop.permute.xlu0 %1346
        %1348 = vrot.lane.b32.xlu0 %v1297, 4
        %v1349 = vpop.permute.xlu0 %1348
        %1350 = vrot.lane.b32.xlu0 %v1309, 4
        %v1351 = vpop.permute.xlu0 %1350
        %1352 = vrot.lane.b32.xlu0 %v1321, 4
        %v1353 = vpop.permute.xlu0 %1352
        %vm1354 = vcmask 1046528
        %v1355 = vrot.slane %v1065, 1
        %v1356 = vrot.slane %v1113, 1
        %v1357 = vsel %vm1354, %v1355, %v1356
        %v1358 = vrot.slane %v1066, 1
        %v1359 = vrot.slane %v1114, 1
        %v1360 = vsel %vm1354, %v1358, %v1359
        %v1361 = vrot.slane %v1067, 1
        %v1362 = vrot.slane %v1115, 1
        %v1363 = vsel %vm1354, %v1361, %v1362
        %v1364 = vrot.slane %v1068, 1
        %v1365 = vrot.slane %v1116, 1
        %v1366 = vsel %vm1354, %v1364, %v1365
        %v1367 = vrot.slane %v1069, 1
        %v1368 = vrot.slane %v1117, 1
        %v1369 = vsel %vm1354, %v1367, %v1368
        %v1370 = vrot.slane %v1070, 1
        %v1371 = vrot.slane %v1118, 1
        %v1372 = vsel %vm1354, %v1370, %v1371
        %v1373 = vrot.slane %v1071, 1
        %v1374 = vrot.slane %v1119, 1
        %v1375 = vsel %vm1354, %v1373, %v1374
        %v1376 = vrot.slane %v1072, 1
        %v1377 = vrot.slane %v1120, 1
        %v1378 = vsel %vm1354, %v1376, %v1377
        %v1379 = vrot.slane %v1073, 1
        %v1380 = vrot.slane %v1121, 1
        %v1381 = vsel %vm1354, %v1379, %v1380
        %v1382 = vrot.slane %v1074, 1
        %v1383 = vrot.slane %v1122, 1
        %v1384 = vsel %vm1354, %v1382, %v1383
        %v1385 = vrot.slane %v1075, 1
        %v1386 = vrot.slane %v1123, 1
        %v1387 = vsel %vm1354, %v1385, %v1386
        %v1388 = vrot.slane %v1076, 1
        %v1389 = vrot.slane %v1124, 1
        %v1390 = vsel %vm1354, %v1388, %v1389
        %v1391 = vrot.slane %v1077, 1
        %v1392 = vrot.slane %v1125, 1
        %v1393 = vsel %vm1354, %v1391, %v1392
        %v1394 = vrot.slane %v1078, 1
        %v1395 = vrot.slane %v1126, 1
        %v1396 = vsel %vm1354, %v1394, %v1395
        %v1397 = vrot.slane %v1079, 1
        %v1398 = vrot.slane %v1127, 1
        %v1399 = vsel %vm1354, %v1397, %v1398
        %v1400 = vrot.slane %v1080, 1
        %v1401 = vrot.slane %v1128, 1
        %v1402 = vsel %vm1354, %v1400, %v1401
        %1403 = vrot.lane.b32.xlu0 %v1357, 8
        %v1404 = vpop.permute.xlu0 %1403
        %1405 = vrot.lane.b32.xlu0 %v1360, 8
        %v1406 = vpop.permute.xlu0 %1405
        %1407 = vrot.lane.b32.xlu0 %v1363, 8
        %v1408 = vpop.permute.xlu0 %1407
        %1409 = vrot.lane.b32.xlu0 %v1366, 8
        %v1410 = vpop.permute.xlu0 %1409
        %1411 = vrot.lane.b32.xlu0 %v1369, 8
        %v1412 = vpop.permute.xlu0 %1411
        %1413 = vrot.lane.b32.xlu0 %v1372, 8
        %v1414 = vpop.permute.xlu0 %1413
        %1415 = vrot.lane.b32.xlu0 %v1375, 8
        %v1416 = vpop.permute.xlu0 %1415
        %1417 = vrot.lane.b32.xlu0 %v1378, 8
        %v1418 = vpop.permute.xlu0 %1417
        %1419 = vrot.lane.b32.xlu0 %v1381, 8
        %v1420 = vpop.permute.xlu0 %1419
        %1421 = vrot.lane.b32.xlu0 %v1384, 8
        %v1422 = vpop.permute.xlu0 %1421
        %1423 = vrot.lane.b32.xlu0 %v1387, 8
        %v1424 = vpop.permute.xlu0 %1423
        %1425 = vrot.lane.b32.xlu0 %v1390, 8
        %v1426 = vpop.permute.xlu0 %1425
        %1427 = vrot.lane.b32.xlu0 %v1393, 8
        %v1428 = vpop.permute.xlu0 %1427
        %1429 = vrot.lane.b32.xlu0 %v1396, 8
        %v1430 = vpop.permute.xlu0 %1429
        %1431 = vrot.lane.b32.xlu0 %v1399, 8
        %v1432 = vpop.permute.xlu0 %1431
        %1433 = vrot.lane.b32.xlu0 %v1402, 8
        %v1434 = vpop.permute.xlu0 %1433
        %v1437 = vunpack.c.l.b16 %v995
        %v1438 = vunpack.c.l.b16 %v996
        %v1439 = vpack.c.b16 %v1438, %v1437
        %1440 = vrot.lane.b32.xlu0 %v1066, 12
        %v1441 = vpop.permute.xlu0 %1440
        %1442 = vrot.lane.b32.xlu0 %v1067, 12
        %v1443 = vpop.permute.xlu0 %1442
        %1444 = vrot.lane.b32.xlu0 %v1068, 12
        %v1445 = vpop.permute.xlu0 %1444
        %1446 = vrot.lane.b32.xlu0 %v1069, 12
        %v1447 = vpop.permute.xlu0 %1446
        %1448 = vrot.lane.b32.xlu0 %v1070, 12
        %v1449 = vpop.permute.xlu0 %1448
        %1450 = vrot.lane.b32.xlu0 %v1071, 12
        %v1451 = vpop.permute.xlu0 %1450
        %1452 = vrot.lane.b32.xlu0 %v1072, 12
        %v1453 = vpop.permute.xlu0 %1452
        %1454 = vrot.lane.b32.xlu0 %v1073, 12
        %v1455 = vpop.permute.xlu0 %1454
        %1456 = vrot.lane.b32.xlu0 %v1074, 12
        %v1457 = vpop.permute.xlu0 %1456
        %1458 = vrot.lane.b32.xlu0 %v1075, 12
        %v1459 = vpop.permute.xlu0 %1458
        %1460 = vrot.lane.b32.xlu0 %v1076, 12
        %v1461 = vpop.permute.xlu0 %1460
        %1462 = vrot.lane.b32.xlu0 %v1077, 12
        %v1463 = vpop.permute.xlu0 %1462
        %1464 = vrot.lane.b32.xlu0 %v1078, 12
        %v1465 = vpop.permute.xlu0 %1464
        %1466 = vrot.lane.b32.xlu0 %v1079, 12
        %v1467 = vpop.permute.xlu0 %1466
        %1468 = vrot.lane.b32.xlu0 %v1080, 12
        %v1469 = vpop.permute.xlu0 %1468
        %1470 = vrot.lane.b32.xlu0 %v1439, 12
        %v1471 = vpop.permute.xlu0 %1470
        %v1473 = vunpack.c.l.b16 %v997
        %v1474 = vpack.c.b16 %v1473, %v1473
        %v1476 = vshrl.u32 %v1439, 16
        %v1478 = vshll.u32 %v1439, 16
        %v1480 = vrot.slane %v1478, 1
        %v1481 = vor.u32 %v1476, %v1480
        %v1483 = vshll.u32 %v1474, 16
        %v1485 = vrot.slane %v1483, 1
        %v1486 = vsel %vm1129, %v1481, %v1485
        %1487 = vrot.lane.b32.xlu0 %v1153, 16
        %v1488 = vpop.permute.xlu0 %1487
        %1489 = vrot.lane.b32.xlu0 %v1165, 16
        %v1490 = vpop.permute.xlu0 %1489
        %1491 = vrot.lane.b32.xlu0 %v1177, 16
        %v1492 = vpop.permute.xlu0 %1491
        %1493 = vrot.lane.b32.xlu0 %v1189, 16
        %v1494 = vpop.permute.xlu0 %1493
        %1495 = vrot.lane.b32.xlu0 %v1201, 16
        %v1496 = vpop.permute.xlu0 %1495
        %1497 = vrot.lane.b32.xlu0 %v1213, 16
        %v1498 = vpop.permute.xlu0 %1497
        %1499 = vrot.lane.b32.xlu0 %v1225, 16
        %v1500 = vpop.permute.xlu0 %1499
        %1501 = vrot.lane.b32.xlu0 %v1237, 16
        %v1502 = vpop.permute.xlu0 %1501
        %1503 = vrot.lane.b32.xlu0 %v1249, 16
        %v1504 = vpop.permute.xlu0 %1503
        %1505 = vrot.lane.b32.xlu0 %v1261, 16
        %v1506 = vpop.permute.xlu0 %1505
        %1507 = vrot.lane.b32.xlu0 %v1273, 16
        %v1508 = vpop.permute.xlu0 %1507
        %1509 = vrot.lane.b32.xlu0 %v1285, 16
        %v1510 = vpop.permute.xlu0 %1509
        %1511 = vrot.lane.b32.xlu0 %v1297, 16
        %v1512 = vpop.permute.xlu0 %1511
        %1513 = vrot.lane.b32.xlu0 %v1309, 16
        %v1514 = vpop.permute.xlu0 %1513
        %1515 = vrot.lane.b32.xlu0 %v1321, 16
        %v1516 = vpop.permute.xlu0 %1515
        %1517 = vrot.lane.b32.xlu0 %v1486, 16
        %v1518 = vpop.permute.xlu0 %1517
        %v1519 = vrot.slane %v1439, 1
        %v1520 = vrot.slane %v1474, 1
        %v1521 = vsel %vm1354, %v1519, %v1520
        %1522 = vrot.lane.b32.xlu0 %v1360, 20
        %v1523 = vpop.permute.xlu0 %1522
        %1524 = vrot.lane.b32.xlu0 %v1363, 20
        %v1525 = vpop.permute.xlu0 %1524
        %1526 = vrot.lane.b32.xlu0 %v1366, 20
        %v1527 = vpop.permute.xlu0 %1526
        %1528 = vrot.lane.b32.xlu0 %v1369, 20
        %v1529 = vpop.permute.xlu0 %1528
        %1530 = vrot.lane.b32.xlu0 %v1372, 20
        %v1531 = vpop.permute.xlu0 %1530
        %1532 = vrot.lane.b32.xlu0 %v1375, 20
        %v1533 = vpop.permute.xlu0 %1532
        %1534 = vrot.lane.b32.xlu0 %v1378, 20
        %v1535 = vpop.permute.xlu0 %1534
        %1536 = vrot.lane.b32.xlu0 %v1381, 20
        %v1537 = vpop.permute.xlu0 %1536
        %1538 = vrot.lane.b32.xlu0 %v1384, 20
        %v1539 = vpop.permute.xlu0 %1538
        %1540 = vrot.lane.b32.xlu0 %v1387, 20
        %v1541 = vpop.permute.xlu0 %1540
        %1542 = vrot.lane.b32.xlu0 %v1390, 20
        %v1543 = vpop.permute.xlu0 %1542
        %1544 = vrot.lane.b32.xlu0 %v1393, 20
        %v1545 = vpop.permute.xlu0 %1544
        %1546 = vrot.lane.b32.xlu0 %v1396, 20
        %v1547 = vpop.permute.xlu0 %1546
        %1548 = vrot.lane.b32.xlu0 %v1399, 20
        %v1549 = vpop.permute.xlu0 %1548
        %1550 = vrot.lane.b32.xlu0 %v1402, 20
        %v1551 = vpop.permute.xlu0 %1550
        %1552 = vrot.lane.b32.xlu0 %v1521, 20
        %v1553 = vpop.permute.xlu0 %1552
        %v1556 = vunpack.c.l.b16 %v998
        %v1557 = vunpack.c.l.b16 %v999
        %v1558 = vpack.c.b16 %v1557, %v1556
        %1559 = vrot.lane.b32.xlu0 %v1067, 24
        %v1560 = vpop.permute.xlu0 %1559
        %1561 = vrot.lane.b32.xlu0 %v1068, 24
        %v1562 = vpop.permute.xlu0 %1561
        %1563 = vrot.lane.b32.xlu0 %v1069, 24
        %v1564 = vpop.permute.xlu0 %1563
        %1565 = vrot.lane.b32.xlu0 %v1070, 24
        %v1566 = vpop.permute.xlu0 %1565
        %1567 = vrot.lane.b32.xlu0 %v1071, 24
        %v1568 = vpop.permute.xlu0 %1567
        %1569 = vrot.lane.b32.xlu0 %v1072, 24
        %v1570 = vpop.permute.xlu0 %1569
        %1571 = vrot.lane.b32.xlu0 %v1073, 24
        %v1572 = vpop.permute.xlu0 %1571
        %1573 = vrot.lane.b32.xlu0 %v1074, 24
        %v1574 = vpop.permute.xlu0 %1573
        %1575 = vrot.lane.b32.xlu0 %v1075, 24
        %v1576 = vpop.permute.xlu0 %1575
        %1577 = vrot.lane.b32.xlu0 %v1076, 24
        %v1578 = vpop.permute.xlu0 %1577
        %1579 = vrot.lane.b32.xlu0 %v1077, 24
        %v1580 = vpop.permute.xlu0 %1579
        %1581 = vrot.lane.b32.xlu0 %v1078, 24
        %v1582 = vpop.permute.xlu0 %1581
        %1583 = vrot.lane.b32.xlu0 %v1079, 24
        %v1584 = vpop.permute.xlu0 %1583
        %1585 = vrot.lane.b32.xlu0 %v1080, 24
        %v1586 = vpop.permute.xlu0 %1585
        %1587 = vrot.lane.b32.xlu0 %v1439, 24
        %v1588 = vpop.permute.xlu0 %1587
        %1589 = vrot.lane.b32.xlu0 %v1558, 24
        %v1590 = vpop.permute.xlu0 %1589
        %v1592 = vunpack.c.l.b16 %v1000
        %v1593 = vpack.c.b16 %v1592, %v1592
        %v1595 = vshrl.u32 %v1558, 16
        %v1597 = vshll.u32 %v1558, 16
        %v1599 = vrot.slane %v1597, 1
        %v1600 = vor.u32 %v1595, %v1599
        %v1602 = vshll.u32 %v1593, 16
        %v1604 = vrot.slane %v1602, 1
        %v1605 = vsel %vm1129, %v1600, %v1604
        %1606 = vrot.lane.b32.xlu0 %v1165, 28
        %v1607 = vpop.permute.xlu0 %1606
        %1608 = vrot.lane.b32.xlu0 %v1177, 28
        %v1609 = vpop.permute.xlu0 %1608
        %1610 = vrot.lane.b32.xlu0 %v1189, 28
        %v1611 = vpop.permute.xlu0 %1610
        %1612 = vrot.lane.b32.xlu0 %v1201, 28
        %v1613 = vpop.permute.xlu0 %1612
        %1614 = vrot.lane.b32.xlu0 %v1213, 28
        %v1615 = vpop.permute.xlu0 %1614
        %1616 = vrot.lane.b32.xlu0 %v1225, 28
        %v1617 = vpop.permute.xlu0 %1616
        %1618 = vrot.lane.b32.xlu0 %v1237, 28
        %v1619 = vpop.permute.xlu0 %1618
        %1620 = vrot.lane.b32.xlu0 %v1249, 28
        %v1621 = vpop.permute.xlu0 %1620
        %1622 = vrot.lane.b32.xlu0 %v1261, 28
        %v1623 = vpop.permute.xlu0 %1622
        %1624 = vrot.lane.b32.xlu0 %v1273, 28
        %v1625 = vpop.permute.xlu0 %1624
        %1626 = vrot.lane.b32.xlu0 %v1285, 28
        %v1627 = vpop.permute.xlu0 %1626
        %1628 = vrot.lane.b32.xlu0 %v1297, 28
        %v1629 = vpop.permute.xlu0 %1628
        %1630 = vrot.lane.b32.xlu0 %v1309, 28
        %v1631 = vpop.permute.xlu0 %1630
        %1632 = vrot.lane.b32.xlu0 %v1321, 28
        %v1633 = vpop.permute.xlu0 %1632
        %1634 = vrot.lane.b32.xlu0 %v1486, 28
        %v1635 = vpop.permute.xlu0 %1634
        %1636 = vrot.lane.b32.xlu0 %v1605, 28
        %v1637 = vpop.permute.xlu0 %1636
        %v1638 = vrot.slane %v1558, 1
        %v1639 = vrot.slane %v1593, 1
        %v1640 = vsel %vm1354, %v1638, %v1639
        %1641 = vrot.lane.b32.xlu0 %v1363, 32
        %v1642 = vpop.permute.xlu0 %1641
        %1643 = vrot.lane.b32.xlu0 %v1366, 32
        %v1644 = vpop.permute.xlu0 %1643
        %1645 = vrot.lane.b32.xlu0 %v1369, 32
        %v1646 = vpop.permute.xlu0 %1645
        %1647 = vrot.lane.b32.xlu0 %v1372, 32
        %v1648 = vpop.permute.xlu0 %1647
        %1649 = vrot.lane.b32.xlu0 %v1375, 32
        %v1650 = vpop.permute.xlu0 %1649
        %1651 = vrot.lane.b32.xlu0 %v1378, 32
        %v1652 = vpop.permute.xlu0 %1651
        %1653 = vrot.lane.b32.xlu0 %v1381, 32
        %v1654 = vpop.permute.xlu0 %1653
        %1655 = vrot.lane.b32.xlu0 %v1384, 32
        %v1656 = vpop.permute.xlu0 %1655
        %1657 = vrot.lane.b32.xlu0 %v1387, 32
        %v1658 = vpop.permute.xlu0 %1657
        %1659 = vrot.lane.b32.xlu0 %v1390, 32
        %v1660 = vpop.permute.xlu0 %1659
        %1661 = vrot.lane.b32.xlu0 %v1393, 32
        %v1662 = vpop.permute.xlu0 %1661
        %1663 = vrot.lane.b32.xlu0 %v1396, 32
        %v1664 = vpop.permute.xlu0 %1663
        %1665 = vrot.lane.b32.xlu0 %v1399, 32
        %v1666 = vpop.permute.xlu0 %1665
        %1667 = vrot.lane.b32.xlu0 %v1402, 32
        %v1668 = vpop.permute.xlu0 %1667
        %1669 = vrot.lane.b32.xlu0 %v1521, 32
        %v1670 = vpop.permute.xlu0 %1669
        %1671 = vrot.lane.b32.xlu0 %v1640, 32
        %v1672 = vpop.permute.xlu0 %1671
        %vm1673 = vcmask 31744
        %v1675 = vsel %vm1673, %v1065, %v1323
        %v1677 = vsel %vm1673, %v1066, %v1325
        %v1679 = vsel %vm1673, %v1067, %v1327
        %v1681 = vsel %vm1673, %v1068, %v1329
        %v1683 = vsel %vm1673, %v1069, %v1331
        %v1685 = vsel %vm1673, %v1070, %v1333
        %v1687 = vsel %vm1673, %v1071, %v1335
        %v1689 = vsel %vm1673, %v1072, %v1337
        %v1691 = vsel %vm1673, %v1073, %v1339
        %v1693 = vsel %vm1673, %v1074, %v1341
        %v1695 = vsel %vm1673, %v1075, %v1343
        %v1697 = vsel %vm1673, %v1076, %v1345
        %v1699 = vsel %vm1673, %v1077, %v1347
        %v1701 = vsel %vm1673, %v1078, %v1349
        %v1703 = vsel %vm1673, %v1079, %v1351
        %v1705 = vsel %vm1673, %v1080, %v1353
        %vm1706 = vcmask 64512
        %v1708 = vsel %vm1706, %v1675, %v1404
        %v1710 = vsel %vm1706, %v1677, %v1406
        %v1712 = vsel %vm1706, %v1679, %v1408
        %v1714 = vsel %vm1706, %v1681, %v1410
        %v1716 = vsel %vm1706, %v1683, %v1412
        %v1718 = vsel %vm1706, %v1685, %v1414
        %v1720 = vsel %vm1706, %v1687, %v1416
        %v1722 = vsel %vm1706, %v1689, %v1418
        %v1724 = vsel %vm1706, %v1691, %v1420
        %v1726 = vsel %vm1706, %v1693, %v1422
        %v1728 = vsel %vm1706, %v1695, %v1424
        %v1730 = vsel %vm1706, %v1697, %v1426
        %v1732 = vsel %vm1706, %v1699, %v1428
        %v1734 = vsel %vm1706, %v1701, %v1430
        %v1736 = vsel %vm1706, %v1703, %v1432
        %v1738 = vsel %vm1706, %v1705, %v1434
        %vm1739 = vcmask 97280
        %v1741 = vsel %vm1739, %v1708, %v1441
        %v1743 = vsel %vm1739, %v1710, %v1443
        %v1745 = vsel %vm1739, %v1712, %v1445
        %v1747 = vsel %vm1739, %v1714, %v1447
        %v1749 = vsel %vm1739, %v1716, %v1449
        %v1751 = vsel %vm1739, %v1718, %v1451
        %v1753 = vsel %vm1739, %v1720, %v1453
        %v1755 = vsel %vm1739, %v1722, %v1455
        %v1757 = vsel %vm1739, %v1724, %v1457
        %v1759 = vsel %vm1739, %v1726, %v1459
        %v1761 = vsel %vm1739, %v1728, %v1461
        %v1763 = vsel %vm1739, %v1730, %v1463
        %v1765 = vsel %vm1739, %v1732, %v1465
        %v1767 = vsel %vm1739, %v1734, %v1467
        %v1769 = vsel %vm1739, %v1736, %v1469
        %v1771 = vsel %vm1739, %v1738, %v1471
        %vm1772 = vcmask 130048
        %v1774 = vsel %vm1772, %v1741, %v1488
        %v1776 = vsel %vm1772, %v1743, %v1490
        %v1778 = vsel %vm1772, %v1745, %v1492
        %v1780 = vsel %vm1772, %v1747, %v1494
        %v1782 = vsel %vm1772, %v1749, %v1496
        %v1784 = vsel %vm1772, %v1751, %v1498
        %v1786 = vsel %vm1772, %v1753, %v1500
        %v1788 = vsel %vm1772, %v1755, %v1502
        %v1790 = vsel %vm1772, %v1757, %v1504
        %v1792 = vsel %vm1772, %v1759, %v1506
        %v1794 = vsel %vm1772, %v1761, %v1508
        %v1796 = vsel %vm1772, %v1763, %v1510
        %v1798 = vsel %vm1772, %v1765, %v1512
        %v1800 = vsel %vm1772, %v1767, %v1514
        %v1802 = vsel %vm1772, %v1769, %v1516
        %v1804 = vsel %vm1772, %v1771, %v1518
        %vm1805 = vcmask 162816
        %v1807 = vsel %vm1805, %v1774, %v1523
        %v1809 = vsel %vm1805, %v1776, %v1525
        %v1811 = vsel %vm1805, %v1778, %v1527
        %v1813 = vsel %vm1805, %v1780, %v1529
        %v1815 = vsel %vm1805, %v1782, %v1531
        %v1817 = vsel %vm1805, %v1784, %v1533
        %v1819 = vsel %vm1805, %v1786, %v1535
        %v1821 = vsel %vm1805, %v1788, %v1537
        %v1823 = vsel %vm1805, %v1790, %v1539
        %v1825 = vsel %vm1805, %v1792, %v1541
        %v1827 = vsel %vm1805, %v1794, %v1543
        %v1829 = vsel %vm1805, %v1796, %v1545
        %v1831 = vsel %vm1805, %v1798, %v1547
        %v1833 = vsel %vm1805, %v1800, %v1549
        %v1835 = vsel %vm1805, %v1802, %v1551
        %v1837 = vsel %vm1805, %v1804, %v1553
        %vm1838 = vcmask 195584
        %v1840 = vsel %vm1838, %v1807, %v1560
        %v1842 = vsel %vm1838, %v1809, %v1562
        %v1844 = vsel %vm1838, %v1811, %v1564
        %v1846 = vsel %vm1838, %v1813, %v1566
        %v1848 = vsel %vm1838, %v1815, %v1568
        %v1850 = vsel %vm1838, %v1817, %v1570
        %v1852 = vsel %vm1838, %v1819, %v1572
        %v1854 = vsel %vm1838, %v1821, %v1574
        %v1856 = vsel %vm1838, %v1823, %v1576
        %v1858 = vsel %vm1838, %v1825, %v1578
        %v1860 = vsel %vm1838, %v1827, %v1580
        %v1862 = vsel %vm1838, %v1829, %v1582
        %v1864 = vsel %vm1838, %v1831, %v1584
        %v1866 = vsel %vm1838, %v1833, %v1586
        %v1868 = vsel %vm1838, %v1835, %v1588
        %v1870 = vsel %vm1838, %v1837, %v1590
        %vm1871 = vcmask 228352
        %v1873 = vsel %vm1871, %v1840, %v1607
        %v1875 = vsel %vm1871, %v1842, %v1609
        %v1877 = vsel %vm1871, %v1844, %v1611
        %v1879 = vsel %vm1871, %v1846, %v1613
        %v1881 = vsel %vm1871, %v1848, %v1615
        %v1883 = vsel %vm1871, %v1850, %v1617
        %v1885 = vsel %vm1871, %v1852, %v1619
        %v1887 = vsel %vm1871, %v1854, %v1621
        %v1889 = vsel %vm1871, %v1856, %v1623
        %v1891 = vsel %vm1871, %v1858, %v1625
        %v1893 = vsel %vm1871, %v1860, %v1627
        %v1895 = vsel %vm1871, %v1862, %v1629
        %v1897 = vsel %vm1871, %v1864, %v1631
        %v1899 = vsel %vm1871, %v1866, %v1633
        %v1901 = vsel %vm1871, %v1868, %v1635
        %v1903 = vsel %vm1871, %v1870, %v1637
        %vm1904 = vcmask 261120
        %v1906 = vsel %vm1904, %v1873, %v1642
        %v1908 = vsel %vm1904, %v1875, %v1644
        %v1910 = vsel %vm1904, %v1877, %v1646
        %v1912 = vsel %vm1904, %v1879, %v1648
        %v1914 = vsel %vm1904, %v1881, %v1650
        %v1916 = vsel %vm1904, %v1883, %v1652
        %v1918 = vsel %vm1904, %v1885, %v1654
        %v1920 = vsel %vm1904, %v1887, %v1656
        %v1922 = vsel %vm1904, %v1889, %v1658
        %v1924 = vsel %vm1904, %v1891, %v1660
        %v1926 = vsel %vm1904, %v1893, %v1662
        %v1928 = vsel %vm1904, %v1895, %v1664
        %v1930 = vsel %vm1904, %v1897, %v1666
        %v1932 = vsel %vm1904, %v1899, %v1668
        %v1934 = vsel %vm1904, %v1901, %v1670
        %v1936 = vsel %vm1904, %v1903, %v1672
        %v1937 = vld [vmem:[%s1] sm:$0xf]
        %v1938 = vld [vmem:[%s1 + $0x4] sm:$0xf]
        %v1939 = vld [vmem:[%s1 + $0x8] sm:$0xf]
        %v1940 = vld [vmem:[%s1 + $0xc] sm:$0xf]
        %v1941 = vld [vmem:[%s1 + $0x10] sm:$0x3]
        %v1942 = vld [vmem:[%s2] sm:$0x1]
        %v1944 = vlaneseq
        %v1945 = vshrl.u32 %v1944, 7
        %v1946 = vsub.s32 0, %v1945
        %v1947 = vrot.slane %v1942, %v1946
        %v1954 = vunpack.c.l.b16 %v1937
        %v1955 = vunpack.c.l.b16 %v1938
        %v1956 = vunpack.c.l.b16 %v1939
        %v1957 = vunpack.c.l.b16 %v1940
        %v1958 = vunpack.c.l.b16 %v1941
        %v1959 = vpack.c.b16 %v1955, %v1954
        %v1960 = vpack.c.b16 %v1957, %v1956
        %v1961 = vpack.c.b16 %v1958, %v1958
        %vm1964 = vcmask 293888
        %v1965 = vsel %vm1964, %v1906, 0
        %v1967 = vsel %vm1964, %v1908, 0
        %v1969 = vsel %vm1964, %v1910, 0
        %v1971 = vsel %vm1964, %v1912, 0
        %v1973 = vsel %vm1964, %v1914, 0
        %v1975 = vsel %vm1964, %v1916, 0
        %v1977 = vsel %vm1964, %v1918, 0
        %v1979 = vsel %vm1964, %v1920, 0
        %v1981 = vsel %vm1964, %v1922, 0
        %v1983 = vsel %vm1964, %v1924, 0
        %v1985 = vsel %vm1964, %v1926, 0
        %v1987 = vsel %vm1964, %v1928, 0
        %v1989 = vsel %vm1964, %v1930, 0
        %v1991 = vsel %vm1964, %v1932, 0
        %v1993 = vsel %vm1964, %v1934, 0
        %v1995 = vsel %vm1964, %v1936, 0
        %vm1997 = vcmask 1041408
        %v1999 = vsel %vm1997, %v1961, 0
        %2001 = vmatprep.subr.bf16.mxu0 0
        %2002 = vmatpush1.bf16.msra.mxu0 %v1959
        %2003 = vmatprep.subr.bf16.mxu0 0
        %2004 = vmatpush1.bf16.msra.mxu0 %v1960
        %2005 = vmatprep.subr.bf16.mxu0 0
        %2006 = vmatpush1.bf16.msra.mxu0 %v1999
        %2007 = vmatprep.subr.bf16.mxu0 0
        %2008 = vmatpush1.bf16.msra.mxu0 0
        %2009 = vmatprep.subr.bf16.mxu0 0
        %2010 = vmatpush1.bf16.msra.mxu0 0
        %2011 = vmatprep.subr.bf16.mxu0 0
        %2012 = vmatpush1.bf16.msra.mxu0 0
        %2013 = vmatprep.subr.bf16.mxu0 0
        %2014 = vmatpush1.bf16.msra.mxu0 0
        %2015 = vmatprep.subr.bf16.mxu0 0
        %2016 = vmatpush1.bf16.msra.mxu0 0
        %2017 = vmatprep.subr.bf16.mxu0 0
        %2018 = vmatpush1.bf16.msra.mxu0 0
        %2019 = vmatprep.subr.bf16.mxu0 0
        %2020 = vmatpush1.bf16.msra.mxu0 0
        %2021 = vmatprep.subr.bf16.mxu0 0
        %2022 = vmatpush1.bf16.msra.mxu0 0
        %2023 = vmatprep.subr.bf16.mxu0 0
        %2024 = vmatpush1.bf16.msra.mxu0 0
        %2025 = vmatprep.subr.bf16.mxu0 0
        %2026 = vmatpush1.bf16.msra.mxu0 0
        %2027 = vmatprep.subr.bf16.mxu0 0
        %2028 = vmatpush1.bf16.msra.mxu0 0
        %2029 = vmatprep.subr.bf16.mxu0 0
        %2030 = vmatpush1.bf16.msra.mxu0 0
        %2031 = vmatprep.subr.bf16.mxu0 0
        %2032 = vmatpush1.bf16.msra.mxu0 0
        %2033 = vmatprep.mubr.bf16.mxu0 0
        %2034 = vmatmul.mubr.bf16.gmra.mrb[0].mxu0 %v1965
        %v2035 = vpop.f32.mrb[0].mxu0
        %v2036 = vadd.f32 %v1947, %v2035
        %v2037 = vpop.f32.mrb[0].mxu0
        %v2038 = vpop.f32.mrb[0].mxu0
        %v2039 = vadd.f32 %v1947, %v2038
        %v2040 = vpop.f32.mrb[0].mxu0
        %2041 = vmatprep.mubr.bf16.mxu0 0
        %2042 = vmatmul.mubr.bf16.gmra.mrb[0].mxu0 %v1967
        %v2043 = vpop.f32.mrb[0].mxu0
        %v2044 = vadd.f32 %v1947, %v2043
        %v2045 = vpop.f32.mrb[0].mxu0
        %v2046 = vpop.f32.mrb[0].mxu0
        %v2047 = vadd.f32 %v1947, %v2046
        %v2048 = vpop.f32.mrb[0].mxu0
        %2049 = vmatprep.mubr.bf16.mxu0 0
        %2050 = vmatmul.mubr.bf16.gmra.mrb[0].mxu0 %v1969
        %v2051 = vpop.f32.mrb[0].mxu0
        %v2052 = vadd.f32 %v1947, %v2051
        %v2053 = vpop.f32.mrb[0].mxu0
        %v2054 = vpop.f32.mrb[0].mxu0
        %v2055 = vadd.f32 %v1947, %v2054
        %v2056 = vpop.f32.mrb[0].mxu0
        %2057 = vmatprep.mubr.bf16.mxu0 0
        %2058 = vmatmul.mubr.bf16.gmra.mrb[0].mxu0 %v1971
        %v2059 = vpop.f32.mrb[0].mxu0
        %v2060 = vadd.f32 %v1947, %v2059
        %v2061 = vpop.f32.mrb[0].mxu0
        %v2062 = vpop.f32.mrb[0].mxu0
        %v2063 = vadd.f32 %v1947, %v2062
        %v2064 = vpop.f32.mrb[0].mxu0
        %2065 = vmatprep.mubr.bf16.mxu0 0
        %2066 = vmatmul.mubr.bf16.gmra.mrb[0].mxu0 %v1973
        %v2067 = vpop.f32.mrb[0].mxu0
        %v2068 = vadd.f32 %v1947, %v2067
        %v2069 = vpop.f32.mrb[0].mxu0
        %v2070 = vpop.f32.mrb[0].mxu0
        %v2071 = vadd.f32 %v1947, %v2070
        %v2072 = vpop.f32.mrb[0].mxu0
        %2073 = vmatprep.mubr.bf16.mxu0 0
        %2074 = vmatmul.mubr.bf16.gmra.mrb[0].mxu0 %v1975
        %v2075 = vpop.f32.mrb[0].mxu0
        %v2076 = vadd.f32 %v1947, %v2075
        %v2077 = vpop.f32.mrb[0].mxu0
        %v2078 = vpop.f32.mrb[0].mxu0
        %v2079 = vadd.f32 %v1947, %v2078
        %v2080 = vpop.f32.mrb[0].mxu0
        %2081 = vmatprep.mubr.bf16.mxu0 0
        %2082 = vmatmul.mubr.bf16.gmra.mrb[0].mxu0 %v1977
        %v2083 = vpop.f32.mrb[0].mxu0
        %v2084 = vadd.f32 %v1947, %v2083
        %v2085 = vpop.f32.mrb[0].mxu0
        %v2086 = vpop.f32.mrb[0].mxu0
        %v2087 = vadd.f32 %v1947, %v2086
        %v2088 = vpop.f32.mrb[0].mxu0
        %2089 = vmatprep.mubr.bf16.mxu0 0
        %2090 = vmatmul.mubr.bf16.gmra.mrb[0].mxu0 %v1979
        %v2091 = vpop.f32.mrb[0].mxu0
        %v2092 = vadd.f32 %v1947, %v2091
        %v2093 = vpop.f32.mrb[0].mxu0
        %v2094 = vpop.f32.mrb[0].mxu0
        %v2095 = vadd.f32 %v1947, %v2094
        %v2096 = vpop.f32.mrb[0].mxu0
        %2097 = vmatprep.mubr.bf16.mxu0 0
        %2098 = vmatmul.mubr.bf16.gmra.mrb[0].mxu0 %v1981
        %v2099 = vpop.f32.mrb[0].mxu0
        %v2100 = vadd.f32 %v1947, %v2099
        %v2101 = vpop.f32.mrb[0].mxu0
        %v2102 = vpop.f32.mrb[0].mxu0
        %v2103 = vadd.f32 %v1947, %v2102
        %v2104 = vpop.f32.mrb[0].mxu0
        %2105 = vmatprep.mubr.bf16.mxu0 0
        %2106 = vmatmul.mubr.bf16.gmra.mrb[0].mxu0 %v1983
        %v2107 = vpop.f32.mrb[0].mxu0
        %v2108 = vadd.f32 %v1947, %v2107
        %v2109 = vpop.f32.mrb[0].mxu0
        %v2110 = vpop.f32.mrb[0].mxu0
        %v2111 = vadd.f32 %v1947, %v2110
        %v2112 = vpop.f32.mrb[0].mxu0
        %2113 = vmatprep.mubr.bf16.mxu0 0
        %2114 = vmatmul.mubr.bf16.gmra.mrb[0].mxu0 %v1985
        %v2115 = vpop.f32.mrb[0].mxu0
        %v2116 = vadd.f32 %v1947, %v2115
        %v2117 = vpop.f32.mrb[0].mxu0
        %v2118 = vpop.f32.mrb[0].mxu0
        %v2119 = vadd.f32 %v1947, %v2118
        %v2120 = vpop.f32.mrb[0].mxu0
        %2121 = vmatprep.mubr.bf16.mxu0 0
        %2122 = vmatmul.mubr.bf16.gmra.mrb[0].mxu0 %v1987
        %v2123 = vpop.f32.mrb[0].mxu0
        %v2124 = vadd.f32 %v1947, %v2123
        %v2125 = vpop.f32.mrb[0].mxu0
        %v2126 = vpop.f32.mrb[0].mxu0
        %v2127 = vadd.f32 %v1947, %v2126
        %v2128 = vpop.f32.mrb[0].mxu0
        %2129 = vmatprep.mubr.bf16.mxu0 0
        %2130 = vmatmul.mubr.bf16.gmra.mrb[0].mxu0 %v1989
        %v2131 = vpop.f32.mrb[0].mxu0
        %v2132 = vadd.f32 %v1947, %v2131
        %v2133 = vpop.f32.mrb[0].mxu0
        %v2134 = vpop.f32.mrb[0].mxu0
        %v2135 = vadd.f32 %v1947, %v2134
        %v2136 = vpop.f32.mrb[0].mxu0
        %2137 = vmatprep.mubr.bf16.mxu0 0
        %2138 = vmatmul.mubr.bf16.gmra.mrb[0].mxu0 %v1991
        %v2139 = vpop.f32.mrb[0].mxu0
        %v2140 = vadd.f32 %v1947, %v2139
        %v2141 = vpop.f32.mrb[0].mxu0
        %v2142 = vpop.f32.mrb[0].mxu0
        %v2143 = vadd.f32 %v1947, %v2142
        %v2144 = vpop.f32.mrb[0].mxu0
        %2145 = vmatprep.mubr.bf16.mxu0 0
        %2146 = vmatmul.mubr.bf16.gmra.mrb[0].mxu0 %v1993
        %v2147 = vpop.f32.mrb[0].mxu0
        %v2148 = vadd.f32 %v1947, %v2147
        %v2149 = vpop.f32.mrb[0].mxu0
        %v2150 = vpop.f32.mrb[0].mxu0
        %v2151 = vadd.f32 %v1947, %v2150
        %v2152 = vpop.f32.mrb[0].mxu0
        %2153 = vmatprep.mubr.bf16.mxu0 0
        %2154 = vmatmul.mubr.bf16.gmra.mrb[0].mxu0 %v1995
        %v2155 = vpop.f32.mrb[0].mxu0
        %v2156 = vadd.f32 %v1947, %v2155
        %v2157 = vpop.f32.mrb[0].mxu0
        %v2158 = vpop.f32.mrb[0].mxu0
        %v2159 = vadd.f32 %v1947, %v2158
        %v2160 = vpop.f32.mrb[0].mxu0
        %2161 = vdwg.mxu0
        %v2162 = vmax.f32 %v2036, 0.0
        %v2163 = vmax.f32 %v2039, 0.0
        %v2164 = vmax.f32 %v2044, 0.0
        %v2165 = vmax.f32 %v2047, 0.0
        %v2166 = vmax.f32 %v2052, 0.0
        %v2167 = vmax.f32 %v2055, 0.0
        %v2168 = vmax.f32 %v2060, 0.0
        %v2169 = vmax.f32 %v2063, 0.0
        %v2170 = vmax.f32 %v2068, 0.0
        %v2171 = vmax.f32 %v2071, 0.0
        %v2172 = vmax.f32 %v2076, 0.0
        %v2173 = vmax.f32 %v2079, 0.0
        %v2174 = vmax.f32 %v2084, 0.0
        %v2175 = vmax.f32 %v2087, 0.0
        %v2176 = vmax.f32 %v2092, 0.0
        %v2177 = vmax.f32 %v2095, 0.0
        %v2178 = vmax.f32 %v2100, 0.0
        %v2179 = vmax.f32 %v2103, 0.0
        %v2180 = vmax.f32 %v2108, 0.0
        %v2181 = vmax.f32 %v2111, 0.0
        %v2182 = vmax.f32 %v2116, 0.0
        %v2183 = vmax.f32 %v2119, 0.0
        %v2184 = vmax.f32 %v2124, 0.0
        %v2185 = vmax.f32 %v2127, 0.0
        %v2186 = vmax.f32 %v2132, 0.0
        %v2187 = vmax.f32 %v2135, 0.0
        %v2188 = vmax.f32 %v2140, 0.0
        %v2189 = vmax.f32 %v2143, 0.0
        %v2190 = vmax.f32 %v2148, 0.0
        %v2191 = vmax.f32 %v2151, 0.0
        %v2192 = vmax.f32 %v2156, 0.0
        %v2193 = vmax.f32 %v2159, 0.0
        %vm2194 = vcmask 60416
        %2195 = vst.msk [vmem:[#allocation3] sm:$0xf] %vm2194, 0
        %2196 = vst.msk [vmem:[#allocation3 + $0x4] sm:$0xf] %vm2194, 0
        %vm2197 = vcmask 57344
        %2198 = vst.msk [vmem:[#allocation3 + $0x8] sm:$0x1] %vm2197, 0
        %s2199 = scalar_lea.vmem [#allocation3], 204
        %2200 = vst.msk [vmem:[%s2199] sm:$0xf] %vm2194, 0
        %2201 = vst.msk [vmem:[%s2199 + $0x4] sm:$0xf] %vm2194, 0
        %2202 = vst.msk [vmem:[%s2199 + $0x8] sm:$0x1] %vm2197, 0
        %vm2203 = vcmask 57344
        %vm2204 = vmand %vm2203, %vm234
        %v2205 = vld [vmem:[#allocation3] sm:$0x1]
        %v2206 = vsel %vm2204, 0, %v2205
        %2207 = vst [vmem:[#allocation3] sm:$0x1] %v2206
        %v2208 = vld [vmem:[#allocation3 + $0xc] sm:$0x1]
        %v2209 = vsel %vm2204, 0, %v2208
        %2210 = vst [vmem:[#allocation3 + $0xc] sm:$0x1] %v2209
        %v2211 = vld [vmem:[#allocation3 + $0x18] sm:$0x1]
        %v2212 = vsel %vm2204, 0, %v2211
        %2213 = vst [vmem:[#allocation3 + $0x18] sm:$0x1] %v2212
        %v2214 = vld [vmem:[#allocation3 + $0x24] sm:$0x1]
        %v2215 = vsel %vm2204, 0, %v2214
        %2216 = vst [vmem:[#allocation3 + $0x24] sm:$0x1] %v2215
        %v2217 = vld [vmem:[#allocation3 + $0x30] sm:$0x1]
        %v2218 = vsel %vm2204, 0, %v2217
        %2219 = vst [vmem:[#allocation3 + $0x30] sm:$0x1] %v2218
        %v2220 = vld [vmem:[#allocation3 + $0x3c] sm:$0x1]
        %v2221 = vsel %vm2204, 0, %v2220
        %2222 = vst [vmem:[#allocation3 + $0x3c] sm:$0x1] %v2221
        %v2223 = vld [vmem:[#allocation3 + $0x48] sm:$0x1]
        %v2224 = vsel %vm2204, 0, %v2223
        %2225 = vst [vmem:[#allocation3 + $0x48] sm:$0x1] %v2224
        %v2226 = vld [vmem:[#allocation3 + $0x54] sm:$0x1]
        %v2227 = vsel %vm2204, 0, %v2226
        %2228 = vst [vmem:[#allocation3 + $0x54] sm:$0x1] %v2227
        %v2229 = vld [vmem:[#allocation3 + $0x60] sm:$0x1]
        %v2230 = vsel %vm2204, 0, %v2229
        %2231 = vst [vmem:[#allocation3 + $0x60] sm:$0x1] %v2230
        %v2232 = vld [vmem:[#allocation3 + $0x6c] sm:$0x1]
        %v2233 = vsel %vm2204, 0, %v2232
        %2234 = vst [vmem:[#allocation3 + $0x6c] sm:$0x1] %v2233
        %v2235 = vld [vmem:[#allocation3 + $0x78] sm:$0x1]
        %v2236 = vsel %vm2204, 0, %v2235
        %2237 = vst [vmem:[#allocation3 + $0x78] sm:$0x1] %v2236
        %v2238 = vld [vmem:[#allocation3 + $0x84] sm:$0x1]
        %v2239 = vsel %vm2204, 0, %v2238
        %2240 = vst [vmem:[#allocation3 + $0x84] sm:$0x1] %v2239
        %v2241 = vld [vmem:[#allocation3 + $0x90] sm:$0x1]
        %v2242 = vsel %vm2204, 0, %v2241
        %2243 = vst [vmem:[#allocation3 + $0x90] sm:$0x1] %v2242
        %v2244 = vld [vmem:[#allocation3 + $0x9c] sm:$0x1]
        %v2245 = vsel %vm2204, 0, %v2244
        %2246 = vst [vmem:[#allocation3 + $0x9c] sm:$0x1] %v2245
        %v2247 = vld [vmem:[#allocation3 + $0xa8] sm:$0x1]
        %v2248 = vsel %vm2204, 0, %v2247
        %2249 = vst [vmem:[#allocation3 + $0xa8] sm:$0x1] %v2248
        %v2250 = vld [vmem:[#allocation3 + $0xb4] sm:$0x1]
        %v2251 = vsel %vm2204, 0, %v2250
        %2252 = vst [vmem:[#allocation3 + $0xb4] sm:$0x1] %v2251
        %v2253 = vld [vmem:[#allocation3 + $0xc0] sm:$0x1]
        %v2254 = vsel %vm2204, 0, %v2253
        %2255 = vst [vmem:[#allocation3 + $0xc0] sm:$0x1] %v2254
        %v2256 = vld [vmem:[#allocation3 + $0xcc] sm:$0x1]
        %v2257 = vsel %vm2204, 0, %v2256
        %2258 = vst [vmem:[#allocation3 + $0xcc] sm:$0x1] %v2257
        %vm2259 = vmand %vm2203, %vm290
        %v2260 = vld [vmem:[#allocation3 + $0x8] sm:$0x1]
        %v2261 = vsel %vm2259, 0, %v2260
        %2262 = vst [vmem:[#allocation3 + $0x8] sm:$0x1] %v2261
        %v2263 = vld [vmem:[#allocation3 + $0x14] sm:$0x1]
        %v2264 = vsel %vm2259, 0, %v2263
        %2265 = vst [vmem:[#allocation3 + $0x14] sm:$0x1] %v2264
        %v2266 = vld [vmem:[#allocation3 + $0x20] sm:$0x1]
        %v2267 = vsel %vm2259, 0, %v2266
        %2268 = vst [vmem:[#allocation3 + $0x20] sm:$0x1] %v2267
        %v2269 = vld [vmem:[#allocation3 + $0x2c] sm:$0x1]
        %v2270 = vsel %vm2259, 0, %v2269
        %2271 = vst [vmem:[#allocation3 + $0x2c] sm:$0x1] %v2270
        %v2272 = vld [vmem:[#allocation3 + $0x38] sm:$0x1]
        %v2273 = vsel %vm2259, 0, %v2272
        %2274 = vst [vmem:[#allocation3 + $0x38] sm:$0x1] %v2273
        %v2275 = vld [vmem:[#allocation3 + $0x44] sm:$0x1]
        %v2276 = vsel %vm2259, 0, %v2275
        %2277 = vst [vmem:[#allocation3 + $0x44] sm:$0x1] %v2276
        %v2278 = vld [vmem:[#allocation3 + $0x50] sm:$0x1]
        %v2279 = vsel %vm2259, 0, %v2278
        %2280 = vst [vmem:[#allocation3 + $0x50] sm:$0x1] %v2279
        %v2281 = vld [vmem:[#allocation3 + $0x5c] sm:$0x1]
        %v2282 = vsel %vm2259, 0, %v2281
        %2283 = vst [vmem:[#allocation3 + $0x5c] sm:$0x1] %v2282
        %v2284 = vld [vmem:[#allocation3 + $0x68] sm:$0x1]
        %v2285 = vsel %vm2259, 0, %v2284
        %2286 = vst [vmem:[#allocation3 + $0x68] sm:$0x1] %v2285
        %v2287 = vld [vmem:[#allocation3 + $0x74] sm:$0x1]
        %v2288 = vsel %vm2259, 0, %v2287
        %2289 = vst [vmem:[#allocation3 + $0x74] sm:$0x1] %v2288
        %v2290 = vld [vmem:[#allocation3 + $0x80] sm:$0x1]
        %v2291 = vsel %vm2259, 0, %v2290
        %2292 = vst [vmem:[#allocation3 + $0x80] sm:$0x1] %v2291
        %v2293 = vld [vmem:[#allocation3 + $0x8c] sm:$0x1]
        %v2294 = vsel %vm2259, 0, %v2293
        %2295 = vst [vmem:[#allocation3 + $0x8c] sm:$0x1] %v2294
        %v2296 = vld [vmem:[#allocation3 + $0x98] sm:$0x1]
        %v2297 = vsel %vm2259, 0, %v2296
        %2298 = vst [vmem:[#allocation3 + $0x98] sm:$0x1] %v2297
        %v2299 = vld [vmem:[#allocation3 + $0xa4] sm:$0x1]
        %v2300 = vsel %vm2259, 0, %v2299
        %2301 = vst [vmem:[#allocation3 + $0xa4] sm:$0x1] %v2300
        %v2302 = vld [vmem:[#allocation3 + $0xb0] sm:$0x1]
        %v2303 = vsel %vm2259, 0, %v2302
        %2304 = vst [vmem:[#allocation3 + $0xb0] sm:$0x1] %v2303
        %v2305 = vld [vmem:[#allocation3 + $0xbc] sm:$0x1]
        %v2306 = vsel %vm2259, 0, %v2305
        %2307 = vst [vmem:[#allocation3 + $0xbc] sm:$0x1] %v2306
        %v2308 = vld [vmem:[#allocation3 + $0xc8] sm:$0x1]
        %v2309 = vsel %vm2259, 0, %v2308
        %2310 = vst [vmem:[#allocation3 + $0xc8] sm:$0x1] %v2309
        %v2311 = vld [vmem:[#allocation3 + $0xd4] sm:$0x1]
        %v2312 = vsel %vm2259, 0, %v2311
        %2313 = vst [vmem:[#allocation3 + $0xd4] sm:$0x1] %v2312
        %v2314 = vpack.c.bf16 %v2163, %v2162
        %v2315 = vpack.c.bf16 %v2165, %v2164
        %v2316 = vpack.c.bf16 %v2167, %v2166
        %v2317 = vpack.c.bf16 %v2169, %v2168
        %v2318 = vpack.c.bf16 %v2171, %v2170
        %v2319 = vpack.c.bf16 %v2173, %v2172
        %v2320 = vpack.c.bf16 %v2175, %v2174
        %v2321 = vpack.c.bf16 %v2177, %v2176
        %v2322 = vpack.c.bf16 %v2179, %v2178
        %v2323 = vpack.c.bf16 %v2181, %v2180
        %v2324 = vpack.c.bf16 %v2183, %v2182
        %v2325 = vpack.c.bf16 %v2185, %v2184
        %v2326 = vpack.c.bf16 %v2187, %v2186
        %v2327 = vpack.c.bf16 %v2189, %v2188
        %v2328 = vpack.c.bf16 %v2191, %v2190
        %v2329 = vpack.c.bf16 %v2193, %v2192
        %v2346 = vunpack.c.l.b16 %v2314
        %v2347 = vunpack.c.h.b16 %v2314
        %v2348 = vunpack.c.l.b16 %v2315
        %v2349 = vunpack.c.h.b16 %v2315
        %v2350 = vunpack.c.l.b16 %v2316
        %v2351 = vunpack.c.h.b16 %v2316
        %v2352 = vunpack.c.l.b16 %v2317
        %v2353 = vunpack.c.h.b16 %v2317
        %v2354 = vunpack.c.l.b16 %v2318
        %v2355 = vunpack.c.h.b16 %v2318
        %v2356 = vunpack.c.l.b16 %v2319
        %v2357 = vunpack.c.h.b16 %v2319
        %v2358 = vunpack.c.l.b16 %v2320
        %v2359 = vunpack.c.h.b16 %v2320
        %v2360 = vunpack.c.l.b16 %v2321
        %v2361 = vunpack.c.h.b16 %v2321
        %v2362 = vunpack.c.l.b16 %v2322
        %v2363 = vunpack.c.h.b16 %v2322
        %v2364 = vunpack.c.l.b16 %v2323
        %v2365 = vunpack.c.h.b16 %v2323
        %v2366 = vunpack.c.l.b16 %v2324
        %v2367 = vunpack.c.h.b16 %v2324
        %v2368 = vunpack.c.l.b16 %v2325
        %v2369 = vunpack.c.h.b16 %v2325
        %v2370 = vunpack.c.l.b16 %v2326
        %v2371 = vunpack.c.h.b16 %v2326
        %v2372 = vunpack.c.l.b16 %v2327
        %v2373 = vunpack.c.h.b16 %v2327
        %v2374 = vunpack.c.l.b16 %v2328
        %v2375 = vunpack.c.h.b16 %v2328
        %v2376 = vunpack.c.l.b16 %v2329
        %v2377 = vunpack.c.h.b16 %v2329
        %v2378 = vpack.c.b16 %v2346, %v2346
        %v2379 = vpack.c.b16 %v2347, %v2347
        %v2380 = vpack.c.b16 %v2348, %v2348
        %v2381 = vpack.c.b16 %v2349, %v2349
        %v2382 = vpack.c.b16 %v2350, %v2350
        %v2383 = vpack.c.b16 %v2351, %v2351
        %v2384 = vpack.c.b16 %v2352, %v2352
        %v2385 = vpack.c.b16 %v2353, %v2353
        %v2386 = vpack.c.b16 %v2354, %v2354
        %v2387 = vpack.c.b16 %v2355, %v2355
        %v2388 = vpack.c.b16 %v2356, %v2356
        %v2389 = vpack.c.b16 %v2357, %v2357
        %v2390 = vpack.c.b16 %v2358, %v2358
        %v2391 = vpack.c.b16 %v2359, %v2359
        %v2392 = vpack.c.b16 %v2360, %v2360
        %v2393 = vpack.c.b16 %v2361, %v2361
        %v2394 = vpack.c.b16 %v2362, %v2362
        %v2395 = vpack.c.b16 %v2363, %v2363
        %v2396 = vpack.c.b16 %v2364, %v2364
        %v2397 = vpack.c.b16 %v2365, %v2365
        %v2398 = vpack.c.b16 %v2366, %v2366
        %v2399 = vpack.c.b16 %v2367, %v2367
        %v2400 = vpack.c.b16 %v2368, %v2368
        %v2401 = vpack.c.b16 %v2369, %v2369
        %v2402 = vpack.c.b16 %v2370, %v2370
        %v2403 = vpack.c.b16 %v2371, %v2371
        %v2404 = vpack.c.b16 %v2372, %v2372
        %v2405 = vpack.c.b16 %v2373, %v2373
        %v2406 = vpack.c.b16 %v2374, %v2374
        %v2407 = vpack.c.b16 %v2375, %v2375
        %v2408 = vpack.c.b16 %v2376, %v2376
        %v2409 = vpack.c.b16 %v2377, %v2377
        %v2411 = vshrl.u32 %v2378, 16
        %v2413 = vrot.slane %v2411, 7
        %v2414 = vshll.u32 %v2378, 16
        %v2416 = vor.u32 %v2413, %v2414
        %v2417 = vrot.slane %v2413, 4
        %v2419 = vshrl.u32 %v2379, 16
        %v2421 = vrot.slane %v2419, 7
        %v2422 = vshll.u32 %v2379, 16
        %v2424 = vor.u32 %v2421, %v2422
        %v2425 = vsel %vm511, %v2417, %v2424
        %v2426 = vrot.slane %v2421, 4
        %v2428 = vshrl.u32 %v2380, 16
        %v2430 = vrot.slane %v2428, 7
        %v2431 = vshll.u32 %v2380, 16
        %v2433 = vor.u32 %v2430, %v2431
        %v2434 = vrot.slane %v2430, 4
        %v2436 = vshrl.u32 %v2381, 16
        %v2438 = vrot.slane %v2436, 7
        %v2439 = vshll.u32 %v2381, 16
        %v2441 = vor.u32 %v2438, %v2439
        %v2442 = vsel %vm511, %v2434, %v2441
        %v2443 = vrot.slane %v2438, 4
        %v2445 = vshrl.u32 %v2382, 16
        %v2447 = vrot.slane %v2445, 7
        %v2448 = vshll.u32 %v2382, 16
        %v2450 = vor.u32 %v2447, %v2448
        %v2451 = vrot.slane %v2447, 4
        %v2453 = vshrl.u32 %v2383, 16
        %v2455 = vrot.slane %v2453, 7
        %v2456 = vshll.u32 %v2383, 16
        %v2458 = vor.u32 %v2455, %v2456
        %v2459 = vsel %vm511, %v2451, %v2458
        %v2460 = vrot.slane %v2455, 4
        %v2462 = vshrl.u32 %v2384, 16
        %v2464 = vrot.slane %v2462, 7
        %v2465 = vshll.u32 %v2384, 16
        %v2467 = vor.u32 %v2464, %v2465
        %v2468 = vrot.slane %v2464, 4
        %v2470 = vshrl.u32 %v2385, 16
        %v2472 = vrot.slane %v2470, 7
        %v2473 = vshll.u32 %v2385, 16
        %v2475 = vor.u32 %v2472, %v2473
        %v2476 = vsel %vm511, %v2468, %v2475
        %v2477 = vrot.slane %v2472, 4
        %v2479 = vshrl.u32 %v2386, 16
        %v2481 = vrot.slane %v2479, 7
        %v2482 = vshll.u32 %v2386, 16
        %v2484 = vor.u32 %v2481, %v2482
        %v2485 = vrot.slane %v2481, 4
        %v2487 = vshrl.u32 %v2387, 16
        %v2489 = vrot.slane %v2487, 7
        %v2490 = vshll.u32 %v2387, 16
        %v2492 = vor.u32 %v2489, %v2490
        %v2493 = vsel %vm511, %v2485, %v2492
        %v2494 = vrot.slane %v2489, 4
        %v2496 = vshrl.u32 %v2388, 16
        %v2498 = vrot.slane %v2496, 7
        %v2499 = vshll.u32 %v2388, 16
        %v2501 = vor.u32 %v2498, %v2499
        %v2502 = vrot.slane %v2498, 4
        %v2504 = vshrl.u32 %v2389, 16
        %v2506 = vrot.slane %v2504, 7
        %v2507 = vshll.u32 %v2389, 16
        %v2509 = vor.u32 %v2506, %v2507
        %v2510 = vsel %vm511, %v2502, %v2509
        %v2511 = vrot.slane %v2506, 4
        %v2513 = vshrl.u32 %v2390, 16
        %v2515 = vrot.slane %v2513, 7
        %v2516 = vshll.u32 %v2390, 16
        %v2518 = vor.u32 %v2515, %v2516
        %v2519 = vrot.slane %v2515, 4
        %v2521 = vshrl.u32 %v2391, 16
        %v2523 = vrot.slane %v2521, 7
        %v2524 = vshll.u32 %v2391, 16
        %v2526 = vor.u32 %v2523, %v2524
        %v2527 = vsel %vm511, %v2519, %v2526
        %v2528 = vrot.slane %v2523, 4
        %v2530 = vshrl.u32 %v2392, 16
        %v2532 = vrot.slane %v2530, 7
        %v2533 = vshll.u32 %v2392, 16
        %v2535 = vor.u32 %v2532, %v2533
        %v2536 = vrot.slane %v2532, 4
        %v2538 = vshrl.u32 %v2393, 16
        %v2540 = vrot.slane %v2538, 7
        %v2541 = vshll.u32 %v2393, 16
        %v2543 = vor.u32 %v2540, %v2541
        %v2544 = vsel %vm511, %v2536, %v2543
        %v2545 = vrot.slane %v2540, 4
        %v2547 = vshrl.u32 %v2394, 16
        %v2549 = vrot.slane %v2547, 7
        %v2550 = vshll.u32 %v2394, 16
        %v2552 = vor.u32 %v2549, %v2550
        %v2553 = vrot.slane %v2549, 4
        %v2555 = vshrl.u32 %v2395, 16
        %v2557 = vrot.slane %v2555, 7
        %v2558 = vshll.u32 %v2395, 16
        %v2560 = vor.u32 %v2557, %v2558
        %v2561 = vsel %vm511, %v2553, %v2560
        %v2562 = vrot.slane %v2557, 4
        %v2564 = vshrl.u32 %v2396, 16
        %v2566 = vrot.slane %v2564, 7
        %v2567 = vshll.u32 %v2396, 16
        %v2569 = vor.u32 %v2566, %v2567
        %v2570 = vrot.slane %v2566, 4
        %v2572 = vshrl.u32 %v2397, 16
        %v2574 = vrot.slane %v2572, 7
        %v2575 = vshll.u32 %v2397, 16
        %v2577 = vor.u32 %v2574, %v2575
        %v2578 = vsel %vm511, %v2570, %v2577
        %v2579 = vrot.slane %v2574, 4
        %v2581 = vshrl.u32 %v2398, 16
        %v2583 = vrot.slane %v2581, 7
        %v2584 = vshll.u32 %v2398, 16
        %v2586 = vor.u32 %v2583, %v2584
        %v2587 = vrot.slane %v2583, 4
        %v2589 = vshrl.u32 %v2399, 16
        %v2591 = vrot.slane %v2589, 7
        %v2592 = vshll.u32 %v2399, 16
        %v2594 = vor.u32 %v2591, %v2592
        %v2595 = vsel %vm511, %v2587, %v2594
        %v2596 = vrot.slane %v2591, 4
        %v2598 = vshrl.u32 %v2400, 16
        %v2600 = vrot.slane %v2598, 7
        %v2601 = vshll.u32 %v2400, 16
        %v2603 = vor.u32 %v2600, %v2601
        %v2604 = vrot.slane %v2600, 4
        %v2606 = vshrl.u32 %v2401, 16
        %v2608 = vrot.slane %v2606, 7
        %v2609 = vshll.u32 %v2401, 16
        %v2611 = vor.u32 %v2608, %v2609
        %v2612 = vsel %vm511, %v2604, %v2611
        %v2613 = vrot.slane %v2608, 4
        %v2615 = vshrl.u32 %v2402, 16
        %v2617 = vrot.slane %v2615, 7
        %v2618 = vshll.u32 %v2402, 16
        %v2620 = vor.u32 %v2617, %v2618
        %v2621 = vrot.slane %v2617, 4
        %v2623 = vshrl.u32 %v2403, 16
        %v2625 = vrot.slane %v2623, 7
        %v2626 = vshll.u32 %v2403, 16
        %v2628 = vor.u32 %v2625, %v2626
        %v2629 = vsel %vm511, %v2621, %v2628
        %v2630 = vrot.slane %v2625, 4
        %v2632 = vshrl.u32 %v2404, 16
        %v2634 = vrot.slane %v2632, 7
        %v2635 = vshll.u32 %v2404, 16
        %v2637 = vor.u32 %v2634, %v2635
        %v2638 = vrot.slane %v2634, 4
        %v2640 = vshrl.u32 %v2405, 16
        %v2642 = vrot.slane %v2640, 7
        %v2643 = vshll.u32 %v2405, 16
        %v2645 = vor.u32 %v2642, %v2643
        %v2646 = vsel %vm511, %v2638, %v2645
        %v2647 = vrot.slane %v2642, 4
        %v2649 = vshrl.u32 %v2406, 16
        %v2651 = vrot.slane %v2649, 7
        %v2652 = vshll.u32 %v2406, 16
        %v2654 = vor.u32 %v2651, %v2652
        %v2655 = vrot.slane %v2651, 4
        %v2657 = vshrl.u32 %v2407, 16
        %v2659 = vrot.slane %v2657, 7
        %v2660 = vshll.u32 %v2407, 16
        %v2662 = vor.u32 %v2659, %v2660
        %v2663 = vsel %vm511, %v2655, %v2662
        %v2664 = vrot.slane %v2659, 4
        %v2666 = vshrl.u32 %v2408, 16
        %v2668 = vrot.slane %v2666, 7
        %v2669 = vshll.u32 %v2408, 16
        %v2671 = vor.u32 %v2668, %v2669
        %v2672 = vrot.slane %v2668, 4
        %v2674 = vshrl.u32 %v2409, 16
        %v2676 = vrot.slane %v2674, 7
        %v2677 = vshll.u32 %v2409, 16
        %v2679 = vor.u32 %v2676, %v2677
        %v2680 = vsel %vm511, %v2672, %v2679
        %v2681 = vrot.slane %v2676, 4
        %s2730 = scalar_lea.vmem [#allocation3], 12
        %vm2731 = vcmask 60416
        %vm2732 = vmand %vm2731, %vm290
        %v2733 = vld [vmem:[%s2730] sm:$0xf]
        %v2734 = vsel %vm2732, %v2416, %v2733
        %2735 = vst [vmem:[%s2730] sm:$0xf] %v2734
        %2736 = vst.msk [vmem:[%s2730 + $0x4] sm:$0xf] %vm2194, %v2425
        %v2737 = vld [vmem:[%s2730 + $0x8] sm:$0x1]
        %v2738 = vsel %vm2204, %v2426, %v2737
        %2739 = vst [vmem:[%s2730 + $0x8] sm:$0x1] %v2738
        %v2740 = vld [vmem:[%s2730 + $0xc] sm:$0xf]
        %v2741 = vsel %vm2732, %v2433, %v2740
        %2742 = vst [vmem:[%s2730 + $0xc] sm:$0xf] %v2741
        %2743 = vst.msk [vmem:[%s2730 + $0x10] sm:$0xf] %vm2194, %v2442
        %v2744 = vld [vmem:[%s2730 + $0x14] sm:$0x1]
        %v2745 = vsel %vm2204, %v2443, %v2744
        %2746 = vst [vmem:[%s2730 + $0x14] sm:$0x1] %v2745
        %v2747 = vld [vmem:[%s2730 + $0x18] sm:$0xf]
        %v2748 = vsel %vm2732, %v2450, %v2747
        %2749 = vst [vmem:[%s2730 + $0x18] sm:$0xf] %v2748
        %2750 = vst.msk [vmem:[%s2730 + $0x1c] sm:$0xf] %vm2194, %v2459
        %v2751 = vld [vmem:[%s2730 + $0x20] sm:$0x1]
        %v2752 = vsel %vm2204, %v2460, %v2751
        %2753 = vst [vmem:[%s2730 + $0x20] sm:$0x1] %v2752
        %v2754 = vld [vmem:[%s2730 + $0x24] sm:$0xf]
        %v2755 = vsel %vm2732, %v2467, %v2754
        %2756 = vst [vmem:[%s2730 + $0x24] sm:$0xf] %v2755
        %2757 = vst.msk [vmem:[%s2730 + $0x28] sm:$0xf] %vm2194, %v2476
        %v2758 = vld [vmem:[%s2730 + $0x2c] sm:$0x1]
        %v2759 = vsel %vm2204, %v2477, %v2758
        %2760 = vst [vmem:[%s2730 + $0x2c] sm:$0x1] %v2759
        %v2761 = vld [vmem:[%s2730 + $0x30] sm:$0xf]
        %v2762 = vsel %vm2732, %v2484, %v2761
        %2763 = vst [vmem:[%s2730 + $0x30] sm:$0xf] %v2762
        %2764 = vst.msk [vmem:[%s2730 + $0x34] sm:$0xf] %vm2194, %v2493
        %v2765 = vld [vmem:[%s2730 + $0x38] sm:$0x1]
        %v2766 = vsel %vm2204, %v2494, %v2765
        %2767 = vst [vmem:[%s2730 + $0x38] sm:$0x1] %v2766
        %v2768 = vld [vmem:[%s2730 + $0x3c] sm:$0xf]
        %v2769 = vsel %vm2732, %v2501, %v2768
        %2770 = vst [vmem:[%s2730 + $0x3c] sm:$0xf] %v2769
        %2771 = vst.msk [vmem:[%s2730 + $0x40] sm:$0xf] %vm2194, %v2510
        %v2772 = vld [vmem:[%s2730 + $0x44] sm:$0x1]
        %v2773 = vsel %vm2204, %v2511, %v2772
        %2774 = vst [vmem:[%s2730 + $0x44] sm:$0x1] %v2773
        %v2775 = vld [vmem:[%s2730 + $0x48] sm:$0xf]
        %v2776 = vsel %vm2732, %v2518, %v2775
        %2777 = vst [vmem:[%s2730 + $0x48] sm:$0xf] %v2776
        %2778 = vst.msk [vmem:[%s2730 + $0x4c] sm:$0xf] %vm2194, %v2527
        %v2779 = vld [vmem:[%s2730 + $0x50] sm:$0x1]
        %v2780 = vsel %vm2204, %v2528, %v2779
        %2781 = vst [vmem:[%s2730 + $0x50] sm:$0x1] %v2780
        %v2782 = vld [vmem:[%s2730 + $0x54] sm:$0xf]
        %v2783 = vsel %vm2732, %v2535, %v2782
        %2784 = vst [vmem:[%s2730 + $0x54] sm:$0xf] %v2783
        %2785 = vst.msk [vmem:[%s2730 + $0x58] sm:$0xf] %vm2194, %v2544
        %v2786 = vld [vmem:[%s2730 + $0x5c] sm:$0x1]
        %v2787 = vsel %vm2204, %v2545, %v2786
        %2788 = vst [vmem:[%s2730 + $0x5c] sm:$0x1] %v2787
        %v2789 = vld [vmem:[%s2730 + $0x60] sm:$0xf]
        %v2790 = vsel %vm2732, %v2552, %v2789
        %2791 = vst [vmem:[%s2730 + $0x60] sm:$0xf] %v2790
        %2792 = vst.msk [vmem:[%s2730 + $0x64] sm:$0xf] %vm2194, %v2561
        %v2793 = vld [vmem:[%s2730 + $0x68] sm:$0x1]
        %v2794 = vsel %vm2204, %v2562, %v2793
        %2795 = vst [vmem:[%s2730 + $0x68] sm:$0x1] %v2794
        %v2796 = vld [vmem:[%s2730 + $0x6c] sm:$0xf]
        %v2797 = vsel %vm2732, %v2569, %v2796
        %2798 = vst [vmem:[%s2730 + $0x6c] sm:$0xf] %v2797
        %2799 = vst.msk [vmem:[%s2730 + $0x70] sm:$0xf] %vm2194, %v2578
        %v2800 = vld [vmem:[%s2730 + $0x74] sm:$0x1]
        %v2801 = vsel %vm2204, %v2579, %v2800
        %2802 = vst [vmem:[%s2730 + $0x74] sm:$0x1] %v2801
        %v2803 = vld [vmem:[%s2730 + $0x78] sm:$0xf]
        %v2804 = vsel %vm2732, %v2586, %v2803
        %2805 = vst [vmem:[%s2730 + $0x78] sm:$0xf] %v2804
        %2806 = vst.msk [vmem:[%s2730 + $0x7c] sm:$0xf] %vm2194, %v2595
        %v2807 = vld [vmem:[%s2730 + $0x80] sm:$0x1]
        %v2808 = vsel %vm2204, %v2596, %v2807
        %2809 = vst [vmem:[%s2730 + $0x80] sm:$0x1] %v2808
        %v2810 = vld [vmem:[%s2730 + $0x84] sm:$0xf]
        %v2811 = vsel %vm2732, %v2603, %v2810
        %2812 = vst [vmem:[%s2730 + $0x84] sm:$0xf] %v2811
        %2813 = vst.msk [vmem:[%s2730 + $0x88] sm:$0xf] %vm2194, %v2612
        %v2814 = vld [vmem:[%s2730 + $0x8c] sm:$0x1]
        %v2815 = vsel %vm2204, %v2613, %v2814
        %2816 = vst [vmem:[%s2730 + $0x8c] sm:$0x1] %v2815
        %v2817 = vld [vmem:[%s2730 + $0x90] sm:$0xf]
        %v2818 = vsel %vm2732, %v2620, %v2817
        %2819 = vst [vmem:[%s2730 + $0x90] sm:$0xf] %v2818
        %2820 = vst.msk [vmem:[%s2730 + $0x94] sm:$0xf] %vm2194, %v2629
        %v2821 = vld [vmem:[%s2730 + $0x98] sm:$0x1]
        %v2822 = vsel %vm2204, %v2630, %v2821
        %2823 = vst [vmem:[%s2730 + $0x98] sm:$0x1] %v2822
        %v2824 = vld [vmem:[%s2730 + $0x9c] sm:$0xf]
        %v2825 = vsel %vm2732, %v2637, %v2824
        %2826 = vst [vmem:[%s2730 + $0x9c] sm:$0xf] %v2825
        %2827 = vst.msk [vmem:[%s2730 + $0xa0] sm:$0xf] %vm2194, %v2646
        %v2828 = vld [vmem:[%s2730 + $0xa4] sm:$0x1]
        %v2829 = vsel %vm2204, %v2647, %v2828
        %2830 = vst [vmem:[%s2730 + $0xa4] sm:$0x1] %v2829
        %v2831 = vld [vmem:[%s2730 + $0xa8] sm:$0xf]
        %v2832 = vsel %vm2732, %v2654, %v2831
        %2833 = vst [vmem:[%s2730 + $0xa8] sm:$0xf] %v2832
        %2834 = vst.msk [vmem:[%s2730 + $0xac] sm:$0xf] %vm2194, %v2663
        %v2835 = vld [vmem:[%s2730 + $0xb0] sm:$0x1]
        %v2836 = vsel %vm2204, %v2664, %v2835
        %2837 = vst [vmem:[%s2730 + $0xb0] sm:$0x1] %v2836
        %v2838 = vld [vmem:[%s2730 + $0xb4] sm:$0xf]
        %v2839 = vsel %vm2732, %v2671, %v2838
        %2840 = vst [vmem:[%s2730 + $0xb4] sm:$0xf] %v2839
        %2841 = vst.msk [vmem:[%s2730 + $0xb8] sm:$0xf] %vm2194, %v2680
        %v2842 = vld [vmem:[%s2730 + $0xbc] sm:$0x1]
        %v2843 = vsel %vm2204, %v2681, %v2842
        %2844 = vst [vmem:[%s2730 + $0xbc] sm:$0x1] %v2843
        %v2845 = vld [vmem:[#allocation3] sm:$0xf]
        %v2846 = vld [vmem:[#allocation3 + $0x4] sm:$0xf]
        %v2847 = vld [vmem:[#allocation3 + $0x8] sm:$0x1]
        %v2848 = vld [vmem:[#allocation3 + $0xc] sm:$0xf]
        %v2849 = vld [vmem:[#allocation3 + $0x10] sm:$0xf]
        %v2850 = vld [vmem:[#allocation3 + $0x14] sm:$0x1]
        %v2851 = vld [vmem:[#allocation3 + $0x18] sm:$0xf]
        %v2852 = vld [vmem:[#allocation3 + $0x1c] sm:$0xf]
        %v2853 = vld [vmem:[#allocation3 + $0x20] sm:$0x1]
        %v2854 = vld [vmem:[#allocation3 + $0x24] sm:$0xf]
        %v2855 = vld [vmem:[#allocation3 + $0x28] sm:$0xf]
        %v2856 = vld [vmem:[#allocation3 + $0x2c] sm:$0x1]
        %v2857 = vld [vmem:[#allocation3 + $0x30] sm:$0xf]
        %v2858 = vld [vmem:[#allocation3 + $0x34] sm:$0xf]
        %v2859 = vld [vmem:[#allocation3 + $0x38] sm:$0x1]
        %v2860 = vld [vmem:[#allocation3 + $0x3c] sm:$0xf]
        %v2861 = vld [vmem:[#allocation3 + $0x40] sm:$0xf]
        %v2862 = vld [vmem:[#allocation3 + $0x44] sm:$0x1]
        %v2863 = vld [vmem:[#allocation3 + $0x48] sm:$0xf]
        %v2864 = vld [vmem:[#allocation3 + $0x4c] sm:$0xf]
        %v2865 = vld [vmem:[#allocation3 + $0x50] sm:$0x1]
        %v2866 = vld [vmem:[#allocation3 + $0x54] sm:$0xf]
        %v2867 = vld [vmem:[#allocation3 + $0x58] sm:$0xf]
        %v2868 = vld [vmem:[#allocation3 + $0x5c] sm:$0x1]
        %v2869 = vld [vmem:[#allocation3 + $0x60] sm:$0xf]
        %v2870 = vld [vmem:[#allocation3 + $0x64] sm:$0xf]
        %v2871 = vld [vmem:[#allocation3 + $0x68] sm:$0x1]
        %v2872 = vld [vmem:[#allocation3 + $0x6c] sm:$0xf]
        %v2873 = vld [vmem:[#allocation3 + $0x70] sm:$0xf]
        %v2874 = vld [vmem:[#allocation3 + $0x74] sm:$0x1]
        %v2875 = vld [vmem:[#allocation3 + $0x78] sm:$0xf]
        %v2876 = vld [vmem:[#allocation3 + $0x7c] sm:$0xf]
        %v2877 = vld [vmem:[#allocation3 + $0x80] sm:$0x1]
        %v2878 = vld [vmem:[#allocation3 + $0x84] sm:$0xf]
        %v2879 = vld [vmem:[#allocation3 + $0x88] sm:$0xf]
        %v2880 = vld [vmem:[#allocation3 + $0x8c] sm:$0x1]
        %v2881 = vld [vmem:[#allocation3 + $0x90] sm:$0xf]
        %v2882 = vld [vmem:[#allocation3 + $0x94] sm:$0xf]
        %v2883 = vld [vmem:[#allocation3 + $0x98] sm:$0x1]
        %v2884 = vld [vmem:[#allocation3 + $0x9c] sm:$0xf]
        %v2885 = vld [vmem:[#allocation3 + $0xa0] sm:$0xf]
        %v2886 = vld [vmem:[#allocation3 + $0xa4] sm:$0x1]
        %v2887 = vld [vmem:[#allocation3 + $0xa8] sm:$0xf]
        %v2888 = vld [vmem:[#allocation3 + $0xac] sm:$0xf]
        %v2889 = vld [vmem:[#allocation3 + $0xb0] sm:$0x1]
        %v2890 = vld [vmem:[#allocation3 + $0xb4] sm:$0xf]
        %v2891 = vld [vmem:[#allocation3 + $0xb8] sm:$0xf]
        %v2892 = vld [vmem:[#allocation3 + $0xbc] sm:$0x1]
        %v2893 = vld [vmem:[#allocation3 + $0xc0] sm:$0xf]
        %v2894 = vld [vmem:[#allocation3 + $0xc4] sm:$0xf]
        %v2895 = vld [vmem:[#allocation3 + $0xc8] sm:$0x1]
        %v2896 = vld [vmem:[#allocation3 + $0xcc] sm:$0xf]
        %v2897 = vld [vmem:[#allocation3 + $0xd0] sm:$0xf]
        %v2898 = vld [vmem:[#allocation3 + $0xd4] sm:$0x1]
        %v2931 = vunpack.c.l.b16 %v2845
        %v2932 = vunpack.c.l.b16 %v2846
        %v2933 = vunpack.c.l.b16 %v2848
        %v2934 = vunpack.c.l.b16 %v2849
        %v2935 = vunpack.c.l.b16 %v2851
        %v2936 = vunpack.c.l.b16 %v2852
        %v2937 = vunpack.c.l.b16 %v2854
        %v2938 = vunpack.c.l.b16 %v2855
        %v2939 = vunpack.c.l.b16 %v2857
        %v2940 = vunpack.c.l.b16 %v2858
        %v2941 = vunpack.c.l.b16 %v2860
        %v2942 = vunpack.c.l.b16 %v2861
        %v2943 = vunpack.c.l.b16 %v2863
        %v2944 = vunpack.c.l.b16 %v2864
        %v2945 = vunpack.c.l.b16 %v2866
        %v2946 = vunpack.c.l.b16 %v2867
        %v2947 = vunpack.c.l.b16 %v2869
        %v2948 = vunpack.c.l.b16 %v2870
        %v2949 = vunpack.c.l.b16 %v2872
        %v2950 = vunpack.c.l.b16 %v2873
        %v2951 = vunpack.c.l.b16 %v2875
        %v2952 = vunpack.c.l.b16 %v2876
        %v2953 = vunpack.c.l.b16 %v2878
        %v2954 = vunpack.c.l.b16 %v2879
        %v2955 = vunpack.c.l.b16 %v2881
        %v2956 = vunpack.c.l.b16 %v2882
        %v2957 = vunpack.c.l.b16 %v2884
        %v2958 = vunpack.c.l.b16 %v2885
        %v2959 = vunpack.c.l.b16 %v2887
        %v2960 = vunpack.c.l.b16 %v2888
        %v2961 = vunpack.c.l.b16 %v2890
        %v2962 = vunpack.c.l.b16 %v2891
        %v2963 = vpack.c.b16 %v2932, %v2931
        %v2964 = vpack.c.b16 %v2934, %v2933
        %v2965 = vpack.c.b16 %v2936, %v2935
        %v2966 = vpack.c.b16 %v2938, %v2937
        %v2967 = vpack.c.b16 %v2940, %v2939
        %v2968 = vpack.c.b16 %v2942, %v2941
        %v2969 = vpack.c.b16 %v2944, %v2943
        %v2970 = vpack.c.b16 %v2946, %v2945
        %v2971 = vpack.c.b16 %v2948, %v2947
        %v2972 = vpack.c.b16 %v2950, %v2949
        %v2973 = vpack.c.b16 %v2952, %v2951
        %v2974 = vpack.c.b16 %v2954, %v2953
        %v2975 = vpack.c.b16 %v2956, %v2955
        %v2976 = vpack.c.b16 %v2958, %v2957
        %v2977 = vpack.c.b16 %v2960, %v2959
        %v2978 = vpack.c.b16 %v2962, %v2961
        %v2995 = vunpack.c.l.b16 %v2847
        %v2996 = vunpack.c.l.b16 %v2850
        %v2997 = vunpack.c.l.b16 %v2853
        %v2998 = vunpack.c.l.b16 %v2856
        %v2999 = vunpack.c.l.b16 %v2859
        %v3000 = vunpack.c.l.b16 %v2862
        %v3001 = vunpack.c.l.b16 %v2865
        %v3002 = vunpack.c.l.b16 %v2868
        %v3003 = vunpack.c.l.b16 %v2871
        %v3004 = vunpack.c.l.b16 %v2874
        %v3005 = vunpack.c.l.b16 %v2877
        %v3006 = vunpack.c.l.b16 %v2880
        %v3007 = vunpack.c.l.b16 %v2883
        %v3008 = vunpack.c.l.b16 %v2886
        %v3009 = vunpack.c.l.b16 %v2889
        %v3010 = vunpack.c.l.b16 %v2892
        %v3011 = vpack.c.b16 %v2995, %v2995
        %v3012 = vpack.c.b16 %v2996, %v2996
        %v3013 = vpack.c.b16 %v2997, %v2997
        %v3014 = vpack.c.b16 %v2998, %v2998
        %v3015 = vpack.c.b16 %v2999, %v2999
        %v3016 = vpack.c.b16 %v3000, %v3000
        %v3017 = vpack.c.b16 %v3001, %v3001
        %v3018 = vpack.c.b16 %v3002, %v3002
        %v3019 = vpack.c.b16 %v3003, %v3003
        %v3020 = vpack.c.b16 %v3004, %v3004
        %v3021 = vpack.c.b16 %v3005, %v3005
        %v3022 = vpack.c.b16 %v3006, %v3006
        %v3023 = vpack.c.b16 %v3007, %v3007
        %v3024 = vpack.c.b16 %v3008, %v3008
        %v3025 = vpack.c.b16 %v3009, %v3009
        %v3026 = vpack.c.b16 %v3010, %v3010
        %v3028 = vshrl.u32 %v2963, 16
        %v3030 = vshll.u32 %v2963, 16
        %v3032 = vrot.slane %v3030, 1
        %v3033 = vor.u32 %v3028, %v3032
        %v3035 = vshll.u32 %v3011, 16
        %v3037 = vrot.slane %v3035, 1
        %v3038 = vsel %vm1129, %v3033, %v3037
        %v3040 = vshrl.u32 %v2964, 16
        %v3042 = vshll.u32 %v2964, 16
        %v3044 = vrot.slane %v3042, 1
        %v3045 = vor.u32 %v3040, %v3044
        %v3047 = vshll.u32 %v3012, 16
        %v3049 = vrot.slane %v3047, 1
        %v3050 = vsel %vm1129, %v3045, %v3049
        %v3052 = vshrl.u32 %v2965, 16
        %v3054 = vshll.u32 %v2965, 16
        %v3056 = vrot.slane %v3054, 1
        %v3057 = vor.u32 %v3052, %v3056
        %v3059 = vshll.u32 %v3013, 16
        %v3061 = vrot.slane %v3059, 1
        %v3062 = vsel %vm1129, %v3057, %v3061
        %v3064 = vshrl.u32 %v2966, 16
        %v3066 = vshll.u32 %v2966, 16
        %v3068 = vrot.slane %v3066, 1
        %v3069 = vor.u32 %v3064, %v3068
        %v3071 = vshll.u32 %v3014, 16
        %v3073 = vrot.slane %v3071, 1
        %v3074 = vsel %vm1129, %v3069, %v3073
        %v3076 = vshrl.u32 %v2967, 16
        %v3078 = vshll.u32 %v2967, 16
        %v3080 = vrot.slane %v3078, 1
        %v3081 = vor.u32 %v3076, %v3080
        %v3083 = vshll.u32 %v3015, 16
        %v3085 = vrot.slane %v3083, 1
        %v3086 = vsel %vm1129, %v3081, %v3085
        %v3088 = vshrl.u32 %v2968, 16
        %v3090 = vshll.u32 %v2968, 16
        %v3092 = vrot.slane %v3090, 1
        %v3093 = vor.u32 %v3088, %v3092
        %v3095 = vshll.u32 %v3016, 16
        %v3097 = vrot.slane %v3095, 1
        %v3098 = vsel %vm1129, %v3093, %v3097
        %v3100 = vshrl.u32 %v2969, 16
        %v3102 = vshll.u32 %v2969, 16
        %v3104 = vrot.slane %v3102, 1
        %v3105 = vor.u32 %v3100, %v3104
        %v3107 = vshll.u32 %v3017, 16
        %v3109 = vrot.slane %v3107, 1
        %v3110 = vsel %vm1129, %v3105, %v3109
        %v3112 = vshrl.u32 %v2970, 16
        %v3114 = vshll.u32 %v2970, 16
        %v3116 = vrot.slane %v3114, 1
        %v3117 = vor.u32 %v3112, %v3116
        %v3119 = vshll.u32 %v3018, 16
        %v3121 = vrot.slane %v3119, 1
        %v3122 = vsel %vm1129, %v3117, %v3121
        %v3124 = vshrl.u32 %v2971, 16
        %v3126 = vshll.u32 %v2971, 16
        %v3128 = vrot.slane %v3126, 1
        %v3129 = vor.u32 %v3124, %v3128
        %v3131 = vshll.u32 %v3019, 16
        %v3133 = vrot.slane %v3131, 1
        %v3134 = vsel %vm1129, %v3129, %v3133
        %v3136 = vshrl.u32 %v2972, 16
        %v3138 = vshll.u32 %v2972, 16
        %v3140 = vrot.slane %v3138, 1
        %v3141 = vor.u32 %v3136, %v3140
        %v3143 = vshll.u32 %v3020, 16
        %v3145 = vrot.slane %v3143, 1
        %v3146 = vsel %vm1129, %v3141, %v3145
        %v3148 = vshrl.u32 %v2973, 16
        %v3150 = vshll.u32 %v2973, 16
        %v3152 = vrot.slane %v3150, 1
        %v3153 = vor.u32 %v3148, %v3152
        %v3155 = vshll.u32 %v3021, 16
        %v3157 = vrot.slane %v3155, 1
        %v3158 = vsel %vm1129, %v3153, %v3157
        %v3160 = vshrl.u32 %v2974, 16
        %v3162 = vshll.u32 %v2974, 16
        %v3164 = vrot.slane %v3162, 1
        %v3165 = vor.u32 %v3160, %v3164
        %v3167 = vshll.u32 %v3022, 16
        %v3169 = vrot.slane %v3167, 1
        %v3170 = vsel %vm1129, %v3165, %v3169
        %v3172 = vshrl.u32 %v2975, 16
        %v3174 = vshll.u32 %v2975, 16
        %v3176 = vrot.slane %v3174, 1
        %v3177 = vor.u32 %v3172, %v3176
        %v3179 = vshll.u32 %v3023, 16
        %v3181 = vrot.slane %v3179, 1
        %v3182 = vsel %vm1129, %v3177, %v3181
        %v3184 = vshrl.u32 %v2976, 16
        %v3186 = vshll.u32 %v2976, 16
        %v3188 = vrot.slane %v3186, 1
        %v3189 = vor.u32 %v3184, %v3188
        %v3191 = vshll.u32 %v3024, 16
        %v3193 = vrot.slane %v3191, 1
        %v3194 = vsel %vm1129, %v3189, %v3193
        %v3196 = vshrl.u32 %v2977, 16
        %v3198 = vshll.u32 %v2977, 16
        %v3200 = vrot.slane %v3198, 1
        %v3201 = vor.u32 %v3196, %v3200
        %v3203 = vshll.u32 %v3025, 16
        %v3205 = vrot.slane %v3203, 1
        %v3206 = vsel %vm1129, %v3201, %v3205
        %v3208 = vshrl.u32 %v2978, 16
        %v3210 = vshll.u32 %v2978, 16
        %v3212 = vrot.slane %v3210, 1
        %v3213 = vor.u32 %v3208, %v3212
        %v3215 = vshll.u32 %v3026, 16
        %v3217 = vrot.slane %v3215, 1
        %v3218 = vsel %vm1129, %v3213, %v3217
        %3219 = vrot.lane.b32.xlu0 %v3038, 8
        %v3220 = vpop.permute.xlu0 %3219
        %3221 = vrot.lane.b32.xlu0 %v3050, 8
        %v3222 = vpop.permute.xlu0 %3221
        %3223 = vrot.lane.b32.xlu0 %v3062, 8
        %v3224 = vpop.permute.xlu0 %3223
        %3225 = vrot.lane.b32.xlu0 %v3074, 8
        %v3226 = vpop.permute.xlu0 %3225
        %3227 = vrot.lane.b32.xlu0 %v3086, 8
        %v3228 = vpop.permute.xlu0 %3227
        %3229 = vrot.lane.b32.xlu0 %v3098, 8
        %v3230 = vpop.permute.xlu0 %3229
        %3231 = vrot.lane.b32.xlu0 %v3110, 8
        %v3232 = vpop.permute.xlu0 %3231
        %3233 = vrot.lane.b32.xlu0 %v3122, 8
        %v3234 = vpop.permute.xlu0 %3233
        %3235 = vrot.lane.b32.xlu0 %v3134, 8
        %v3236 = vpop.permute.xlu0 %3235
        %3237 = vrot.lane.b32.xlu0 %v3146, 8
        %v3238 = vpop.permute.xlu0 %3237
        %3239 = vrot.lane.b32.xlu0 %v3158, 8
        %v3240 = vpop.permute.xlu0 %3239
        %3241 = vrot.lane.b32.xlu0 %v3170, 8
        %v3242 = vpop.permute.xlu0 %3241
        %3243 = vrot.lane.b32.xlu0 %v3182, 8
        %v3244 = vpop.permute.xlu0 %3243
        %3245 = vrot.lane.b32.xlu0 %v3194, 8
        %v3246 = vpop.permute.xlu0 %3245
        %3247 = vrot.lane.b32.xlu0 %v3206, 8
        %v3248 = vpop.permute.xlu0 %3247
        %3249 = vrot.lane.b32.xlu0 %v3218, 8
        %v3250 = vpop.permute.xlu0 %3249
        %v3251 = vrot.slane %v2963, 1
        %v3252 = vrot.slane %v3011, 1
        %v3253 = vsel %vm1354, %v3251, %v3252
        %v3254 = vrot.slane %v2964, 1
        %v3255 = vrot.slane %v3012, 1
        %v3256 = vsel %vm1354, %v3254, %v3255
        %v3257 = vrot.slane %v2965, 1
        %v3258 = vrot.slane %v3013, 1
        %v3259 = vsel %vm1354, %v3257, %v3258
        %v3260 = vrot.slane %v2966, 1
        %v3261 = vrot.slane %v3014, 1
        %v3262 = vsel %vm1354, %v3260, %v3261
        %v3263 = vrot.slane %v2967, 1
        %v3264 = vrot.slane %v3015, 1
        %v3265 = vsel %vm1354, %v3263, %v3264
        %v3266 = vrot.slane %v2968, 1
        %v3267 = vrot.slane %v3016, 1
        %v3268 = vsel %vm1354, %v3266, %v3267
        %v3269 = vrot.slane %v2969, 1
        %v3270 = vrot.slane %v3017, 1
        %v3271 = vsel %vm1354, %v3269, %v3270
        %v3272 = vrot.slane %v2970, 1
        %v3273 = vrot.slane %v3018, 1
        %v3274 = vsel %vm1354, %v3272, %v3273
        %v3275 = vrot.slane %v2971, 1
        %v3276 = vrot.slane %v3019, 1
        %v3277 = vsel %vm1354, %v3275, %v3276
        %v3278 = vrot.slane %v2972, 1
        %v3279 = vrot.slane %v3020, 1
        %v3280 = vsel %vm1354, %v3278, %v3279
        %v3281 = vrot.slane %v2973, 1
        %v3282 = vrot.slane %v3021, 1
        %v3283 = vsel %vm1354, %v3281, %v3282
        %v3284 = vrot.slane %v2974, 1
        %v3285 = vrot.slane %v3022, 1
        %v3286 = vsel %vm1354, %v3284, %v3285
        %v3287 = vrot.slane %v2975, 1
        %v3288 = vrot.slane %v3023, 1
        %v3289 = vsel %vm1354, %v3287, %v3288
        %v3290 = vrot.slane %v2976, 1
        %v3291 = vrot.slane %v3024, 1
        %v3292 = vsel %vm1354, %v3290, %v3291
        %v3293 = vrot.slane %v2977, 1
        %v3294 = vrot.slane %v3025, 1
        %v3295 = vsel %vm1354, %v3293, %v3294
        %v3296 = vrot.slane %v2978, 1
        %v3297 = vrot.slane %v3026, 1
        %v3298 = vsel %vm1354, %v3296, %v3297
        %3299 = vrot.lane.b32.xlu0 %v3253, 16
        %v3300 = vpop.permute.xlu0 %3299
        %3301 = vrot.lane.b32.xlu0 %v3256, 16
        %v3302 = vpop.permute.xlu0 %3301
        %3303 = vrot.lane.b32.xlu0 %v3259, 16
        %v3304 = vpop.permute.xlu0 %3303
        %3305 = vrot.lane.b32.xlu0 %v3262, 16
        %v3306 = vpop.permute.xlu0 %3305
        %3307 = vrot.lane.b32.xlu0 %v3265, 16
        %v3308 = vpop.permute.xlu0 %3307
        %3309 = vrot.lane.b32.xlu0 %v3268, 16
        %v3310 = vpop.permute.xlu0 %3309
        %3311 = vrot.lane.b32.xlu0 %v3271, 16
        %v3312 = vpop.permute.xlu0 %3311
        %3313 = vrot.lane.b32.xlu0 %v3274, 16
        %v3314 = vpop.permute.xlu0 %3313
        %3315 = vrot.lane.b32.xlu0 %v3277, 16
        %v3316 = vpop.permute.xlu0 %3315
        %3317 = vrot.lane.b32.xlu0 %v3280, 16
        %v3318 = vpop.permute.xlu0 %3317
        %3319 = vrot.lane.b32.xlu0 %v3283, 16
        %v3320 = vpop.permute.xlu0 %3319
        %3321 = vrot.lane.b32.xlu0 %v3286, 16
        %v3322 = vpop.permute.xlu0 %3321
        %3323 = vrot.lane.b32.xlu0 %v3289, 16
        %v3324 = vpop.permute.xlu0 %3323
        %3325 = vrot.lane.b32.xlu0 %v3292, 16
        %v3326 = vpop.permute.xlu0 %3325
        %3327 = vrot.lane.b32.xlu0 %v3295, 16
        %v3328 = vpop.permute.xlu0 %3327
        %3329 = vrot.lane.b32.xlu0 %v3298, 16
        %v3330 = vpop.permute.xlu0 %3329
        %v3333 = vunpack.c.l.b16 %v2893
        %v3334 = vunpack.c.l.b16 %v2894
        %v3335 = vpack.c.b16 %v3334, %v3333
        %3336 = vrot.lane.b32.xlu0 %v2964, 24
        %v3337 = vpop.permute.xlu0 %3336
        %3338 = vrot.lane.b32.xlu0 %v2965, 24
        %v3339 = vpop.permute.xlu0 %3338
        %3340 = vrot.lane.b32.xlu0 %v2966, 24
        %v3341 = vpop.permute.xlu0 %3340
        %3342 = vrot.lane.b32.xlu0 %v2967, 24
        %v3343 = vpop.permute.xlu0 %3342
        %3344 = vrot.lane.b32.xlu0 %v2968, 24
        %v3345 = vpop.permute.xlu0 %3344
        %3346 = vrot.lane.b32.xlu0 %v2969, 24
        %v3347 = vpop.permute.xlu0 %3346
        %3348 = vrot.lane.b32.xlu0 %v2970, 24
        %v3349 = vpop.permute.xlu0 %3348
        %3350 = vrot.lane.b32.xlu0 %v2971, 24
        %v3351 = vpop.permute.xlu0 %3350
        %3352 = vrot.lane.b32.xlu0 %v2972, 24
        %v3353 = vpop.permute.xlu0 %3352
        %3354 = vrot.lane.b32.xlu0 %v2973, 24
        %v3355 = vpop.permute.xlu0 %3354
        %3356 = vrot.lane.b32.xlu0 %v2974, 24
        %v3357 = vpop.permute.xlu0 %3356
        %3358 = vrot.lane.b32.xlu0 %v2975, 24
        %v3359 = vpop.permute.xlu0 %3358
        %3360 = vrot.lane.b32.xlu0 %v2976, 24
        %v3361 = vpop.permute.xlu0 %3360
        %3362 = vrot.lane.b32.xlu0 %v2977, 24
        %v3363 = vpop.permute.xlu0 %3362
        %3364 = vrot.lane.b32.xlu0 %v2978, 24
        %v3365 = vpop.permute.xlu0 %3364
        %3366 = vrot.lane.b32.xlu0 %v3335, 24
        %v3367 = vpop.permute.xlu0 %3366
        %v3369 = vunpack.c.l.b16 %v2895
        %v3370 = vpack.c.b16 %v3369, %v3369
        %v3372 = vshrl.u32 %v3335, 16
        %v3374 = vshll.u32 %v3335, 16
        %v3376 = vrot.slane %v3374, 1
        %v3377 = vor.u32 %v3372, %v3376
        %v3379 = vshll.u32 %v3370, 16
        %v3381 = vrot.slane %v3379, 1
        %v3382 = vsel %vm1129, %v3377, %v3381
        %3383 = vrot.lane.b32.xlu0 %v3050, 32
        %v3384 = vpop.permute.xlu0 %3383
        %3385 = vrot.lane.b32.xlu0 %v3062, 32
        %v3386 = vpop.permute.xlu0 %3385
        %3387 = vrot.lane.b32.xlu0 %v3074, 32
        %v3388 = vpop.permute.xlu0 %3387
        %3389 = vrot.lane.b32.xlu0 %v3086, 32
        %v3390 = vpop.permute.xlu0 %3389
        %3391 = vrot.lane.b32.xlu0 %v3098, 32
        %v3392 = vpop.permute.xlu0 %3391
        %3393 = vrot.lane.b32.xlu0 %v3110, 32
        %v3394 = vpop.permute.xlu0 %3393
        %3395 = vrot.lane.b32.xlu0 %v3122, 32
        %v3396 = vpop.permute.xlu0 %3395
        %3397 = vrot.lane.b32.xlu0 %v3134, 32
        %v3398 = vpop.permute.xlu0 %3397
        %3399 = vrot.lane.b32.xlu0 %v3146, 32
        %v3400 = vpop.permute.xlu0 %3399
        %3401 = vrot.lane.b32.xlu0 %v3158, 32
        %v3402 = vpop.permute.xlu0 %3401
        %3403 = vrot.lane.b32.xlu0 %v3170, 32
        %v3404 = vpop.permute.xlu0 %3403
        %3405 = vrot.lane.b32.xlu0 %v3182, 32
        %v3406 = vpop.permute.xlu0 %3405
        %3407 = vrot.lane.b32.xlu0 %v3194, 32
        %v3408 = vpop.permute.xlu0 %3407
        %3409 = vrot.lane.b32.xlu0 %v3206, 32
        %v3410 = vpop.permute.xlu0 %3409
        %3411 = vrot.lane.b32.xlu0 %v3218, 32
        %v3412 = vpop.permute.xlu0 %3411
        %3413 = vrot.lane.b32.xlu0 %v3382, 32
        %v3414 = vpop.permute.xlu0 %3413
        %v3415 = vrot.slane %v3335, 1
        %v3416 = vrot.slane %v3370, 1
        %v3417 = vsel %vm1354, %v3415, %v3416
        %3418 = vrot.lane.b32.xlu0 %v3256, 40
        %v3419 = vpop.permute.xlu0 %3418
        %3420 = vrot.lane.b32.xlu0 %v3259, 40
        %v3421 = vpop.permute.xlu0 %3420
        %3422 = vrot.lane.b32.xlu0 %v3262, 40
        %v3423 = vpop.permute.xlu0 %3422
        %3424 = vrot.lane.b32.xlu0 %v3265, 40
        %v3425 = vpop.permute.xlu0 %3424
        %3426 = vrot.lane.b32.xlu0 %v3268, 40
        %v3427 = vpop.permute.xlu0 %3426
        %3428 = vrot.lane.b32.xlu0 %v3271, 40
        %v3429 = vpop.permute.xlu0 %3428
        %3430 = vrot.lane.b32.xlu0 %v3274, 40
        %v3431 = vpop.permute.xlu0 %3430
        %3432 = vrot.lane.b32.xlu0 %v3277, 40
        %v3433 = vpop.permute.xlu0 %3432
        %3434 = vrot.lane.b32.xlu0 %v3280, 40
        %v3435 = vpop.permute.xlu0 %3434
        %3436 = vrot.lane.b32.xlu0 %v3283, 40
        %v3437 = vpop.permute.xlu0 %3436
        %3438 = vrot.lane.b32.xlu0 %v3286, 40
        %v3439 = vpop.permute.xlu0 %3438
        %3440 = vrot.lane.b32.xlu0 %v3289, 40
        %v3441 = vpop.permute.xlu0 %3440
        %3442 = vrot.lane.b32.xlu0 %v3292, 40
        %v3443 = vpop.permute.xlu0 %3442
        %3444 = vrot.lane.b32.xlu0 %v3295, 40
        %v3445 = vpop.permute.xlu0 %3444
        %3446 = vrot.lane.b32.xlu0 %v3298, 40
        %v3447 = vpop.permute.xlu0 %3446
        %3448 = vrot.lane.b32.xlu0 %v3417, 40
        %v3449 = vpop.permute.xlu0 %3448
        %v3452 = vunpack.c.l.b16 %v2896
        %v3453 = vunpack.c.l.b16 %v2897
        %v3454 = vpack.c.b16 %v3453, %v3452
        %3455 = vrot.lane.b32.xlu0 %v2965, 48
        %v3456 = vpop.permute.xlu0 %3455
        %3457 = vrot.lane.b32.xlu0 %v2966, 48
        %v3458 = vpop.permute.xlu0 %3457
        %3459 = vrot.lane.b32.xlu0 %v2967, 48
        %v3460 = vpop.permute.xlu0 %3459
        %3461 = vrot.lane.b32.xlu0 %v2968, 48
        %v3462 = vpop.permute.xlu0 %3461
        %3463 = vrot.lane.b32.xlu0 %v2969, 48
        %v3464 = vpop.permute.xlu0 %3463
        %3465 = vrot.lane.b32.xlu0 %v2970, 48
        %v3466 = vpop.permute.xlu0 %3465
        %3467 = vrot.lane.b32.xlu0 %v2971, 48
        %v3468 = vpop.permute.xlu0 %3467
        %3469 = vrot.lane.b32.xlu0 %v2972, 48
        %v3470 = vpop.permute.xlu0 %3469
        %3471 = vrot.lane.b32.xlu0 %v2973, 48
        %v3472 = vpop.permute.xlu0 %3471
        %3473 = vrot.lane.b32.xlu0 %v2974, 48
        %v3474 = vpop.permute.xlu0 %3473
        %3475 = vrot.lane.b32.xlu0 %v2975, 48
        %v3476 = vpop.permute.xlu0 %3475
        %3477 = vrot.lane.b32.xlu0 %v2976, 48
        %v3478 = vpop.permute.xlu0 %3477
        %3479 = vrot.lane.b32.xlu0 %v2977, 48
        %v3480 = vpop.permute.xlu0 %3479
        %3481 = vrot.lane.b32.xlu0 %v2978, 48
        %v3482 = vpop.permute.xlu0 %3481
        %3483 = vrot.lane.b32.xlu0 %v3335, 48
        %v3484 = vpop.permute.xlu0 %3483
        %3485 = vrot.lane.b32.xlu0 %v3454, 48
        %v3486 = vpop.permute.xlu0 %3485
        %v3488 = vunpack.c.l.b16 %v2898
        %v3489 = vpack.c.b16 %v3488, %v3488
        %v3491 = vshrl.u32 %v3454, 16
        %v3493 = vshll.u32 %v3454, 16
        %v3495 = vrot.slane %v3493, 1
        %v3496 = vor.u32 %v3491, %v3495
        %v3498 = vshll.u32 %v3489, 16
        %v3500 = vrot.slane %v3498, 1
        %v3501 = vsel %vm1129, %v3496, %v3500
        %3502 = vrot.lane.b32.xlu0 %v3062, 56
        %v3503 = vpop.permute.xlu0 %3502
        %3504 = vrot.lane.b32.xlu0 %v3074, 56
        %v3505 = vpop.permute.xlu0 %3504
        %3506 = vrot.lane.b32.xlu0 %v3086, 56
        %v3507 = vpop.permute.xlu0 %3506
        %3508 = vrot.lane.b32.xlu0 %v3098, 56
        %v3509 = vpop.permute.xlu0 %3508
        %3510 = vrot.lane.b32.xlu0 %v3110, 56
        %v3511 = vpop.permute.xlu0 %3510
        %3512 = vrot.lane.b32.xlu0 %v3122, 56
        %v3513 = vpop.permute.xlu0 %3512
        %3514 = vrot.lane.b32.xlu0 %v3134, 56
        %v3515 = vpop.permute.xlu0 %3514
        %3516 = vrot.lane.b32.xlu0 %v3146, 56
        %v3517 = vpop.permute.xlu0 %3516
        %3518 = vrot.lane.b32.xlu0 %v3158, 56
        %v3519 = vpop.permute.xlu0 %3518
        %3520 = vrot.lane.b32.xlu0 %v3170, 56
        %v3521 = vpop.permute.xlu0 %3520
        %3522 = vrot.lane.b32.xlu0 %v3182, 56
        %v3523 = vpop.permute.xlu0 %3522
        %3524 = vrot.lane.b32.xlu0 %v3194, 56
        %v3525 = vpop.permute.xlu0 %3524
        %3526 = vrot.lane.b32.xlu0 %v3206, 56
        %v3527 = vpop.permute.xlu0 %3526
        %3528 = vrot.lane.b32.xlu0 %v3218, 56
        %v3529 = vpop.permute.xlu0 %3528
        %3530 = vrot.lane.b32.xlu0 %v3382, 56
        %v3531 = vpop.permute.xlu0 %3530
        %3532 = vrot.lane.b32.xlu0 %v3501, 56
        %v3533 = vpop.permute.xlu0 %3532
        %v3534 = vrot.slane %v3454, 1
        %v3535 = vrot.slane %v3489, 1
        %v3536 = vsel %vm1354, %v3534, %v3535
        %3537 = vrot.lane.b32.xlu0 %v3259, 64
        %v3538 = vpop.permute.xlu0 %3537
        %3539 = vrot.lane.b32.xlu0 %v3262, 64
        %v3540 = vpop.permute.xlu0 %3539
        %3541 = vrot.lane.b32.xlu0 %v3265, 64
        %v3542 = vpop.permute.xlu0 %3541
        %3543 = vrot.lane.b32.xlu0 %v3268, 64
        %v3544 = vpop.permute.xlu0 %3543
        %3545 = vrot.lane.b32.xlu0 %v3271, 64
        %v3546 = vpop.permute.xlu0 %3545
        %3547 = vrot.lane.b32.xlu0 %v3274, 64
        %v3548 = vpop.permute.xlu0 %3547
        %3549 = vrot.lane.b32.xlu0 %v3277, 64
        %v3550 = vpop.permute.xlu0 %3549
        %3551 = vrot.lane.b32.xlu0 %v3280, 64
        %v3552 = vpop.permute.xlu0 %3551
        %3553 = vrot.lane.b32.xlu0 %v3283, 64
        %v3554 = vpop.permute.xlu0 %3553
        %3555 = vrot.lane.b32.xlu0 %v3286, 64
        %v3556 = vpop.permute.xlu0 %3555
        %3557 = vrot.lane.b32.xlu0 %v3289, 64
        %v3558 = vpop.permute.xlu0 %3557
        %3559 = vrot.lane.b32.xlu0 %v3292, 64
        %v3560 = vpop.permute.xlu0 %3559
        %3561 = vrot.lane.b32.xlu0 %v3295, 64
        %v3562 = vpop.permute.xlu0 %3561
        %3563 = vrot.lane.b32.xlu0 %v3298, 64
        %v3564 = vpop.permute.xlu0 %3563
        %3565 = vrot.lane.b32.xlu0 %v3417, 64
        %v3566 = vpop.permute.xlu0 %3565
        %3567 = vrot.lane.b32.xlu0 %v3536, 64
        %v3568 = vpop.permute.xlu0 %3567
        %v3570 = vsel %vm1706, %v2963, %v3220
        %v3572 = vsel %vm1706, %v2964, %v3222
        %v3574 = vsel %vm1706, %v2965, %v3224
        %v3576 = vsel %vm1706, %v2966, %v3226
        %v3578 = vsel %vm1706, %v2967, %v3228
        %v3580 = vsel %vm1706, %v2968, %v3230
        %v3582 = vsel %vm1706, %v2969, %v3232
        %v3584 = vsel %vm1706, %v2970, %v3234
        %v3586 = vsel %vm1706, %v2971, %v3236
        %v3588 = vsel %vm1706, %v2972, %v3238
        %v3590 = vsel %vm1706, %v2973, %v3240
        %v3592 = vsel %vm1706, %v2974, %v3242
        %v3594 = vsel %vm1706, %v2975, %v3244
        %v3596 = vsel %vm1706, %v2976, %v3246
        %v3598 = vsel %vm1706, %v2977, %v3248
        %v3600 = vsel %vm1706, %v2978, %v3250
        %v3602 = vsel %vm1772, %v3570, %v3300
        %v3604 = vsel %vm1772, %v3572, %v3302
        %v3606 = vsel %vm1772, %v3574, %v3304
        %v3608 = vsel %vm1772, %v3576, %v3306
        %v3610 = vsel %vm1772, %v3578, %v3308
        %v3612 = vsel %vm1772, %v3580, %v3310
        %v3614 = vsel %vm1772, %v3582, %v3312
        %v3616 = vsel %vm1772, %v3584, %v3314
        %v3618 = vsel %vm1772, %v3586, %v3316
        %v3620 = vsel %vm1772, %v3588, %v3318
        %v3622 = vsel %vm1772, %v3590, %v3320
        %v3624 = vsel %vm1772, %v3592, %v3322
        %v3626 = vsel %vm1772, %v3594, %v3324
        %v3628 = vsel %vm1772, %v3596, %v3326
        %v3630 = vsel %vm1772, %v3598, %v3328
        %v3632 = vsel %vm1772, %v3600, %v3330
        %v3634 = vsel %vm1838, %v3602, %v3337
        %v3636 = vsel %vm1838, %v3604, %v3339
        %v3638 = vsel %vm1838, %v3606, %v3341
        %v3640 = vsel %vm1838, %v3608, %v3343
        %v3642 = vsel %vm1838, %v3610, %v3345
        %v3644 = vsel %vm1838, %v3612, %v3347
        %v3646 = vsel %vm1838, %v3614, %v3349
        %v3648 = vsel %vm1838, %v3616, %v3351
        %v3650 = vsel %vm1838, %v3618, %v3353
        %v3652 = vsel %vm1838, %v3620, %v3355
        %v3654 = vsel %vm1838, %v3622, %v3357
        %v3656 = vsel %vm1838, %v3624, %v3359
        %v3658 = vsel %vm1838, %v3626, %v3361
        %v3660 = vsel %vm1838, %v3628, %v3363
        %v3662 = vsel %vm1838, %v3630, %v3365
        %v3664 = vsel %vm1838, %v3632, %v3367
        %v3666 = vsel %vm1904, %v3634, %v3384
        %v3668 = vsel %vm1904, %v3636, %v3386
        %v3670 = vsel %vm1904, %v3638, %v3388
        %v3672 = vsel %vm1904, %v3640, %v3390
        %v3674 = vsel %vm1904, %v3642, %v3392
        %v3676 = vsel %vm1904, %v3644, %v3394
        %v3678 = vsel %vm1904, %v3646, %v3396
        %v3680 = vsel %vm1904, %v3648, %v3398
        %v3682 = vsel %vm1904, %v3650, %v3400
        %v3684 = vsel %vm1904, %v3652, %v3402
        %v3686 = vsel %vm1904, %v3654, %v3404
        %v3688 = vsel %vm1904, %v3656, %v3406
        %v3690 = vsel %vm1904, %v3658, %v3408
        %v3692 = vsel %vm1904, %v3660, %v3410
        %v3694 = vsel %vm1904, %v3662, %v3412
        %v3696 = vsel %vm1904, %v3664, %v3414
        %vm3697 = vcmask 326656
        %v3699 = vsel %vm3697, %v3666, %v3419
        %v3701 = vsel %vm3697, %v3668, %v3421
        %v3703 = vsel %vm3697, %v3670, %v3423
        %v3705 = vsel %vm3697, %v3672, %v3425
        %v3707 = vsel %vm3697, %v3674, %v3427
        %v3709 = vsel %vm3697, %v3676, %v3429
        %v3711 = vsel %vm3697, %v3678, %v3431
        %v3713 = vsel %vm3697, %v3680, %v3433
        %v3715 = vsel %vm3697, %v3682, %v3435
        %v3717 = vsel %vm3697, %v3684, %v3437
        %v3719 = vsel %vm3697, %v3686, %v3439
        %v3721 = vsel %vm3697, %v3688, %v3441
        %v3723 = vsel %vm3697, %v3690, %v3443
        %v3725 = vsel %vm3697, %v3692, %v3445
        %v3727 = vsel %vm3697, %v3694, %v3447
        %v3729 = vsel %vm3697, %v3696, %v3449
        %vm3730 = vcmask 392192
        %v3732 = vsel %vm3730, %v3699, %v3456
        %v3734 = vsel %vm3730, %v3701, %v3458
        %v3736 = vsel %vm3730, %v3703, %v3460
        %v3738 = vsel %vm3730, %v3705, %v3462
        %v3740 = vsel %vm3730, %v3707, %v3464
        %v3742 = vsel %vm3730, %v3709, %v3466
        %v3744 = vsel %vm3730, %v3711, %v3468
        %v3746 = vsel %vm3730, %v3713, %v3470
        %v3748 = vsel %vm3730, %v3715, %v3472
        %v3750 = vsel %vm3730, %v3717, %v3474
        %v3752 = vsel %vm3730, %v3719, %v3476
        %v3754 = vsel %vm3730, %v3721, %v3478
        %v3756 = vsel %vm3730, %v3723, %v3480
        %v3758 = vsel %vm3730, %v3725, %v3482
        %v3760 = vsel %vm3730, %v3727, %v3484
        %v3762 = vsel %vm3730, %v3729, %v3486
        %vm3763 = vcmask 457728
        %v3765 = vsel %vm3763, %v3732, %v3503
        %v3767 = vsel %vm3763, %v3734, %v3505
        %v3769 = vsel %vm3763, %v3736, %v3507
        %v3771 = vsel %vm3763, %v3738, %v3509
        %v3773 = vsel %vm3763, %v3740, %v3511
        %v3775 = vsel %vm3763, %v3742, %v3513
        %v3777 = vsel %vm3763, %v3744, %v3515
        %v3779 = vsel %vm3763, %v3746, %v3517
        %v3781 = vsel %vm3763, %v3748, %v3519
        %v3783 = vsel %vm3763, %v3750, %v3521
        %v3785 = vsel %vm3763, %v3752, %v3523
        %v3787 = vsel %vm3763, %v3754, %v3525
        %v3789 = vsel %vm3763, %v3756, %v3527
        %v3791 = vsel %vm3763, %v3758, %v3529
        %v3793 = vsel %vm3763, %v3760, %v3531
        %v3795 = vsel %vm3763, %v3762, %v3533
        %vm3796 = vcmask 523264
        %v3798 = vsel %vm3796, %v3765, %v3538
        %v3800 = vsel %vm3796, %v3767, %v3540
        %v3802 = vsel %vm3796, %v3769, %v3542
        %v3804 = vsel %vm3796, %v3771, %v3544
        %v3806 = vsel %vm3796, %v3773, %v3546
        %v3808 = vsel %vm3796, %v3775, %v3548
        %v3810 = vsel %vm3796, %v3777, %v3550
        %v3812 = vsel %vm3796, %v3779, %v3552
        %v3814 = vsel %vm3796, %v3781, %v3554
        %v3816 = vsel %vm3796, %v3783, %v3556
        %v3818 = vsel %vm3796, %v3785, %v3558
        %v3820 = vsel %vm3796, %v3787, %v3560
        %v3822 = vsel %vm3796, %v3789, %v3562
        %v3824 = vsel %vm3796, %v3791, %v3564
        %v3826 = vsel %vm3796, %v3793, %v3566
        %v3828 = vsel %vm3796, %v3795, %v3568
        %v3829 = vld [vmem:[%s3] sm:$0xf]
        %v3830 = vld [vmem:[%s3 + $0x4] sm:$0xf]
        %v3831 = vld [vmem:[%s3 + $0x8] sm:$0xf]
        %v3832 = vld [vmem:[%s3 + $0xc] sm:$0xf]
        %v3833 = vld [vmem:[%s3 + $0x10] sm:$0xf]
        %v3834 = vld [vmem:[%s3 + $0x14] sm:$0xf]
        %v3835 = vld [vmem:[%s3 + $0x18] sm:$0xf]
        %v3836 = vld [vmem:[%s3 + $0x1c] sm:$0xf]
        %v3837 = vld [vmem:[%s3 + $0x20] sm:$0xf]
        %v3838 = vld [vmem:[%s4] sm:$0x1]
        %v3840 = vlaneseq
        %v3841 = vshrl.u32 %v3840, 7
        %v3842 = vsub.s32 0, %v3841
        %v3843 = vrot.slane %v3838, %v3842
        %v3854 = vunpack.c.l.b16 %v3829
        %v3855 = vunpack.c.l.b16 %v3830
        %v3856 = vunpack.c.l.b16 %v3831
        %v3857 = vunpack.c.l.b16 %v3832
        %v3858 = vunpack.c.l.b16 %v3833
        %v3859 = vunpack.c.l.b16 %v3834
        %v3860 = vunpack.c.l.b16 %v3835
        %v3861 = vunpack.c.l.b16 %v3836
        %v3862 = vunpack.c.l.b16 %v3837
        %v3863 = vpack.c.b16 %v3855, %v3854
        %v3864 = vpack.c.b16 %v3857, %v3856
        %v3865 = vpack.c.b16 %v3859, %v3858
        %v3866 = vpack.c.b16 %v3861, %v3860
        %v3867 = vpack.c.b16 %v3862, %v3862
        %vm3872 = vcmask 588800
        %v3873 = vsel %vm3872, %v3798, 0
        %v3875 = vsel %vm3872, %v3800, 0
        %v3877 = vsel %vm3872, %v3802, 0
        %v3879 = vsel %vm3872, %v3804, 0
        %v3881 = vsel %vm3872, %v3806, 0
        %v3883 = vsel %vm3872, %v3808, 0
        %v3885 = vsel %vm3872, %v3810, 0
        %v3887 = vsel %vm3872, %v3812, 0
        %v3889 = vsel %vm3872, %v3814, 0
        %v3891 = vsel %vm3872, %v3816, 0
        %v3893 = vsel %vm3872, %v3818, 0
        %v3895 = vsel %vm3872, %v3820, 0
        %v3897 = vsel %vm3872, %v3822, 0
        %v3899 = vsel %vm3872, %v3824, 0
        %v3901 = vsel %vm3872, %v3826, 0
        %v3903 = vsel %vm3872, %v3828, 0
        %vm3905 = vcmask 1043456
        %v3907 = vsel %vm3905, %v3867, 0
        %3909 = vmatprep.subr.bf16.mxu0 0
        %3910 = vmatpush1.bf16.msra.mxu0 %v3863
        %3911 = vmatprep.subr.bf16.mxu0 0
        %3912 = vmatpush1.bf16.msra.mxu0 %v3864
        %3913 = vmatprep.subr.bf16.mxu0 0
        %3914 = vmatpush1.bf16.msra.mxu0 %v3865
        %3915 = vmatprep.subr.bf16.mxu0 0
        %3916 = vmatpush1.bf16.msra.mxu0 %v3866
        %3917 = vmatprep.subr.bf16.mxu0 0
        %3918 = vmatpush1.bf16.msra.mxu0 %v3907
        %3919 = vmatprep.subr.bf16.mxu0 0
        %3920 = vmatpush1.bf16.msra.mxu0 0
        %3921 = vmatprep.subr.bf16.mxu0 0
        %3922 = vmatpush1.bf16.msra.mxu0 0
        %3923 = vmatprep.subr.bf16.mxu0 0
        %3924 = vmatpush1.bf16.msra.mxu0 0
        %3925 = vmatprep.subr.bf16.mxu0 0
        %3926 = vmatpush1.bf16.msra.mxu0 0
        %3927 = vmatprep.subr.bf16.mxu0 0
        %3928 = vmatpush1.bf16.msra.mxu0 0
        %3929 = vmatprep.subr.bf16.mxu0 0
        %3930 = vmatpush1.bf16.msra.mxu0 0
        %3931 = vmatprep.subr.bf16.mxu0 0
        %3932 = vmatpush1.bf16.msra.mxu0 0
        %3933 = vmatprep.subr.bf16.mxu0 0
        %3934 = vmatpush1.bf16.msra.mxu0 0
        %3935 = vmatprep.subr.bf16.mxu0 0
        %3936 = vmatpush1.bf16.msra.mxu0 0
        %3937 = vmatprep.subr.bf16.mxu0 0
        %3938 = vmatpush1.bf16.msra.mxu0 0
        %3939 = vmatprep.subr.bf16.mxu0 0
        %3940 = vmatpush1.bf16.msra.mxu0 0
        %3941 = vmatprep.mubr.bf16.mxu0 0
        %3942 = vmatmul.mubr.bf16.gmra.mrb[0].mxu0 %v3873
        %v3943 = vpop.f32.mrb[0].mxu0
        %v3944 = vadd.f32 %v3843, %v3943
        %v3945 = vpop.f32.mrb[0].mxu0
        %v3946 = vpop.f32.mrb[0].mxu0
        %v3947 = vadd.f32 %v3843, %v3946
        %v3948 = vpop.f32.mrb[0].mxu0
        %3949 = vmatprep.mubr.bf16.mxu0 0
        %3950 = vmatmul.mubr.bf16.gmra.mrb[0].mxu0 %v3875
        %v3951 = vpop.f32.mrb[0].mxu0
        %v3952 = vadd.f32 %v3843, %v3951
        %v3953 = vpop.f32.mrb[0].mxu0
        %v3954 = vpop.f32.mrb[0].mxu0
        %v3955 = vadd.f32 %v3843, %v3954
        %v3956 = vpop.f32.mrb[0].mxu0
        %3957 = vmatprep.mubr.bf16.mxu0 0
        %3958 = vmatmul.mubr.bf16.gmra.mrb[0].mxu0 %v3877
        %v3959 = vpop.f32.mrb[0].mxu0
        %v3960 = vadd.f32 %v3843, %v3959
        %v3961 = vpop.f32.mrb[0].mxu0
        %v3962 = vpop.f32.mrb[0].mxu0
        %v3963 = vadd.f32 %v3843, %v3962
        %v3964 = vpop.f32.mrb[0].mxu0
        %3965 = vmatprep.mubr.bf16.mxu0 0
        %3966 = vmatmul.mubr.bf16.gmra.mrb[0].mxu0 %v3879
        %v3967 = vpop.f32.mrb[0].mxu0
        %v3968 = vadd.f32 %v3843, %v3967
        %v3969 = vpop.f32.mrb[0].mxu0
        %v3970 = vpop.f32.mrb[0].mxu0
        %v3971 = vadd.f32 %v3843, %v3970
        %v3972 = vpop.f32.mrb[0].mxu0
        %3973 = vmatprep.mubr.bf16.mxu0 0
        %3974 = vmatmul.mubr.bf16.gmra.mrb[0].mxu0 %v3881
        %v3975 = vpop.f32.mrb[0].mxu0
        %v3976 = vadd.f32 %v3843, %v3975
        %v3977 = vpop.f32.mrb[0].mxu0
        %v3978 = vpop.f32.mrb[0].mxu0
        %v3979 = vadd.f32 %v3843, %v3978
        %v3980 = vpop.f32.mrb[0].mxu0
        %3981 = vmatprep.mubr.bf16.mxu0 0
        %3982 = vmatmul.mubr.bf16.gmra.mrb[0].mxu0 %v3883
        %v3983 = vpop.f32.mrb[0].mxu0
        %v3984 = vadd.f32 %v3843, %v3983
        %v3985 = vpop.f32.mrb[0].mxu0
        %v3986 = vpop.f32.mrb[0].mxu0
        %v3987 = vadd.f32 %v3843, %v3986
        %v3988 = vpop.f32.mrb[0].mxu0
        %3989 = vmatprep.mubr.bf16.mxu0 0
        %3990 = vmatmul.mubr.bf16.gmra.mrb[0].mxu0 %v3885
        %v3991 = vpop.f32.mrb[0].mxu0
        %v3992 = vadd.f32 %v3843, %v3991
        %v3993 = vpop.f32.mrb[0].mxu0
        %v3994 = vpop.f32.mrb[0].mxu0
        %v3995 = vadd.f32 %v3843, %v3994
        %v3996 = vpop.f32.mrb[0].mxu0
        %3997 = vmatprep.mubr.bf16.mxu0 0
        %3998 = vmatmul.mubr.bf16.gmra.mrb[0].mxu0 %v3887
        %v3999 = vpop.f32.mrb[0].mxu0
        %v4000 = vadd.f32 %v3843, %v3999
        %v4001 = vpop.f32.mrb[0].mxu0
        %v4002 = vpop.f32.mrb[0].mxu0
        %v4003 = vadd.f32 %v3843, %v4002
        %v4004 = vpop.f32.mrb[0].mxu0
        %4005 = vmatprep.mubr.bf16.mxu0 0
        %4006 = vmatmul.mubr.bf16.gmra.mrb[0].mxu0 %v3889
        %v4007 = vpop.f32.mrb[0].mxu0
        %v4008 = vadd.f32 %v3843, %v4007
        %v4009 = vpop.f32.mrb[0].mxu0
        %v4010 = vpop.f32.mrb[0].mxu0
        %v4011 = vadd.f32 %v3843, %v4010
        %v4012 = vpop.f32.mrb[0].mxu0
        %4013 = vmatprep.mubr.bf16.mxu0 0
        %4014 = vmatmul.mubr.bf16.gmra.mrb[0].mxu0 %v3891
        %v4015 = vpop.f32.mrb[0].mxu0
        %v4016 = vadd.f32 %v3843, %v4015
        %v4017 = vpop.f32.mrb[0].mxu0
        %v4018 = vpop.f32.mrb[0].mxu0
        %v4019 = vadd.f32 %v3843, %v4018
        %v4020 = vpop.f32.mrb[0].mxu0
        %4021 = vmatprep.mubr.bf16.mxu0 0
        %4022 = vmatmul.mubr.bf16.gmra.mrb[0].mxu0 %v3893
        %v4023 = vpop.f32.mrb[0].mxu0
        %v4024 = vadd.f32 %v3843, %v4023
        %v4025 = vpop.f32.mrb[0].mxu0
        %v4026 = vpop.f32.mrb[0].mxu0
        %v4027 = vadd.f32 %v3843, %v4026
        %v4028 = vpop.f32.mrb[0].mxu0
        %4029 = vmatprep.mubr.bf16.mxu0 0
        %4030 = vmatmul.mubr.bf16.gmra.mrb[0].mxu0 %v3895
        %v4031 = vpop.f32.mrb[0].mxu0
        %v4032 = vadd.f32 %v3843, %v4031
        %v4033 = vpop.f32.mrb[0].mxu0
        %v4034 = vpop.f32.mrb[0].mxu0
        %v4035 = vadd.f32 %v3843, %v4034
        %v4036 = vpop.f32.mrb[0].mxu0
        %4037 = vmatprep.mubr.bf16.mxu0 0
        %4038 = vmatmul.mubr.bf16.gmra.mrb[0].mxu0 %v3897
        %v4039 = vpop.f32.mrb[0].mxu0
        %v4040 = vadd.f32 %v3843, %v4039
        %v4041 = vpop.f32.mrb[0].mxu0
        %v4042 = vpop.f32.mrb[0].mxu0
        %v4043 = vadd.f32 %v3843, %v4042
        %v4044 = vpop.f32.mrb[0].mxu0
        %4045 = vmatprep.mubr.bf16.mxu0 0
        %4046 = vmatmul.mubr.bf16.gmra.mrb[0].mxu0 %v3899
        %v4047 = vpop.f32.mrb[0].mxu0
        %v4048 = vadd.f32 %v3843, %v4047
        %v4049 = vpop.f32.mrb[0].mxu0
        %v4050 = vpop.f32.mrb[0].mxu0
        %v4051 = vadd.f32 %v3843, %v4050
        %v4052 = vpop.f32.mrb[0].mxu0
        %4053 = vmatprep.mubr.bf16.mxu0 0
        %4054 = vmatmul.mubr.bf16.gmra.mrb[0].mxu0 %v3901
        %v4055 = vpop.f32.mrb[0].mxu0
        %v4056 = vadd.f32 %v3843, %v4055
        %v4057 = vpop.f32.mrb[0].mxu0
        %v4058 = vpop.f32.mrb[0].mxu0
        %v4059 = vadd.f32 %v3843, %v4058
        %v4060 = vpop.f32.mrb[0].mxu0
        %4061 = vmatprep.mubr.bf16.mxu0 0
        %4062 = vmatmul.mubr.bf16.gmra.mrb[0].mxu0 %v3903
        %v4063 = vpop.f32.mrb[0].mxu0
        %v4064 = vadd.f32 %v3843, %v4063
        %v4065 = vpop.f32.mrb[0].mxu0
        %v4066 = vpop.f32.mrb[0].mxu0
        %v4067 = vadd.f32 %v3843, %v4066
        %v4068 = vpop.f32.mrb[0].mxu0
        %4069 = vdwg.mxu0
        %4070 = vxpose.xlu0.b32.start [1/16] %v3944, 128
        %4071 = vxpose.xlu0.b32.cont [2/16] %v3947, 128
        %4072 = vxpose.xlu0.b32.cont [3/16] %v3952, 128
        %4073 = vxpose.xlu0.b32.cont [4/16] %v3955, 128
        %4074 = vxpose.xlu0.b32.cont [5/16] %v3960, 128
        %4075 = vxpose.xlu0.b32.cont [6/16] %v3963, 128
        %4076 = vxpose.xlu0.b32.cont [7/16] %v3968, 128
        %4077 = vxpose.xlu0.b32.cont [8/16] %v3971, 128
        %4078 = vxpose.xlu0.b32.cont [9/16] %v3976, 128
        %4079 = vxpose.xlu0.b32.cont [10/16] %v3979, 128
        %4080 = vxpose.xlu0.b32.cont [11/16] %v3984, 128
        %4081 = vxpose.xlu0.b32.cont [12/16] %v3987, 128
        %4082 = vxpose.xlu0.b32.cont [13/16] %v3992, 128
        %4083 = vxpose.xlu0.b32.cont [14/16] %v3995, 128
        %4084 = vxpose.xlu0.b32.cont [15/16] %v4000, 128
        %4085 = vxpose.xlu0.b32.end [16/16] %v4003, 128
        %v4086 = vpop.trf.xlu0
        %v4087 = vpop.trf.xlu0
        %v4088 = vpop.trf.xlu0
        %v4089 = vpop.trf.xlu0
        %v4090 = vpop.trf.xlu0
        %v4091 = vpop.trf.xlu0
        %v4092 = vpop.trf.xlu0
        %v4093 = vpop.trf.xlu0
        %v4094 = vpop.trf.xlu0
        %v4095 = vpop.trf.xlu0
        %v4096 = vpop.trf.xlu0
        %v4097 = vpop.trf.xlu0
        %v4098 = vpop.trf.xlu0
        %v4099 = vpop.trf.xlu0
        %v4100 = vpop.trf.xlu0
        %v4101 = vpop.trf.xlu0
        %4102 = vxpose.xlu0.b32.start [1/16] %v4008, 128
        %4103 = vxpose.xlu0.b32.cont [2/16] %v4011, 128
        %4104 = vxpose.xlu0.b32.cont [3/16] %v4016, 128
        %4105 = vxpose.xlu0.b32.cont [4/16] %v4019, 128
        %4106 = vxpose.xlu0.b32.cont [5/16] %v4024, 128
        %4107 = vxpose.xlu0.b32.cont [6/16] %v4027, 128
        %4108 = vxpose.xlu0.b32.cont [7/16] %v4032, 128
        %4109 = vxpose.xlu0.b32.cont [8/16] %v4035, 128
        %4110 = vxpose.xlu0.b32.cont [9/16] %v4040, 128
        %4111 = vxpose.xlu0.b32.cont [10/16] %v4043, 128
        %4112 = vxpose.xlu0.b32.cont [11/16] %v4048, 128
        %4113 = vxpose.xlu0.b32.cont [12/16] %v4051, 128
        %4114 = vxpose.xlu0.b32.cont [13/16] %v4056, 128
        %4115 = vxpose.xlu0.b32.cont [14/16] %v4059, 128
        %4116 = vxpose.xlu0.b32.cont [15/16] %v4064, 128
        %4117 = vxpose.xlu0.b32.end [16/16] %v4067, 128
        %v4118 = vpop.trf.xlu0
        %v4119 = vpop.trf.xlu0
        %v4120 = vpop.trf.xlu0
        %v4121 = vpop.trf.xlu0
        %v4122 = vpop.trf.xlu0
        %v4123 = vpop.trf.xlu0
        %v4124 = vpop.trf.xlu0
        %v4125 = vpop.trf.xlu0
        %v4126 = vpop.trf.xlu0
        %v4127 = vpop.trf.xlu0
        %v4128 = vpop.trf.xlu0
        %v4129 = vpop.trf.xlu0
        %v4130 = vpop.trf.xlu0
        %v4131 = vpop.trf.xlu0
        %v4132 = vpop.trf.xlu0
        %v4133 = vpop.trf.xlu0
        %v4134 = vld [vmem:[%s222] sm:$0xff]
        %v4137 = vcombine.low %v4086, %v4118
        %v4139 = vadd.f32 %v4134, %v4137
        %4140 = vst [vmem:[%s217] sm:$0xff] %v4139
        %s4141 = sand.u32 %s137, 1
        %s4142 = scalar_lea.sflag [#allocation5], %s4141
        %s4143 = sand.u32 %s137, 1
        %s4144 = smul.addr %s4143, 8
        %s4145 = scalar_lea.vmem [#allocation4], %s4144
        // Predicated region
        $region41: #{tpu_custom_call.1} parent=39 // pred_check
          %p4146 = pneg %p147
        $region42: #{tpu_custom_call.1} parent=39 // pred_check_branch
          %4148 = sbr.rel (%p4146) target = $region44
        $region43: #{tpu_custom_call.1} parent=39 // pred_region
          %s4150 = ssub.s32 128, 128
          %4151 = vsyncadd %s4142, %s4150
          %s4152 = smul.addr %s19, 2
          %s4153 = smul.addr %s4152, 64
          %s4154 = scalar_lea.hbm %s5, %s4153
          %s4156 = sshll.u32 %s4145, 4
          %s4157 = int_to_ptr.vmem [resolvable:$true] %s4156
          %4159 = dma.vmem_to_hbm [thread:$0]  %s4157, 128, %s4154, %s4142
        $region44: #{tpu_custom_call.1} parent=39 // pred_fallthru
          _
      $region40: #{tpu_custom_call.1} parent=5 // pred_fallthru
        _
      %p4160 = scmp.le.s32.totalorder 2, %s14
      // Predicated region
      $region45: #{tpu_custom_call.1} parent=5 // pred_check
        %p4161 = pneg %p4160
      $region46: #{tpu_custom_call.1} parent=5 // pred_check_branch
        %4163 = sbr.rel (%p4161) target = $region48
      $region47: #{tpu_custom_call.1} parent=5 // pred_region
        %s4164 = ssub.s32 %s14, 2
        // Predicated region
        $region49: #{tpu_custom_call.1} parent=47 // pred_check
          %p4165 = pneg %p153
        $region50: #{tpu_custom_call.1} parent=47 // pred_check_branch
          %4167 = sbr.rel (%p4165) target = $region52
        $region51: #{tpu_custom_call.1} parent=47 // pred_region
          %s4168 = sand.u32 %s138, 1
          %s4169 = scalar_lea.sflag [#allocation5], %s4168
          %s4170 = sand.u32 %s138, 1
          %s4171 = smul.addr %s4170, 8
          %s4172 = scalar_lea.vmem [#allocation4], %s4171
          %4173 = dma.done %s4169, 128
        $region52: #{tpu_custom_call.1} parent=47 // pred_fallthru
          _
      $region48: #{tpu_custom_call.1} parent=5 // pred_fallthru
        _
    $region6: #{tpu_custom_call.1} parent=1 // loop_footer
      %s18 = sadd.s32 1, %s14
    $region7: #{tpu_custom_call.1} parent=1 // loop_footer_branch
      %13 = sbr.rel target = $region3
    $region8: #{tpu_custom_call.1} parent=1 // loop_exit
      _
    %4174 = vsyncpa [#allocation5], 1
    %s4175 = scalar_lea.sflag [#allocation5], 1
    %4176 = vsyncpa %s4175, 1

</llo_original>
